<compile_context>
chip_gen: v5e
topology: v5e:2x2
jax: 0.10.0
libtpu: 0.0.40
codegen_flags: <defaults>
</compile_context>

<pallas_src>
import functools
import numpy as np

import jax
import jax.numpy as jnp
from jax import lax
from jax.experimental import pallas as pl
from jax.experimental.pallas import tpu as pltpu


# ----------------------------- Pallas kernel ------------------------------ #

def _silu(y):
    # SiLU via tanh (EUP slot); avoids the multi-op f32 VPU divide.
    return y * (0.5 * jnp.tanh(0.5 * y) + 0.5)


def _tic_kernel(x_ref, c0_ref, c1_ref,
                w1_ref, s1_ref, b1_ref,
                w2_ref, s2_ref, b2_ref,
                wout_ref, out_ref, *, L, T, HALO):
    t = pl.program_id(0)
    x = x_ref[0]                      # (3*out_C, W) window, W = T + 2*HALO
    c3, W = x.shape
    c0 = c0_ref[0]                    # (1, W)  upsample coeff 1 - frac
    c1 = c1_ref[0]                    # (1, W)  upsample coeff frac

    w1 = w1_ref[...]
    w2 = w2_ref[...]
    w1c = (w1[:, 0:1], w1[:, 1:2], w1[:, 2:3])
    w2c = (w2[:, 0:1], w2[:, 1:2], w2[:, 2:3])
    s1 = s1_ref[...]; b1 = b1_ref[...]
    s2 = s2_ref[...]; b2 = b2_ref[...]

    # Hoisted lane indices / boundary masks (built once, reused by all stages).
    lane = lax.broadcasted_iota(jnp.int32, (c3, W), 1)
    glane = lane + (t * T - HALO)          # global lane index in [-HALO, L+HALO)
    odd = (lane & 1) == 1                  # window offset is even -> local parity == global
    m_l1 = glane == 0                      # conv pad boundary, full resolution
    m_r1 = glane == L - 1
    m_l2 = glane <= 1                      # conv pad boundary, half resolution (expanded)
    m_r2 = glane >= L - 2

    def dwconv_bn_silu(v, wc, s, b, m_left, m_right, shift):
        """Depthwise conv1d (k=3) + folded conv-bias/BN affine + SiLU."""
        v_m = jnp.where(m_left, 0.0, pltpu.roll(v, shift, axis=1))       # v[i-shift]
        v_p = jnp.where(m_right, 0.0, pltpu.roll(v, W - shift, axis=1))  # v[i+shift]
        y = wc[0] * v_m + wc[1] * v + wc[2] * v_p
        return _silu(y * s + b)

    # conv1 + BN + SiLU (full resolution)
    y1 = dwconv_bn_silu(x, w1c, s1, b1, m_l1, m_r1, 1)

    # AvgPool1d(2,2), kept in an expanded lane layout: e1[i] = pooled[i // 2]
    pp = 0.5 * (y1 + pltpu.roll(y1, W - 1, axis=1))       # pp[i] = (y1[i]+y1[i+1])/2
    e1 = jnp.where(odd, pltpu.roll(pp, 1, axis=1), pp)

    # conv2 + BN + SiLU at half resolution (taps are +-2 lanes in expanded layout)
    e2 = dwconv_bn_silu(e1, w2c, s2, b2, m_l2, m_r2, 2)

    # Upsample x2 (linear, align_corners=True): out[i] = c0[i]*q[i0] + c1[i]*q[i1]
    # with q[i0] = e2[i-1] (except global lane 0 -> e2[i]) and q[i1] = e2[i+1].
    g0 = jnp.where(glane == 0, e2, pltpu.roll(e2, 1, axis=1))
    g1 = pltpu.roll(e2, W - 1, axis=1)
    u = c0 * g0 + c1 * g1

    # conv2 + BN + SiLU (full resolution)
    y3 = dwconv_bn_silu(u, w2c, s2, b2, m_l1, m_r1, 1)

    # Combine branches: (w_all*w_mid*w_edge pre-folded) * all * mid * edge.
    # Store only the lane-dense (out_C, T) centre of the halo'd window.
    c_out = out_ref.shape[0]
    y3c = y3[:, HALO:HALO + T]
    out_ref[...] = wout_ref[...] * (y3c[0:c_out]
                                    * y3c[c_out:2 * c_out]
                                    * y3c[2 * c_out:3 * c_out])


# ------------------------------- glue (JAX) -------------------------------- #

def _fold_bn(conv_bias, gamma, beta, rm, rv, eps=1e-5):
    scale = gamma / jnp.sqrt(rv + eps)
    bias = (conv_bias - rm) * scale + beta
    return scale[:, None], bias[:, None]   # (out_C, 1)


def _upsample_coeffs(L):
    """Per-output-lane (1-frac, frac) for x2 linear upsample, align_corners=True."""
    lin = L // 2
    i = np.arange(L, dtype=np.float64)
    src = i * (lin - 1) / (L - 1)
    frac = (src - np.floor(src)).astype(np.float32)
    return (1.0 - frac).astype(np.float32), frac


def init_params(key, in_c, out_C):
    ks = jax.random.split(key, 12)

    def conv(kw, kb):
        return (0.5 * jax.random.normal(kw, (out_C, 3), jnp.float32),
                0.1 * jax.random.normal(kb, (out_C,), jnp.float32))

    def bn(k):
        k1, k2, k3, k4 = jax.random.split(k, 4)
        gamma = jax.random.uniform(k1, (out_C,), jnp.float32, 0.5, 1.5)
        beta = 0.1 * jax.random.normal(k2, (out_C,), jnp.float32)
        rm = 0.1 * jax.random.normal(k3, (out_C,), jnp.float32)
        rv = jax.random.uniform(k4, (out_C,), jnp.float32, 0.5, 1.5)
        return (gamma, beta, rm, rv)

    wa1, cba1 = conv(ks[0], ks[1]); bn_a1 = bn(ks[2])
    wa2, cba2 = conv(ks[3], ks[4]); bn_a2 = bn(ks[5])
    wp1, cbp1 = conv(ks[6], ks[7]); bn_p1 = bn(ks[8])
    wp2, cbp2 = conv(ks[9], ks[10]); bn_p2 = bn(ks[11])

    return dict(
        wa1=wa1, cba1=cba1, bn_a1=bn_a1,
        wa2=wa2, cba2=cba2, bn_a2=bn_a2,
        wp1=wp1, cbp1=cbp1, bn_p1=bn_p1,
        wp2=wp2, cbp2=cbp2, bn_p2=bn_p2,
        # nn.Parameter(torch.ones(1, out_C, 1))
        w_all=jnp.ones((out_C,), jnp.float32),
        w_mid=jnp.ones((out_C,), jnp.float32),
        w_edge=jnp.ones((out_C,), jnp.float32),
    )


def tic_pallas(x, p, *, tile_l=512, halo=64):
    B, C, H, W = x.shape
    L = H * W
    BC = B * C
    out_C = p['wa1'].shape[0]

    # Grouped-conv channel mapping / pooling assumptions (review concern #2).
    assert B >= 8, "TIC requires batch >= 8"
    assert out_C % BC == 0 and out_C % (BC // 2) == 0, "out_C must divide evenly"
    assert L % 2 == 0, "H*W must be even for AvgPool1d(2,2)"

    T = tile_l if (L >= tile_l and L % tile_l == 0) else L
    assert L % T == 0 and T % 128 == 0, "lane tile must be 128-aligned and divide L"
    n_t = L // T
    w_win = T + 2 * halo

    mid_start = B // 2 - 2
    x_all = x.reshape(BC, L)
    x_mid = x[mid_start:mid_start + 4].reshape(BC // 2, L)
    x_edge = jnp.concatenate([x[:2], x[-2:]], axis=0).reshape(BC // 2, L)

    # Grouped conv -> depthwise via channel repetition
    # (output channel o reads input channel o // (out_C // groups)).
    x_all = jnp.repeat(x_all, out_C // BC, axis=0)
    x_mid = jnp.repeat(x_mid, out_C // (BC // 2), axis=0)
    x_edge = jnp.repeat(x_edge, out_C // (BC // 2), axis=0)
    x_fused = jnp.concatenate([x_all, x_mid, x_edge], axis=0)     # (3*out_C, L)
    c3 = 3 * out_C

    # Overlapping lane-windows with a zero halo; the whole pipeline's receptive
    # field is ~6 lanes, halo=64 keeps every block 128-lane aligned.
    x_pad = jnp.pad(x_fused, ((0, 0), (halo, halo)))
    x_win = jnp.stack([x_pad[:, t * T:t * T + w_win] for t in range(n_t)], axis=0)

    c0_full, c1_full = _upsample_coeffs(L)
    c0_pad = np.pad(c0_full, (halo, halo))
    c1_pad = np.pad(c1_full, (halo, halo))
    c0_win = jnp.asarray(np.stack([c0_pad[None, t * T:t * T + w_win]
                                   for t in range(n_t)], axis=0))
    c1_win = jnp.asarray(np.stack([c1_pad[None, t * T:t * T + w_win]
                                   for t in range(n_t)], axis=0))

    sa1, ba1 = _fold_bn(p['cba1'], *p['bn_a1'])
    sa2, ba2 = _fold_bn(p['cba2'], *p['bn_a2'])
    sp1, bp1 = _fold_bn(p['cbp1'], *p['bn_p1'])
    sp2, bp2 = _fold_bn(p['cbp2'], *p['bn_p2'])

    w1 = jnp.concatenate([p['wa1'], p['wp1'], p['wp1']], axis=0)   # (3*out_C, 3)
    s1 = jnp.concatenate([sa1, sp1, sp1], axis=0)                  # (3*out_C, 1)
    b1 = jnp.concatenate([ba1, bp1, bp1], axis=0)
    w2 = jnp.concatenate([p['wa2'], p['wp2'], p['wp2']], axis=0)
    s2 = jnp.concatenate([sa2, sp2, sp2], axis=0)
    b2 = jnp.concatenate([ba2, bp2, bp2], axis=0)

    # weight_all * weight_mid * weight_edge pre-multiplied once.
    w_comb = (p['w_all'] * p['w_mid'] * p['w_edge'])[:, None]      # (out_C, 1)

    kern = functools.partial(_tic_kernel, L=L, T=T, HALO=halo)

    out = pl.pallas_call(
        kern,
        out_shape=jax.ShapeDtypeStruct((out_C, L), jnp.float32),
        grid=(n_t,),
        in_specs=[
            pl.BlockSpec((1, c3, w_win), lambda t: (t, 0, 0)),    # x windows
            pl.BlockSpec((1, 1, w_win), lambda t: (t, 0, 0)),     # c0 windows
            pl.BlockSpec((1, 1, w_win), lambda t: (t, 0, 0)),     # c1 windows
            pl.BlockSpec((c3, 3), lambda t: (0, 0)),              # w1 (resident)
            pl.BlockSpec((c3, 1), lambda t: (0, 0)),              # s1
            pl.BlockSpec((c3, 1), lambda t: (0, 0)),              # b1
            pl.BlockSpec((c3, 3), lambda t: (0, 0)),              # w2
            pl.BlockSpec((c3, 1), lambda t: (0, 0)),              # s2
            pl.BlockSpec((c3, 1), lambda t: (0, 0)),              # b2
            pl.BlockSpec((out_C, 1), lambda t: (0, 0)),           # folded output weights
        ],
        out_specs=pl.BlockSpec((out_C, T), lambda t: (0, t)),
        compiler_params=pltpu.CompilerParams(
            dimension_semantics=("parallel",)),
    )(x_win, c0_win, c1_win, w1, s1, b1, w2, s2, b2, w_comb)

    # PyTorch forward returns `out` of shape (1, out_C, H*W)
    # (the trailing out.reshape(B, C, H, W) is not assigned -> no-op).
    return out[None]


# --------------------------- pure-JAX reference ---------------------------- #

def ref_tic(x, p):
    B, C, H, W = x.shape
    L = H * W
    BC = B * C
    eps = 1e-5

    def tconv(inp, w, cb, bn, groups):
        gamma, beta, rm, rv = bn
        y = lax.conv_general_dilated(
            inp, w[:, None, :], window_strides=(1,), padding=((1, 1),),
            feature_group_count=groups,
            dimension_numbers=('NCH', 'OIH', 'NCH'))
        y = y + cb[None, :, None]
        y = (y - rm[None, :, None]) / jnp.sqrt(rv[None, :, None] + eps)
        y = y * gamma[None, :, None] + beta[None, :, None]
        return y * jax.nn.sigmoid(y)

    def pool(y):
        N, Cc, Ll = y.shape
        return y.reshape(N, Cc, Ll // 2, 2).mean(axis=-1)

    def up(z):
        N, Cc, Lin = z.shape
        Lout = 2 * Lin
        src = jnp.arange(Lout, dtype=jnp.float32) * (Lin - 1) / (Lout - 1)
        i0 = jnp.floor(src).astype(jnp.int32)
        i1 = jnp.minimum(i0 + 1, Lin - 1)
        frac = src - i0.astype(jnp.float32)
        return z[:, :, i0] * (1.0 - frac) + z[:, :, i1] * frac

    mid_start = B // 2 - 2
    allx = x.reshape(1, BC, L)
    mid4 = x[mid_start:mid_start + 4].reshape(1, BC // 2, L)
    edge4 = jnp.concatenate([x[:2], x[-2:]], axis=0).reshape(1, BC // 2, L)

    a = tconv(allx, p['wa1'], p['cba1'], p['bn_a1'], BC)
    a = pool(a)
    a = tconv(a, p['wa2'], p['cba2'], p['bn_a2'], p['wa1'].shape[0])
    a = up(a)
    all8 = tconv(a, p['wa2'], p['cba2'], p['bn_a2'], p['wa1'].shape[0])

    def part(y0):
        y = tconv(y0, p['wp1'], p['cbp1'], p['bn_p1'], BC // 2)
        y = pool(y)
        y = tconv(y, p['wp2'], p['cbp2'], p['bn_p2'], p['wp2'].shape[0])
        y = up(y)
        return tconv(y, p['wp2'], p['cbp2'], p['bn_p2'], p['wp2'].shape[0])

    m = part(mid4)
    e = part(edge4)

    w_all = p['w_all'][None, :, None]
    w_mid = p['w_mid'][None, :, None]
    w_edge = p['w_edge'][None, :, None]
    return w_all * all8 * w_mid * m * w_edge * e


# ---------------------------------- main ----------------------------------- #

if __name__ == "__main__":
    key = jax.random.PRNGKey(0)
    k_x, k_p = jax.random.split(key)

    # Shapes consistent with TIC's forward: B*C must equal in_c*8 (B >= 8).
    # H*W = 1024 -> two lane-dense 512-wide tiles (exercises the pipelined grid).
    B, C, H, W = 8, 4, 32, 32
    in_c = (B * C) // 8          # 4
    out_C = 32                   # divisible by in_c*8 and in_c*4 (grouped convs)

    x = jax.random.normal(k_x, (B, C, H, W), jnp.float32)
    params = init_params(k_p, in_c, out_C)

    out = jax.block_until_ready(tic_pallas(x, params))
    ref = jax.block_until_ready(ref_tic(x, params))

    assert out.shape == (1, out_C, H * W), out.shape
    np.testing.assert_allclose(np.asarray(out), np.asarray(ref),
                               rtol=1e-3, atol=1e-3)
    print("KERNEL_OK")
</pallas_src>

<mosaic_0001>
module attributes {stable_mosaic.version = 11 : i64} {
  func.func @_tic_kernel(%arg0: i32, %arg1: memref<1x96x640xf32, #tpu.memory_space<vmem>>, %arg2: memref<1x1x640xf32, #tpu.memory_space<vmem>>, %arg3: memref<1x1x640xf32, #tpu.memory_space<vmem>>, %arg4: memref<96x3xf32, #tpu.memory_space<vmem>>, %arg5: memref<96x1xf32, #tpu.memory_space<vmem>>, %arg6: memref<96x1xf32, #tpu.memory_space<vmem>>, %arg7: memref<96x3xf32, #tpu.memory_space<vmem>>, %arg8: memref<96x1xf32, #tpu.memory_space<vmem>>, %arg9: memref<96x1xf32, #tpu.memory_space<vmem>>, %arg10: memref<32x1xf32, #tpu.memory_space<vmem>>, %arg11: memref<32x512xf32, #tpu.memory_space<vmem>>) attributes {dimension_semantics = [#tpu.dimension_semantics<parallel>], iteration_bounds = array<i64: 2>, scalar_prefetch = 0 : i64, scratch_operands = 0 : i64, tpu.core_type = #tpu.core_type<tc>, window_params = [{transform_indices = @transform_0, window_bounds = array<i64: 1, 96, 640>}, {transform_indices = @transform_1, window_bounds = array<i64: 1, 1, 640>}, {transform_indices = @transform_2, window_bounds = array<i64: 1, 1, 640>}, {pipeline_mode = #tpu.pipeline_mode<synchronous>, transform_indices = @transform_3, window_bounds = array<i64: 96, 3>}, {pipeline_mode = #tpu.pipeline_mode<synchronous>, transform_indices = @transform_4, window_bounds = array<i64: 96, 1>}, {pipeline_mode = #tpu.pipeline_mode<synchronous>, transform_indices = @transform_5, window_bounds = array<i64: 96, 1>}, {pipeline_mode = #tpu.pipeline_mode<synchronous>, transform_indices = @transform_6, window_bounds = array<i64: 96, 3>}, {pipeline_mode = #tpu.pipeline_mode<synchronous>, transform_indices = @transform_7, window_bounds = array<i64: 96, 1>}, {pipeline_mode = #tpu.pipeline_mode<synchronous>, transform_indices = @transform_8, window_bounds = array<i64: 96, 1>}, {pipeline_mode = #tpu.pipeline_mode<synchronous>, transform_indices = @transform_9, window_bounds = array<i64: 32, 1>}, {transform_indices = @transform_10, window_bounds = array<i64: 32, 512>}]} {
    %c0 = arith.constant 0 : index
    %c0_0 = arith.constant 0 : index
    %c0_1 = arith.constant 0 : index
    %0 = vector.load %arg1[%c0, %c0_0, %c0_1] : memref<1x96x640xf32, #tpu.memory_space<vmem>>, vector<1x96x640xf32>
    %1 = vector.shape_cast %0 : vector<1x96x640xf32> to vector<96x640xf32>
    %c0_2 = arith.constant 0 : index
    %c0_3 = arith.constant 0 : index
    %c0_4 = arith.constant 0 : index
    %2 = vector.load %arg2[%c0_2, %c0_3, %c0_4] : memref<1x1x640xf32, #tpu.memory_space<vmem>>, vector<1x1x640xf32>
    %3 = vector.shape_cast %2 : vector<1x1x640xf32> to vector<1x640xf32>
    %c0_5 = arith.constant 0 : index
    %c0_6 = arith.constant 0 : index
    %c0_7 = arith.constant 0 : index
    %4 = vector.load %arg3[%c0_5, %c0_6, %c0_7] : memref<1x1x640xf32, #tpu.memory_space<vmem>>, vector<1x1x640xf32>
    %5 = vector.shape_cast %4 : vector<1x1x640xf32> to vector<1x640xf32>
    %c0_8 = arith.constant 0 : index
    %c0_9 = arith.constant 0 : index
    %6 = vector.load %arg4[%c0_8, %c0_9] : memref<96x3xf32, #tpu.memory_space<vmem>>, vector<96x3xf32>
    %c0_10 = arith.constant 0 : index
    %c0_11 = arith.constant 0 : index
    %7 = vector.load %arg7[%c0_10, %c0_11] : memref<96x3xf32, #tpu.memory_space<vmem>>, vector<96x3xf32>
    %8 = vector.extract_strided_slice %6 {offsets = [0, 0], sizes = [96, 1], strides = [1, 1]} : vector<96x3xf32> to vector<96x1xf32>
    %9 = vector.extract_strided_slice %6 {offsets = [0, 1], sizes = [96, 1], strides = [1, 1]} : vector<96x3xf32> to vector<96x1xf32>
    %10 = vector.extract_strided_slice %6 {offsets = [0, 2], sizes = [96, 1], strides = [1, 1]} : vector<96x3xf32> to vector<96x1xf32>
    %11 = vector.extract_strided_slice %7 {offsets = [0, 0], sizes = [96, 1], strides = [1, 1]} : vector<96x3xf32> to vector<96x1xf32>
    %12 = vector.extract_strided_slice %7 {offsets = [0, 1], sizes = [96, 1], strides = [1, 1]} : vector<96x3xf32> to vector<96x1xf32>
    %13 = vector.extract_strided_slice %7 {offsets = [0, 2], sizes = [96, 1], strides = [1, 1]} : vector<96x3xf32> to vector<96x1xf32>
    %c0_12 = arith.constant 0 : index
    %c0_13 = arith.constant 0 : index
    %14 = vector.load %arg5[%c0_12, %c0_13] : memref<96x1xf32, #tpu.memory_space<vmem>>, vector<96x1xf32>
    %c0_14 = arith.constant 0 : index
    %c0_15 = arith.constant 0 : index
    %15 = vector.load %arg6[%c0_14, %c0_15] : memref<96x1xf32, #tpu.memory_space<vmem>>, vector<96x1xf32>
    %c0_16 = arith.constant 0 : index
    %c0_17 = arith.constant 0 : index
    %16 = vector.load %arg8[%c0_16, %c0_17] : memref<96x1xf32, #tpu.memory_space<vmem>>, vector<96x1xf32>
    %c0_18 = arith.constant 0 : index
    %c0_19 = arith.constant 0 : index
    %17 = vector.load %arg9[%c0_18, %c0_19] : memref<96x1xf32, #tpu.memory_space<vmem>>, vector<96x1xf32>
    %18 = tpu.iota {dimensions = array<i32: 1>} : vector<96x640xi32>
    %c512_i32 = arith.constant 512 : i32
    %19 = arith.muli %arg0, %c512_i32 : i32
    %c64_i32 = arith.constant 64 : i32
    %20 = arith.subi %19, %c64_i32 : i32
    %21 = vector.broadcast %20 : i32 to vector<96x640xi32>
    %22 = arith.addi %18, %21 : vector<96x640xi32>
    %c1_i32 = arith.constant 1 : i32
    %23 = vector.broadcast %c1_i32 : i32 to vector<96x640xi32>
    %24 = arith.andi %18, %23 : vector<96x640xi32>
    %c1_i32_20 = arith.constant 1 : i32
    %25 = vector.broadcast %c1_i32_20 : i32 to vector<96x640xi32>
    %26 = arith.cmpi eq, %24, %25 : vector<96x640xi32>
    %c0_i32 = arith.constant 0 : i32
    %27 = vector.broadcast %c0_i32 : i32 to vector<96x640xi32>
    %28 = arith.cmpi eq, %22, %27 : vector<96x640xi32>
    %c1023_i32 = arith.constant 1023 : i32
    %29 = vector.broadcast %c1023_i32 : i32 to vector<96x640xi32>
    %30 = arith.cmpi eq, %22, %29 : vector<96x640xi32>
    %c1_i32_21 = arith.constant 1 : i32
    %31 = vector.broadcast %c1_i32_21 : i32 to vector<96x640xi32>
    %32 = arith.cmpi sle, %22, %31 : vector<96x640xi32>
    %c1022_i32 = arith.constant 1022 : i32
    %33 = vector.broadcast %c1022_i32 : i32 to vector<96x640xi32>
    %34 = arith.cmpi sge, %22, %33 : vector<96x640xi32>
    %c1_i32_22 = arith.constant 1 : i32
    %35 = tpu.dynamic_rotate %1 by %c1_i32_22 dim 1 : vector<96x640xf32>, i32 -> vector<96x640xf32>
    %cst = arith.constant 0.000000e+00 : f32
    %36 = vector.broadcast %cst : f32 to vector<96x640xf32>
    %37 = arith.select %28, %36, %35 : vector<96x640xi1>, vector<96x640xf32>
    %c639_i32 = arith.constant 639 : i32
    %38 = tpu.dynamic_rotate %1 by %c639_i32 dim 1 : vector<96x640xf32>, i32 -> vector<96x640xf32>
    %cst_23 = arith.constant 0.000000e+00 : f32
    %39 = vector.broadcast %cst_23 : f32 to vector<96x640xf32>
    %40 = arith.select %30, %39, %38 : vector<96x640xi1>, vector<96x640xf32>
    %41 = vector.broadcast %8 : vector<96x1xf32> to vector<96x640xf32>
    %42 = arith.mulf %41, %37 : vector<96x640xf32>
    %43 = vector.broadcast %9 : vector<96x1xf32> to vector<96x640xf32>
    %44 = arith.mulf %43, %1 : vector<96x640xf32>
    %45 = arith.addf %42, %44 : vector<96x640xf32>
    %46 = vector.broadcast %10 : vector<96x1xf32> to vector<96x640xf32>
    %47 = arith.mulf %46, %40 : vector<96x640xf32>
    %48 = arith.addf %45, %47 : vector<96x640xf32>
    %49 = vector.broadcast %14 : vector<96x1xf32> to vector<96x640xf32>
    %50 = arith.mulf %48, %49 : vector<96x640xf32>
    %51 = vector.broadcast %15 : vector<96x1xf32> to vector<96x640xf32>
    %52 = arith.addf %50, %51 : vector<96x640xf32>
    %cst_24 = arith.constant 5.000000e-01 : f32
    %53 = vector.broadcast %cst_24 : f32 to vector<96x640xf32>
    %54 = arith.mulf %53, %52 : vector<96x640xf32>
    %55 = math.tanh %54 : vector<96x640xf32>
    %cst_25 = arith.constant 5.000000e-01 : f32
    %56 = vector.broadcast %cst_25 : f32 to vector<96x640xf32>
    %57 = arith.mulf %56, %55 : vector<96x640xf32>
    %cst_26 = arith.constant 5.000000e-01 : f32
    %58 = vector.broadcast %cst_26 : f32 to vector<96x640xf32>
    %59 = arith.addf %57, %58 : vector<96x640xf32>
    %60 = arith.mulf %52, %59 : vector<96x640xf32>
    %c639_i32_27 = arith.constant 639 : i32
    %61 = tpu.dynamic_rotate %60 by %c639_i32_27 dim 1 : vector<96x640xf32>, i32 -> vector<96x640xf32>
    %62 = arith.addf %60, %61 : vector<96x640xf32>
    %cst_28 = arith.constant 5.000000e-01 : f32
    %63 = vector.broadcast %cst_28 : f32 to vector<96x640xf32>
    %64 = arith.mulf %63, %62 : vector<96x640xf32>
    %c1_i32_29 = arith.constant 1 : i32
    %65 = tpu.dynamic_rotate %64 by %c1_i32_29 dim 1 : vector<96x640xf32>, i32 -> vector<96x640xf32>
    %66 = arith.select %26, %65, %64 : vector<96x640xi1>, vector<96x640xf32>
    %c2_i32 = arith.constant 2 : i32
    %67 = tpu.dynamic_rotate %66 by %c2_i32 dim 1 : vector<96x640xf32>, i32 -> vector<96x640xf32>
    %cst_30 = arith.constant 0.000000e+00 : f32
    %68 = vector.broadcast %cst_30 : f32 to vector<96x640xf32>
    %69 = arith.select %32, %68, %67 : vector<96x640xi1>, vector<96x640xf32>
    %c638_i32 = arith.constant 638 : i32
    %70 = tpu.dynamic_rotate %66 by %c638_i32 dim 1 : vector<96x640xf32>, i32 -> vector<96x640xf32>
    %cst_31 = arith.constant 0.000000e+00 : f32
    %71 = vector.broadcast %cst_31 : f32 to vector<96x640xf32>
    %72 = arith.select %34, %71, %70 : vector<96x640xi1>, vector<96x640xf32>
    %73 = vector.broadcast %11 : vector<96x1xf32> to vector<96x640xf32>
    %74 = arith.mulf %73, %69 : vector<96x640xf32>
    %75 = vector.broadcast %12 : vector<96x1xf32> to vector<96x640xf32>
    %76 = arith.mulf %75, %66 : vector<96x640xf32>
    %77 = arith.addf %74, %76 : vector<96x640xf32>
    %78 = vector.broadcast %13 : vector<96x1xf32> to vector<96x640xf32>
    %79 = arith.mulf %78, %72 : vector<96x640xf32>
    %80 = arith.addf %77, %79 : vector<96x640xf32>
    %81 = vector.broadcast %16 : vector<96x1xf32> to vector<96x640xf32>
    %82 = arith.mulf %80, %81 : vector<96x640xf32>
    %83 = vector.broadcast %17 : vector<96x1xf32> to vector<96x640xf32>
    %84 = arith.addf %82, %83 : vector<96x640xf32>
    %cst_32 = arith.constant 5.000000e-01 : f32
    %85 = vector.broadcast %cst_32 : f32 to vector<96x640xf32>
    %86 = arith.mulf %85, %84 : vector<96x640xf32>
    %87 = math.tanh %86 : vector<96x640xf32>
    %cst_33 = arith.constant 5.000000e-01 : f32
    %88 = vector.broadcast %cst_33 : f32 to vector<96x640xf32>
    %89 = arith.mulf %88, %87 : vector<96x640xf32>
    %cst_34 = arith.constant 5.000000e-01 : f32
    %90 = vector.broadcast %cst_34 : f32 to vector<96x640xf32>
    %91 = arith.addf %89, %90 : vector<96x640xf32>
    %92 = arith.mulf %84, %91 : vector<96x640xf32>
    %c0_i32_35 = arith.constant 0 : i32
    %93 = vector.broadcast %c0_i32_35 : i32 to vector<96x640xi32>
    %94 = arith.cmpi eq, %22, %93 : vector<96x640xi32>
    %c1_i32_36 = arith.constant 1 : i32
    %95 = tpu.dynamic_rotate %92 by %c1_i32_36 dim 1 : vector<96x640xf32>, i32 -> vector<96x640xf32>
    %96 = arith.select %94, %92, %95 : vector<96x640xi1>, vector<96x640xf32>
    %c639_i32_37 = arith.constant 639 : i32
    %97 = tpu.dynamic_rotate %92 by %c639_i32_37 dim 1 : vector<96x640xf32>, i32 -> vector<96x640xf32>
    %98 = vector.broadcast %3 : vector<1x640xf32> to vector<96x640xf32>
    %99 = arith.mulf %98, %96 : vector<96x640xf32>
    %100 = vector.broadcast %5 : vector<1x640xf32> to vector<96x640xf32>
    %101 = arith.mulf %100, %97 : vector<96x640xf32>
    %102 = arith.addf %99, %101 : vector<96x640xf32>
    %c1_i32_38 = arith.constant 1 : i32
    %103 = tpu.dynamic_rotate %102 by %c1_i32_38 dim 1 : vector<96x640xf32>, i32 -> vector<96x640xf32>
    %cst_39 = arith.constant 0.000000e+00 : f32
    %104 = vector.broadcast %cst_39 : f32 to vector<96x640xf32>
    %105 = arith.select %28, %104, %103 : vector<96x640xi1>, vector<96x640xf32>
    %c639_i32_40 = arith.constant 639 : i32
    %106 = tpu.dynamic_rotate %102 by %c639_i32_40 dim 1 : vector<96x640xf32>, i32 -> vector<96x640xf32>
    %cst_41 = arith.constant 0.000000e+00 : f32
    %107 = vector.broadcast %cst_41 : f32 to vector<96x640xf32>
    %108 = arith.select %30, %107, %106 : vector<96x640xi1>, vector<96x640xf32>
    %109 = vector.broadcast %11 : vector<96x1xf32> to vector<96x640xf32>
    %110 = arith.mulf %109, %105 : vector<96x640xf32>
    %111 = vector.broadcast %12 : vector<96x1xf32> to vector<96x640xf32>
    %112 = arith.mulf %111, %102 : vector<96x640xf32>
    %113 = arith.addf %110, %112 : vector<96x640xf32>
    %114 = vector.broadcast %13 : vector<96x1xf32> to vector<96x640xf32>
    %115 = arith.mulf %114, %108 : vector<96x640xf32>
    %116 = arith.addf %113, %115 : vector<96x640xf32>
    %117 = vector.broadcast %16 : vector<96x1xf32> to vector<96x640xf32>
    %118 = arith.mulf %116, %117 : vector<96x640xf32>
    %119 = vector.broadcast %17 : vector<96x1xf32> to vector<96x640xf32>
    %120 = arith.addf %118, %119 : vector<96x640xf32>
    %cst_42 = arith.constant 5.000000e-01 : f32
    %121 = vector.broadcast %cst_42 : f32 to vector<96x640xf32>
    %122 = arith.mulf %121, %120 : vector<96x640xf32>
    %123 = math.tanh %122 : vector<96x640xf32>
    %cst_43 = arith.constant 5.000000e-01 : f32
    %124 = vector.broadcast %cst_43 : f32 to vector<96x640xf32>
    %125 = arith.mulf %124, %123 : vector<96x640xf32>
    %cst_44 = arith.constant 5.000000e-01 : f32
    %126 = vector.broadcast %cst_44 : f32 to vector<96x640xf32>
    %127 = arith.addf %125, %126 : vector<96x640xf32>
    %128 = arith.mulf %120, %127 : vector<96x640xf32>
    %129 = vector.extract_strided_slice %128 {offsets = [0, 64], sizes = [96, 512], strides = [1, 1]} : vector<96x640xf32> to vector<96x512xf32>
    %c0_45 = arith.constant 0 : index
    %c0_46 = arith.constant 0 : index
    %130 = vector.load %arg10[%c0_45, %c0_46] : memref<32x1xf32, #tpu.memory_space<vmem>>, vector<32x1xf32>
    %131 = vector.extract_strided_slice %129 {offsets = [0, 0], sizes = [32, 512], strides = [1, 1]} : vector<96x512xf32> to vector<32x512xf32>
    %132 = vector.extract_strided_slice %129 {offsets = [32, 0], sizes = [32, 512], strides = [1, 1]} : vector<96x512xf32> to vector<32x512xf32>
    %133 = arith.mulf %131, %132 : vector<32x512xf32>
    %134 = vector.extract_strided_slice %129 {offsets = [64, 0], sizes = [32, 512], strides = [1, 1]} : vector<96x512xf32> to vector<32x512xf32>
    %135 = arith.mulf %133, %134 : vector<32x512xf32>
    %136 = vector.broadcast %130 : vector<32x1xf32> to vector<32x512xf32>
    %137 = arith.mulf %136, %135 : vector<32x512xf32>
    %c0_47 = arith.constant 0 : index
    %c0_48 = arith.constant 0 : index
    %138 = vector.load %arg11[%c0_47, %c0_48] : memref<32x512xf32, #tpu.memory_space<vmem>>, vector<32x512xf32>
    tpu.vector_store %arg11[%c0_47, %c0_48], %137 {strides = array<i32>} : memref<32x512xf32, #tpu.memory_space<vmem>>, vector<32x512xf32>,
    return
  }
  func.func @transform_0(%arg0: i32) -> (i32, i32, i32) {
    %c0_i32 = arith.constant 0 : i32
    %c0_i32_0 = arith.constant 0 : i32
    %c0_i32_1 = arith.constant 0 : i32
    return %arg0, %c0_i32, %c0_i32_0 : i32, i32, i32
  }
  func.func @transform_1(%arg0: i32) -> (i32, i32, i32) {
    %c0_i32 = arith.constant 0 : i32
    %c0_i32_0 = arith.constant 0 : i32
    %c0_i32_1 = arith.constant 0 : i32
    return %arg0, %c0_i32, %c0_i32_0 : i32, i32, i32
  }
  func.func @transform_2(%arg0: i32) -> (i32, i32, i32) {
    %c0_i32 = arith.constant 0 : i32
    %c0_i32_0 = arith.constant 0 : i32
    %c0_i32_1 = arith.constant 0 : i32
    return %arg0, %c0_i32, %c0_i32_0 : i32, i32, i32
  }
  func.func @transform_3(%arg0: i32) -> (i32, i32) {
    %c0_i32 = arith.constant 0 : i32
    %c0_i32_0 = arith.constant 0 : i32
    %c0_i32_1 = arith.constant 0 : i32
    return %c0_i32, %c0_i32_0 : i32, i32
  }
  func.func @transform_4(%arg0: i32) -> (i32, i32) {
    %c0_i32 = arith.constant 0 : i32
    %c0_i32_0 = arith.constant 0 : i32
    %c0_i32_1 = arith.constant 0 : i32
    return %c0_i32, %c0_i32_0 : i32, i32
  }
  func.func @transform_5(%arg0: i32) -> (i32, i32) {
    %c0_i32 = arith.constant 0 : i32
    %c0_i32_0 = arith.constant 0 : i32
    %c0_i32_1 = arith.constant 0 : i32
    return %c0_i32, %c0_i32_0 : i32, i32
  }
  func.func @transform_6(%arg0: i32) -> (i32, i32) {
    %c0_i32 = arith.constant 0 : i32
    %c0_i32_0 = arith.constant 0 : i32
    %c0_i32_1 = arith.constant 0 : i32
    return %c0_i32, %c0_i32_0 : i32, i32
  }
  func.func @transform_7(%arg0: i32) -> (i32, i32) {
    %c0_i32 = arith.constant 0 : i32
    %c0_i32_0 = arith.constant 0 : i32
    %c0_i32_1 = arith.constant 0 : i32
    return %c0_i32, %c0_i32_0 : i32, i32
  }
  func.func @transform_8(%arg0: i32) -> (i32, i32) {
    %c0_i32 = arith.constant 0 : i32
    %c0_i32_0 = arith.constant 0 : i32
    %c0_i32_1 = arith.constant 0 : i32
    return %c0_i32, %c0_i32_0 : i32, i32
  }
  func.func @transform_9(%arg0: i32) -> (i32, i32) {
    %c0_i32 = arith.constant 0 : i32
    %c0_i32_0 = arith.constant 0 : i32
    %c0_i32_1 = arith.constant 0 : i32
    return %c0_i32, %c0_i32_0 : i32, i32
  }
  func.func @transform_10(%arg0: i32) -> (i32, i32) {
    %c0_i32 = arith.constant 0 : i32
    %c0_i32_0 = arith.constant 0 : i32
    return %c0_i32, %arg0 : i32, i32
  }
}

</mosaic_0001>

<llo_original>
// kernel: tpu_custom_call.1
$region0: #{tpu_custom_call.1}
  #allocation0 [shape = 'u32[]', space=smem, size = 0x4, offset = 0x4, fixed_abs, tag = 'smem constant byte address 0x4 - core index']
  #allocation1 [shape = 'u32[72,128]{1,0:T(1,128)}', space=vmem, size = 0x9000, scoped, tag = 'internal scratch']
  %s0 = inlined_call_operand.hbm [shape: f32[2,96,640], index: 0, kind: input, shape index: {}]
  %s1 = inlined_call_operand.vmem [shape: f32[2,1,640], index: 1, kind: input, shape index: {}]
  %s2 = inlined_call_operand.vmem [shape: f32[2,1,640], index: 2, kind: input, shape index: {}]
  %s3 = inlined_call_operand.vmem [shape: f32[96,3], index: 3, kind: input, shape index: {}]
  %s4 = inlined_call_operand.vmem [shape: f32[96,1], index: 4, kind: input, shape index: {}]
  %s5 = inlined_call_operand.vmem [shape: f32[96,1], index: 5, kind: input, shape index: {}]
  %s6 = inlined_call_operand.vmem [shape: f32[96,3], index: 6, kind: input, shape index: {}]
  %s7 = inlined_call_operand.vmem [shape: f32[96,1], index: 7, kind: input, shape index: {}]
  %s8 = inlined_call_operand.vmem [shape: f32[96,1], index: 8, kind: input, shape index: {}]
  %s9 = inlined_call_operand.vmem [shape: f32[32,1], index: 9, kind: input, shape index: {}]
  %s10 = inlined_call_operand.hbm [shape: f32[32,1024], index: 10, kind: output, shape index: {}]
  %s11 = sld [smem:[#allocation0]]
  $region77: #{tpu_custom_call.1} parent=0
    _
  %s13 = ssub.s32 1, %s11
  %s14 = scalar_select 0, %s13, %s11
  $region1: #{tpu_custom_call.1} parent=0
    #allocation2 [shape = 'u8[491520]{0}', space=vmem, size = 0x78000, scoped, tag = 'input window, operand 0']
    #allocation3 [shape = 's32[2]{0}', space=sflag, size = 0x8, scoped, tag = 'scoped memory for tpu_custom_call.1']
    #allocation4 [shape = 's32[2]{0}', space=sflag, size = 0x8, scoped, tag = 'scoped memory for tpu_custom_call.1']
    #allocation5 [shape = 'u8[131072]{0}', space=vmem, size = 0x20000, scoped, tag = 'output window, operand 0']
    %15 = vsyncpa [#allocation3], 0
    %s16 = scalar_lea.sflag [#allocation3], 1
    %17 = vsyncpa %s16, 0
    %18 = vsyncpa [#allocation4], 0
    %s19 = scalar_lea.sflag [#allocation4], 1
    %20 = vsyncpa %s19, 0
    loop: start=0, step=1, limit=4
    $region2: #{tpu_custom_call.1} parent=1 // loop_pre_header
      _
    $region3: #{tpu_custom_call.1} parent=1 // loop_header
      %s22 = sphi 0, %s26
      %p23 = scmp.ge.s32.totalorder %s22, 4
      %s32 = sphi 0, %s34
      %s35 = sphi 0, %s32
      %s36 = sphi 0, %s35
      %s52 = sphi 0, %s36
      %s58 = sphi 0, %s60
      %s61 = sphi 0, %s58
      %s62 = sphi 0, %s61
      %s78 = sphi 0, %s62
      %s84 = sphi 0, %s86
      %s87 = sphi 0, %s84
      %s88 = sphi 0, %s87
      %s104 = sphi 0, %s88
      %s108 = sphi 0, %s108
      %s110 = sphi 0, %s108
      %s111 = sphi 0, %s110
      %s125 = sphi 0, %s111
      %s129 = sphi 0, %s129
      %s131 = sphi 0, %s129
      %s132 = sphi 0, %s131
      %s146 = sphi 0, %s132
      %s150 = sphi 0, %s150
      %s152 = sphi 0, %s150
      %s153 = sphi 0, %s152
      %s167 = sphi 0, %s153
      %s171 = sphi 0, %s171
      %s173 = sphi 0, %s171
      %s174 = sphi 0, %s173
      %s188 = sphi 0, %s174
      %s192 = sphi 0, %s192
      %s194 = sphi 0, %s192
      %s195 = sphi 0, %s194
      %s209 = sphi 0, %s195
      %s213 = sphi 0, %s213
      %s215 = sphi 0, %s213
      %s216 = sphi 0, %s215
      %s230 = sphi 0, %s216
      %s234 = sphi 0, %s234
      %s236 = sphi 0, %s234
      %s237 = sphi 0, %s236
      %s251 = sphi 0, %s237
      %s257 = sphi 0, %s259
      %s260 = sphi 0, %s257
      %s261 = sphi 0, %s260
      %s277 = sphi 0, %s261
    $region4: #{tpu_custom_call.1} parent=1 // loop_header_branch
      %25 = sbr.rel (%p23) target = $region8
    $region5: #{tpu_custom_call.1} parent=1 // loop_body
      %s27 = ssub.s32 %s22, 1
      %s28 = ssub.s32 %s22, 2
      %s29 = sadd.s32 %s22, 1
      %s30 = ssub.s32 %s22, %s29
      %p31 = scmp.eq.s32.totalorder %s30, 0
      %s33 = sadd.s32 %s32, 1
      %s34 = scalar_select %p31, %s32, %s33
      %p37 = pneg %p31
      %p38 = scmp.eq.s32.totalorder %s22, 1
      %p39 = por %p37, %p38
      %p40 = scmp.ne.s32.totalorder %s32, %s35
      %p41 = scmp.eq.s32.totalorder %s22, 0
      %p42 = por %p40, %p41
      %p43 = scmp.ne.s32.totalorder %s32, %s35
      %p44 = scmp.eq.s32.totalorder %s27, 1
      %p45 = por %p43, %p44
      %p46 = scmp.ne.s32.totalorder %s35, %s36
      %p47 = scmp.eq.s32.totalorder %s27, 0
      %p48 = por %p46, %p47
      %p49 = scmp.ne.s32.totalorder %s35, %s36
      %p50 = scmp.eq.s32.totalorder %s28, 1
      %p51 = por %p49, %p50
      %p53 = scmp.ne.s32.totalorder %s36, %s52
      %p54 = scmp.eq.s32.totalorder %s28, 0
      %p55 = por %p53, %p54
      %s56 = ssub.s32 %s22, %s29
      %p57 = scmp.eq.s32.totalorder %s56, 0
      %s59 = sadd.s32 %s58, 1
      %s60 = scalar_select %p57, %s58, %s59
      %p63 = pneg %p57
      %p64 = scmp.eq.s32.totalorder %s22, 1
      %p65 = por %p63, %p64
      %p66 = scmp.ne.s32.totalorder %s58, %s61
      %p67 = scmp.eq.s32.totalorder %s22, 0
      %p68 = por %p66, %p67
      %p69 = scmp.ne.s32.totalorder %s58, %s61
      %p70 = scmp.eq.s32.totalorder %s27, 1
      %p71 = por %p69, %p70
      %p72 = scmp.ne.s32.totalorder %s61, %s62
      %p73 = scmp.eq.s32.totalorder %s27, 0
      %p74 = por %p72, %p73
      %p75 = scmp.ne.s32.totalorder %s61, %s62
      %p76 = scmp.eq.s32.totalorder %s28, 1
      %p77 = por %p75, %p76
      %p79 = scmp.ne.s32.totalorder %s62, %s78
      %p80 = scmp.eq.s32.totalorder %s28, 0
      %p81 = por %p79, %p80
      %s82 = ssub.s32 %s22, %s29
      %p83 = scmp.eq.s32.totalorder %s82, 0
      %s85 = sadd.s32 %s84, 1
      %s86 = scalar_select %p83, %s84, %s85
      %p89 = pneg %p83
      %p90 = scmp.eq.s32.totalorder %s22, 1
      %p91 = por %p89, %p90
      %p92 = scmp.ne.s32.totalorder %s84, %s87
      %p93 = scmp.eq.s32.totalorder %s22, 0
      %p94 = por %p92, %p93
      %p95 = scmp.ne.s32.totalorder %s84, %s87
      %p96 = scmp.eq.s32.totalorder %s27, 1
      %p97 = por %p95, %p96
      %p98 = scmp.ne.s32.totalorder %s87, %s88
      %p99 = scmp.eq.s32.totalorder %s27, 0
      %p100 = por %p98, %p99
      %p101 = scmp.ne.s32.totalorder %s87, %s88
      %p102 = scmp.eq.s32.totalorder %s28, 1
      %p103 = por %p101, %p102
      %p105 = scmp.ne.s32.totalorder %s88, %s104
      %p106 = scmp.eq.s32.totalorder %s28, 0
      %p107 = por %p105, %p106
      %s109 = sadd.s32 %s108, 1
      %p112 = scmp.eq.s32.totalorder %s22, 1
      %p113 = scmp.ne.s32.totalorder %s108, %s110
      %p114 = scmp.eq.s32.totalorder %s22, 0
      %p115 = por %p113, %p114
      %p116 = scmp.ne.s32.totalorder %s108, %s110
      %p117 = scmp.eq.s32.totalorder %s27, 1
      %p118 = por %p116, %p117
      %p119 = scmp.ne.s32.totalorder %s110, %s111
      %p120 = scmp.eq.s32.totalorder %s27, 0
      %p121 = por %p119, %p120
      %p122 = scmp.ne.s32.totalorder %s110, %s111
      %p123 = scmp.eq.s32.totalorder %s28, 1
      %p124 = por %p122, %p123
      %p126 = scmp.ne.s32.totalorder %s111, %s125
      %p127 = scmp.eq.s32.totalorder %s28, 0
      %p128 = por %p126, %p127
      %s130 = sadd.s32 %s129, 1
      %p133 = scmp.eq.s32.totalorder %s22, 1
      %p134 = scmp.ne.s32.totalorder %s129, %s131
      %p135 = scmp.eq.s32.totalorder %s22, 0
      %p136 = por %p134, %p135
      %p137 = scmp.ne.s32.totalorder %s129, %s131
      %p138 = scmp.eq.s32.totalorder %s27, 1
      %p139 = por %p137, %p138
      %p140 = scmp.ne.s32.totalorder %s131, %s132
      %p141 = scmp.eq.s32.totalorder %s27, 0
      %p142 = por %p140, %p141
      %p143 = scmp.ne.s32.totalorder %s131, %s132
      %p144 = scmp.eq.s32.totalorder %s28, 1
      %p145 = por %p143, %p144
      %p147 = scmp.ne.s32.totalorder %s132, %s146
      %p148 = scmp.eq.s32.totalorder %s28, 0
      %p149 = por %p147, %p148
      %s151 = sadd.s32 %s150, 1
      %p154 = scmp.eq.s32.totalorder %s22, 1
      %p155 = scmp.ne.s32.totalorder %s150, %s152
      %p156 = scmp.eq.s32.totalorder %s22, 0
      %p157 = por %p155, %p156
      %p158 = scmp.ne.s32.totalorder %s150, %s152
      %p159 = scmp.eq.s32.totalorder %s27, 1
      %p160 = por %p158, %p159
      %p161 = scmp.ne.s32.totalorder %s152, %s153
      %p162 = scmp.eq.s32.totalorder %s27, 0
      %p163 = por %p161, %p162
      %p164 = scmp.ne.s32.totalorder %s152, %s153
      %p165 = scmp.eq.s32.totalorder %s28, 1
      %p166 = por %p164, %p165
      %p168 = scmp.ne.s32.totalorder %s153, %s167
      %p169 = scmp.eq.s32.totalorder %s28, 0
      %p170 = por %p168, %p169
      %s172 = sadd.s32 %s171, 1
      %p175 = scmp.eq.s32.totalorder %s22, 1
      %p176 = scmp.ne.s32.totalorder %s171, %s173
      %p177 = scmp.eq.s32.totalorder %s22, 0
      %p178 = por %p176, %p177
      %p179 = scmp.ne.s32.totalorder %s171, %s173
      %p180 = scmp.eq.s32.totalorder %s27, 1
      %p181 = por %p179, %p180
      %p182 = scmp.ne.s32.totalorder %s173, %s174
      %p183 = scmp.eq.s32.totalorder %s27, 0
      %p184 = por %p182, %p183
      %p185 = scmp.ne.s32.totalorder %s173, %s174
      %p186 = scmp.eq.s32.totalorder %s28, 1
      %p187 = por %p185, %p186
      %p189 = scmp.ne.s32.totalorder %s174, %s188
      %p190 = scmp.eq.s32.totalorder %s28, 0
      %p191 = por %p189, %p190
      %s193 = sadd.s32 %s192, 1
      %p196 = scmp.eq.s32.totalorder %s22, 1
      %p197 = scmp.ne.s32.totalorder %s192, %s194
      %p198 = scmp.eq.s32.totalorder %s22, 0
      %p199 = por %p197, %p198
      %p200 = scmp.ne.s32.totalorder %s192, %s194
      %p201 = scmp.eq.s32.totalorder %s27, 1
      %p202 = por %p200, %p201
      %p203 = scmp.ne.s32.totalorder %s194, %s195
      %p204 = scmp.eq.s32.totalorder %s27, 0
      %p205 = por %p203, %p204
      %p206 = scmp.ne.s32.totalorder %s194, %s195
      %p207 = scmp.eq.s32.totalorder %s28, 1
      %p208 = por %p206, %p207
      %p210 = scmp.ne.s32.totalorder %s195, %s209
      %p211 = scmp.eq.s32.totalorder %s28, 0
      %p212 = por %p210, %p211
      %s214 = sadd.s32 %s213, 1
      %p217 = scmp.eq.s32.totalorder %s22, 1
      %p218 = scmp.ne.s32.totalorder %s213, %s215
      %p219 = scmp.eq.s32.totalorder %s22, 0
      %p220 = por %p218, %p219
      %p221 = scmp.ne.s32.totalorder %s213, %s215
      %p222 = scmp.eq.s32.totalorder %s27, 1
      %p223 = por %p221, %p222
      %p224 = scmp.ne.s32.totalorder %s215, %s216
      %p225 = scmp.eq.s32.totalorder %s27, 0
      %p226 = por %p224, %p225
      %p227 = scmp.ne.s32.totalorder %s215, %s216
      %p228 = scmp.eq.s32.totalorder %s28, 1
      %p229 = por %p227, %p228
      %p231 = scmp.ne.s32.totalorder %s216, %s230
      %p232 = scmp.eq.s32.totalorder %s28, 0
      %p233 = por %p231, %p232
      %s235 = sadd.s32 %s234, 1
      %p238 = scmp.eq.s32.totalorder %s22, 1
      %p239 = scmp.ne.s32.totalorder %s234, %s236
      %p240 = scmp.eq.s32.totalorder %s22, 0
      %p241 = por %p239, %p240
      %p242 = scmp.ne.s32.totalorder %s234, %s236
      %p243 = scmp.eq.s32.totalorder %s27, 1
      %p244 = por %p242, %p243
      %p245 = scmp.ne.s32.totalorder %s236, %s237
      %p246 = scmp.eq.s32.totalorder %s27, 0
      %p247 = por %p245, %p246
      %p248 = scmp.ne.s32.totalorder %s236, %s237
      %p249 = scmp.eq.s32.totalorder %s28, 1
      %p250 = por %p248, %p249
      %p252 = scmp.ne.s32.totalorder %s237, %s251
      %p253 = scmp.eq.s32.totalorder %s28, 0
      %p254 = por %p252, %p253
      %s255 = ssub.s32 %s22, %s29
      %p256 = scmp.eq.s32.totalorder %s255, 0
      %s258 = sadd.s32 %s257, 1
      %s259 = scalar_select %p256, %s257, %s258
      %p262 = pneg %p256
      %p263 = scmp.eq.s32.totalorder %s22, 1
      %p264 = por %p262, %p263
      %p265 = scmp.ne.s32.totalorder %s257, %s260
      %p266 = scmp.eq.s32.totalorder %s22, 0
      %p267 = por %p265, %p266
      %p268 = scmp.ne.s32.totalorder %s257, %s260
      %p269 = scmp.eq.s32.totalorder %s27, 1
      %p270 = por %p268, %p269
      %p271 = scmp.ne.s32.totalorder %s260, %s261
      %p272 = scmp.eq.s32.totalorder %s27, 0
      %p273 = por %p271, %p272
      %p274 = scmp.ne.s32.totalorder %s260, %s261
      %p275 = scmp.eq.s32.totalorder %s28, 1
      %p276 = por %p274, %p275
      %p278 = scmp.ne.s32.totalorder %s261, %s277
      %p279 = scmp.eq.s32.totalorder %s28, 0
      %p280 = por %p278, %p279
      %p281 = scmp.le.s32.totalorder 1, %s22
      %p282 = scmp.lt.s32.totalorder %s22, 3
      %p283 = pnand %p281, %p282
      %p284 = pneg %p283
      // Predicated region
      $region9: #{tpu_custom_call.1} parent=5 // pred_check
        _
      $region10: #{tpu_custom_call.1} parent=5 // pred_check_branch
        %286 = sbr.rel (%p283) target = $region12
      $region11: #{tpu_custom_call.1} parent=5 // pred_region
        %s287 = ssub.s32 %s22, 1
        // Predicated region
        $region13: #{tpu_custom_call.1} parent=11 // pred_check
          %p288 = pneg %p121
        $region14: #{tpu_custom_call.1} parent=11 // pred_check_branch
          %290 = sbr.rel (%p288) target = $region16
        $region15: #{tpu_custom_call.1} parent=11 // pred_region
          _
        $region16: #{tpu_custom_call.1} parent=11 // pred_fallthru
          _
        // Predicated region
        $region17: #{tpu_custom_call.1} parent=11 // pred_check
          %p291 = pneg %p142
        $region18: #{tpu_custom_call.1} parent=11 // pred_check_branch
          %293 = sbr.rel (%p291) target = $region20
        $region19: #{tpu_custom_call.1} parent=11 // pred_region
          _
        $region20: #{tpu_custom_call.1} parent=11 // pred_fallthru
          _
        // Predicated region
        $region21: #{tpu_custom_call.1} parent=11 // pred_check
          %p294 = pneg %p163
        $region22: #{tpu_custom_call.1} parent=11 // pred_check_branch
          %296 = sbr.rel (%p294) target = $region24
        $region23: #{tpu_custom_call.1} parent=11 // pred_region
          _
        $region24: #{tpu_custom_call.1} parent=11 // pred_fallthru
          _
        // Predicated region
        $region25: #{tpu_custom_call.1} parent=11 // pred_check
          %p297 = pneg %p184
        $region26: #{tpu_custom_call.1} parent=11 // pred_check_branch
          %299 = sbr.rel (%p297) target = $region28
        $region27: #{tpu_custom_call.1} parent=11 // pred_region
          _
        $region28: #{tpu_custom_call.1} parent=11 // pred_fallthru
          _
        // Predicated region
        $region29: #{tpu_custom_call.1} parent=11 // pred_check
          %p300 = pneg %p205
        $region30: #{tpu_custom_call.1} parent=11 // pred_check_branch
          %302 = sbr.rel (%p300) target = $region32
        $region31: #{tpu_custom_call.1} parent=11 // pred_region
          _
        $region32: #{tpu_custom_call.1} parent=11 // pred_fallthru
          _
        // Predicated region
        $region33: #{tpu_custom_call.1} parent=11 // pred_check
          %p303 = pneg %p226
        $region34: #{tpu_custom_call.1} parent=11 // pred_check_branch
          %305 = sbr.rel (%p303) target = $region36
        $region35: #{tpu_custom_call.1} parent=11 // pred_region
          _
        $region36: #{tpu_custom_call.1} parent=11 // pred_fallthru
          _
        // Predicated region
        $region37: #{tpu_custom_call.1} parent=11 // pred_check
          %p306 = pneg %p247
        $region38: #{tpu_custom_call.1} parent=11 // pred_check_branch
          %308 = sbr.rel (%p306) target = $region40
        $region39: #{tpu_custom_call.1} parent=11 // pred_region
          _
        $region40: #{tpu_custom_call.1} parent=11 // pred_fallthru
          _
      $region12: #{tpu_custom_call.1} parent=5 // pred_fallthru
        _
      %p309 = scmp.lt.s32.totalorder %s22, 2
      // Predicated region
      $region41: #{tpu_custom_call.1} parent=5 // pred_check
        %p310 = pneg %p309
      $region42: #{tpu_custom_call.1} parent=5 // pred_check_branch
        %312 = sbr.rel (%p310) target = $region44
      $region43: #{tpu_custom_call.1} parent=5 // pred_region
        // Predicated region
        $region45: #{tpu_custom_call.1} parent=43 // pred_check
          %p313 = pneg %p42
        $region46: #{tpu_custom_call.1} parent=43 // pred_check_branch
          %315 = sbr.rel (%p313) target = $region48
        $region47: #{tpu_custom_call.1} parent=43 // pred_region
          %s316 = sand.u32 %s32, 1
          %s317 = scalar_lea.sflag [#allocation3], %s316
          %s318 = sand.u32 %s32, 1
          %s319 = smul.addr %s318, 480
          %s320 = scalar_lea.vmem [#allocation2], %s319
          %322 = vsyncadd %s317, 0
          %s323 = smul.addr %s22, 60
          %s324 = smul.addr %s323, 8
          %s325 = scalar_lea.hbm %s0, %s324
          %s326 = sshll.u32 %s325, 4
          %s327 = int_to_ptr.hbm [resolvable:$true] %s326
          %s328 = sshll.u32 %s320, 4
          %s329 = int_to_ptr.vmem [resolvable:$true] %s328
          %334 = dma.hbm_to_vmem [thread:$0]  %s327, 7680, %s329, %s317, 640, 640, 40
        $region48: #{tpu_custom_call.1} parent=43 // pred_fallthru
          _
        // Predicated region
        $region49: #{tpu_custom_call.1} parent=43 // pred_check
          %p335 = pneg %p68
        $region50: #{tpu_custom_call.1} parent=43 // pred_check_branch
          %337 = sbr.rel (%p335) target = $region52
        $region51: #{tpu_custom_call.1} parent=43 // pred_region
          %p338 = scmp.lt.s32.totalorder %s22, 1
          %s339 = scalar_select %p338, %s22, 1
          %s340 = smul.addr %s339, 5
          %s341 = scalar_lea.vmem %s1, %s340
        $region52: #{tpu_custom_call.1} parent=43 // pred_fallthru
          _
        // Predicated region
        $region53: #{tpu_custom_call.1} parent=43 // pred_check
          %p342 = pneg %p94
        $region54: #{tpu_custom_call.1} parent=43 // pred_check_branch
          %344 = sbr.rel (%p342) target = $region56
        $region55: #{tpu_custom_call.1} parent=43 // pred_region
          %p345 = scmp.lt.s32.totalorder %s22, 1
          %s346 = scalar_select %p345, %s22, 1
          %s347 = smul.addr %s346, 5
          %s348 = scalar_lea.vmem %s2, %s347
        $region56: #{tpu_custom_call.1} parent=43 // pred_fallthru
          _
      $region44: #{tpu_custom_call.1} parent=5 // pred_fallthru
        _
      %p349 = scmp.le.s32.totalorder 1, %s22
      %p350 = scmp.lt.s32.totalorder %s22, 3
      %p351 = pnand %p349, %p350
      %p352 = pneg %p351
      // Predicated region
      $region57: #{tpu_custom_call.1} parent=5 // pred_check
        _
      $region58: #{tpu_custom_call.1} parent=5 // pred_check_branch
        %354 = sbr.rel (%p351) target = $region60
      $region59: #{tpu_custom_call.1} parent=5 // pred_region
        %s355 = ssub.s32 %s22, 1
        %s356 = sand.u32 %s35, 1
        %s357 = scalar_lea.sflag [#allocation3], %s356
        %s358 = sand.u32 %s35, 1
        %s359 = smul.addr %s358, 480
        %s360 = scalar_lea.vmem [#allocation2], %s359
        // Predicated region
        $region61: #{tpu_custom_call.1} parent=59 // pred_check
          %p361 = pneg %p48
        $region62: #{tpu_custom_call.1} parent=59 // pred_check_branch
          %363 = sbr.rel (%p361) target = $region64
        $region63: #{tpu_custom_call.1} parent=59 // pred_region
          %365 = dma.done %s357, 7680
        $region64: #{tpu_custom_call.1} parent=59 // pred_fallthru
          _
        %s366 = sand.u32 %s35, 1
        %s367 = scalar_lea.sflag [#allocation3], %s366
        %s368 = sand.u32 %s35, 1
        %s369 = smul.addr %s368, 480
        %s370 = scalar_lea.vmem [#allocation2], %s369
        %p371 = pneg %p48
        %p372 = pneg %p45
        %p373 = scmp.lt.s32.totalorder %s27, 1
        %s374 = scalar_select %p373, %s27, 1
        %s375 = smul.addr %s374, 5
        %s376 = scalar_lea.vmem %s1, %s375
        %p377 = pneg %p74
        %p378 = pneg %p71
        %p379 = scmp.lt.s32.totalorder %s27, 1
        %s380 = scalar_select %p379, %s27, 1
        %s381 = smul.addr %s380, 5
        %s382 = scalar_lea.vmem %s2, %s381
        %p383 = pneg %p100
        %p384 = pneg %p97
        %p385 = pneg %p121
        %p386 = pneg %p118
        %p387 = pneg %p142
        %p388 = pneg %p139
        %p389 = pneg %p163
        %p390 = pneg %p160
        %p391 = pneg %p184
        %p392 = pneg %p181
        %p393 = pneg %p205
        %p394 = pneg %p202
        %p395 = pneg %p226
        %p396 = pneg %p223
        %p397 = pneg %p247
        %p398 = pneg %p244
        %p399 = pneg %p273
        %p400 = pneg %p270
        %s401 = sand.u32 %s260, 1
        %s402 = scalar_lea.sflag [#allocation4], %s401
        %s403 = sand.u32 %s260, 1
        %s404 = smul.addr %s403, 128
        %s405 = scalar_lea.vmem [#allocation5], %s404
        %p406 = scmp.lt.s32.totalorder %s27, 1
        %s407 = scalar_select %p406, %s27, 1
        %s408 = smul.addr %s407, 5
        %s409 = scalar_lea.vmem %s1, %s408
        %p410 = scmp.lt.s32.totalorder %s27, 1
        %s411 = scalar_select %p410, %s27, 1
        %s412 = smul.addr %s411, 5
        %s413 = scalar_lea.vmem %s2, %s412
        %s414 = smul.u32 4, %s27
        %v415 = vld [vmem:[%s360] sm:$0xff]
        %v416 = vld [vmem:[%s360 + $0x8] sm:$0xff]
        %v417 = vld [vmem:[%s360 + $0x10] sm:$0xff]
        %v418 = vld [vmem:[%s360 + $0x18] sm:$0xff]
        %v419 = vld [vmem:[%s360 + $0x20] sm:$0xff]
        %v420 = vld [vmem:[%s360 + $0x28] sm:$0xff]
        %v421 = vld [vmem:[%s360 + $0x30] sm:$0xff]
        %v422 = vld [vmem:[%s360 + $0x38] sm:$0xff]
        %v423 = vld [vmem:[%s360 + $0x40] sm:$0xff]
        %v424 = vld [vmem:[%s360 + $0x48] sm:$0xff]
        %v425 = vld [vmem:[%s360 + $0x50] sm:$0xff]
        %v426 = vld [vmem:[%s360 + $0x58] sm:$0xff]
        %v427 = vld [vmem:[%s360 + $0x60] sm:$0xff]
        %v428 = vld [vmem:[%s360 + $0x68] sm:$0xff]
        %v429 = vld [vmem:[%s360 + $0x70] sm:$0xff]
        %v430 = vld [vmem:[%s360 + $0x78] sm:$0xff]
        %v431 = vld [vmem:[%s360 + $0x80] sm:$0xff]
        %v432 = vld [vmem:[%s360 + $0x88] sm:$0xff]
        %v433 = vld [vmem:[%s360 + $0x90] sm:$0xff]
        %v434 = vld [vmem:[%s360 + $0x98] sm:$0xff]
        %v435 = vld [vmem:[%s360 + $0xa0] sm:$0xff]
        %v436 = vld [vmem:[%s360 + $0xa8] sm:$0xff]
        %v437 = vld [vmem:[%s360 + $0xb0] sm:$0xff]
        %v438 = vld [vmem:[%s360 + $0xb8] sm:$0xff]
        %v439 = vld [vmem:[%s360 + $0xc0] sm:$0xff]
        %v440 = vld [vmem:[%s360 + $0xc8] sm:$0xff]
        %v441 = vld [vmem:[%s360 + $0xd0] sm:$0xff]
        %v442 = vld [vmem:[%s360 + $0xd8] sm:$0xff]
        %v443 = vld [vmem:[%s360 + $0xe0] sm:$0xff]
        %v444 = vld [vmem:[%s360 + $0xe8] sm:$0xff]
        %v445 = vld [vmem:[%s360 + $0xf0] sm:$0xff]
        %v446 = vld [vmem:[%s360 + $0xf8] sm:$0xff]
        %v447 = vld [vmem:[%s360 + $0x100] sm:$0xff]
        %v448 = vld [vmem:[%s360 + $0x108] sm:$0xff]
        %v449 = vld [vmem:[%s360 + $0x110] sm:$0xff]
        %v450 = vld [vmem:[%s360 + $0x118] sm:$0xff]
        %v451 = vld [vmem:[%s360 + $0x120] sm:$0xff]
        %v452 = vld [vmem:[%s360 + $0x128] sm:$0xff]
        %v453 = vld [vmem:[%s360 + $0x130] sm:$0xff]
        %v454 = vld [vmem:[%s360 + $0x138] sm:$0xff]
        %v455 = vld [vmem:[%s360 + $0x140] sm:$0xff]
        %v456 = vld [vmem:[%s360 + $0x148] sm:$0xff]
        %v457 = vld [vmem:[%s360 + $0x150] sm:$0xff]
        %v458 = vld [vmem:[%s360 + $0x158] sm:$0xff]
        %v459 = vld [vmem:[%s360 + $0x160] sm:$0xff]
        %v460 = vld [vmem:[%s360 + $0x168] sm:$0xff]
        %v461 = vld [vmem:[%s360 + $0x170] sm:$0xff]
        %v462 = vld [vmem:[%s360 + $0x178] sm:$0xff]
        %v463 = vld [vmem:[%s360 + $0x180] sm:$0xff]
        %v464 = vld [vmem:[%s360 + $0x188] sm:$0xff]
        %v465 = vld [vmem:[%s360 + $0x190] sm:$0xff]
        %v466 = vld [vmem:[%s360 + $0x198] sm:$0xff]
        %v467 = vld [vmem:[%s360 + $0x1a0] sm:$0xff]
        %v468 = vld [vmem:[%s360 + $0x1a8] sm:$0xff]
        %v469 = vld [vmem:[%s360 + $0x1b0] sm:$0xff]
        %v470 = vld [vmem:[%s360 + $0x1b8] sm:$0xff]
        %v471 = vld [vmem:[%s360 + $0x1c0] sm:$0xff]
        %v472 = vld [vmem:[%s360 + $0x1c8] sm:$0xff]
        %v473 = vld [vmem:[%s360 + $0x1d0] sm:$0xff]
        %v474 = vld [vmem:[%s360 + $0x1d8] sm:$0xff]
        %v475 = vld [vmem:[%s409] sm:$0x1f]
        %v476 = vld [vmem:[%s413] sm:$0x1f]
        %v477 = vld [vmem:[%s3] sm:$0xff]
        %v478 = vld [vmem:[%s3 + $0x8] sm:$0xff]
        %v479 = vld [vmem:[%s3 + $0x10] sm:$0xff]
        %v480 = vld [vmem:[%s3 + $0x18] sm:$0xff]
        %v481 = vld [vmem:[%s3 + $0x20] sm:$0xff]
        %v482 = vld [vmem:[%s3 + $0x28] sm:$0xff]
        %v483 = vld [vmem:[%s3 + $0x30] sm:$0xff]
        %v484 = vld [vmem:[%s3 + $0x38] sm:$0xff]
        %v485 = vld [vmem:[%s3 + $0x40] sm:$0xff]
        %v486 = vld [vmem:[%s3 + $0x48] sm:$0xff]
        %v487 = vld [vmem:[%s3 + $0x50] sm:$0xff]
        %v488 = vld [vmem:[%s3 + $0x58] sm:$0xff]
        %v489 = vld [vmem:[%s6] sm:$0xff]
        %v490 = vld [vmem:[%s6 + $0x8] sm:$0xff]
        %v491 = vld [vmem:[%s6 + $0x10] sm:$0xff]
        %v492 = vld [vmem:[%s6 + $0x18] sm:$0xff]
        %v493 = vld [vmem:[%s6 + $0x20] sm:$0xff]
        %v494 = vld [vmem:[%s6 + $0x28] sm:$0xff]
        %v495 = vld [vmem:[%s6 + $0x30] sm:$0xff]
        %v496 = vld [vmem:[%s6 + $0x38] sm:$0xff]
        %v497 = vld [vmem:[%s6 + $0x40] sm:$0xff]
        %v498 = vld [vmem:[%s6 + $0x48] sm:$0xff]
        %v499 = vld [vmem:[%s6 + $0x50] sm:$0xff]
        %v500 = vld [vmem:[%s6 + $0x58] sm:$0xff]
        %v501 = vld [vmem:[%s4] sm:$0xff]
        %v502 = vld [vmem:[%s4 + $0x8] sm:$0xff]
        %v503 = vld [vmem:[%s4 + $0x10] sm:$0xff]
        %v504 = vld [vmem:[%s4 + $0x18] sm:$0xff]
        %v505 = vld [vmem:[%s4 + $0x20] sm:$0xff]
        %v506 = vld [vmem:[%s4 + $0x28] sm:$0xff]
        %v507 = vld [vmem:[%s4 + $0x30] sm:$0xff]
        %v508 = vld [vmem:[%s4 + $0x38] sm:$0xff]
        %v509 = vld [vmem:[%s4 + $0x40] sm:$0xff]
        %v510 = vld [vmem:[%s4 + $0x48] sm:$0xff]
        %v511 = vld [vmem:[%s4 + $0x50] sm:$0xff]
        %v512 = vld [vmem:[%s4 + $0x58] sm:$0xff]
        %v513 = vld [vmem:[%s5] sm:$0xff]
        %v514 = vld [vmem:[%s5 + $0x8] sm:$0xff]
        %v515 = vld [vmem:[%s5 + $0x10] sm:$0xff]
        %v516 = vld [vmem:[%s5 + $0x18] sm:$0xff]
        %v517 = vld [vmem:[%s5 + $0x20] sm:$0xff]
        %v518 = vld [vmem:[%s5 + $0x28] sm:$0xff]
        %v519 = vld [vmem:[%s5 + $0x30] sm:$0xff]
        %v520 = vld [vmem:[%s5 + $0x38] sm:$0xff]
        %v521 = vld [vmem:[%s5 + $0x40] sm:$0xff]
        %v522 = vld [vmem:[%s5 + $0x48] sm:$0xff]
        %v523 = vld [vmem:[%s5 + $0x50] sm:$0xff]
        %v524 = vld [vmem:[%s5 + $0x58] sm:$0xff]
        %v525 = vld [vmem:[%s7] sm:$0xff]
        %v526 = vld [vmem:[%s7 + $0x8] sm:$0xff]
        %v527 = vld [vmem:[%s7 + $0x10] sm:$0xff]
        %v528 = vld [vmem:[%s7 + $0x18] sm:$0xff]
        %v529 = vld [vmem:[%s7 + $0x20] sm:$0xff]
        %v530 = vld [vmem:[%s7 + $0x28] sm:$0xff]
        %v531 = vld [vmem:[%s7 + $0x30] sm:$0xff]
        %v532 = vld [vmem:[%s7 + $0x38] sm:$0xff]
        %v533 = vld [vmem:[%s7 + $0x40] sm:$0xff]
        %v534 = vld [vmem:[%s7 + $0x48] sm:$0xff]
        %v535 = vld [vmem:[%s7 + $0x50] sm:$0xff]
        %v536 = vld [vmem:[%s7 + $0x58] sm:$0xff]
        %v537 = vld [vmem:[%s8] sm:$0xff]
        %v538 = vld [vmem:[%s8 + $0x8] sm:$0xff]
        %v539 = vld [vmem:[%s8 + $0x10] sm:$0xff]
        %v540 = vld [vmem:[%s8 + $0x18] sm:$0xff]
        %v541 = vld [vmem:[%s8 + $0x20] sm:$0xff]
        %v542 = vld [vmem:[%s8 + $0x28] sm:$0xff]
        %v543 = vld [vmem:[%s8 + $0x30] sm:$0xff]
        %v544 = vld [vmem:[%s8 + $0x38] sm:$0xff]
        %v545 = vld [vmem:[%s8 + $0x40] sm:$0xff]
        %v546 = vld [vmem:[%s8 + $0x48] sm:$0xff]
        %v547 = vld [vmem:[%s8 + $0x50] sm:$0xff]
        %v548 = vld [vmem:[%s8 + $0x58] sm:$0xff]
        %v549 = vlaneseq
        %v550 = vand.u32 %v549, 127
        %v551 = vadd.s32 %v550, 128
        %v552 = vadd.s32 %v550, 256
        %v553 = vadd.s32 %v550, 384
        %v554 = vadd.s32 %v550, 512
        %s555 = smul.u32 %s27, 512
        %s556 = ssub.s32 %s555, 64
        %v557 = vstv %s556
        %v558 = vadd.s32 %v550, %v557
        %v559 = vadd.s32 %v551, %v557
        %v560 = vadd.s32 %v552, %v557
        %v561 = vadd.s32 %v553, %v557
        %v562 = vadd.s32 %v554, %v557
        %v563 = vand.u32 %v550, 1
        %v564 = vand.u32 %v551, 1
        %v565 = vand.u32 %v552, 1
        %v566 = vand.u32 %v553, 1
        %v567 = vand.u32 %v554, 1
        %vm568 = vcmp.eq.s32.totalorder %v563, 1
        %vm569 = vcmp.eq.s32.totalorder %v564, 1
        %vm570 = vcmp.eq.s32.totalorder %v565, 1
        %vm571 = vcmp.eq.s32.totalorder %v566, 1
        %vm572 = vcmp.eq.s32.totalorder %v567, 1
        %vm573 = vcmp.eq.s32.totalorder %v558, 0
        %vm574 = vcmp.eq.s32.totalorder %v559, 0
        %vm575 = vcmp.eq.s32.totalorder %v560, 0
        %vm576 = vcmp.eq.s32.totalorder %v561, 0
        %vm577 = vcmp.eq.s32.totalorder %v562, 0
        %vm578 = vcmp.eq.s32.totalorder %v558, 1023
        %vm579 = vcmp.eq.s32.totalorder %v559, 1023
        %vm580 = vcmp.eq.s32.totalorder %v560, 1023
        %vm581 = vcmp.eq.s32.totalorder %v561, 1023
        %vm582 = vcmp.eq.s32.totalorder %v562, 1023
        %vm583 = vcmp.le.s32.totalorder %v558, 1
        %vm584 = vcmp.le.s32.totalorder %v559, 1
        %vm585 = vcmp.le.s32.totalorder %v560, 1
        %vm586 = vcmp.le.s32.totalorder %v561, 1
        %vm587 = vcmp.le.s32.totalorder %v562, 1
        %vm588 = vcmp.ge.s32.totalorder %v558, 1022
        %vm589 = vcmp.ge.s32.totalorder %v559, 1022
        %vm590 = vcmp.ge.s32.totalorder %v560, 1022
        %vm591 = vcmp.ge.s32.totalorder %v561, 1022
        %vm592 = vcmp.ge.s32.totalorder %v562, 1022
        %593 = vrot.lane.b32.xlu0 %v415, 1
        %v594 = vpop.permute.xlu0 %593
        %595 = vrot.lane.b32.xlu0 %v420, 1
        %v596 = vpop.permute.xlu0 %595
        %597 = vrot.lane.b32.xlu0 %v425, 1
        %v598 = vpop.permute.xlu0 %597
        %599 = vrot.lane.b32.xlu0 %v430, 1
        %v600 = vpop.permute.xlu0 %599
        %601 = vrot.lane.b32.xlu0 %v435, 1
        %v602 = vpop.permute.xlu0 %601
        %603 = vrot.lane.b32.xlu0 %v440, 1
        %v604 = vpop.permute.xlu0 %603
        %605 = vrot.lane.b32.xlu0 %v445, 1
        %v606 = vpop.permute.xlu0 %605
        %607 = vrot.lane.b32.xlu0 %v450, 1
        %v608 = vpop.permute.xlu0 %607
        %609 = vrot.lane.b32.xlu0 %v455, 1
        %v610 = vpop.permute.xlu0 %609
        %611 = vrot.lane.b32.xlu0 %v460, 1
        %v612 = vpop.permute.xlu0 %611
        %613 = vrot.lane.b32.xlu0 %v465, 1
        %v614 = vpop.permute.xlu0 %613
        %615 = vrot.lane.b32.xlu0 %v470, 1
        %v616 = vpop.permute.xlu0 %615
        %617 = vrot.lane.b32.xlu0 %v416, 1
        %v618 = vpop.permute.xlu0 %617
        %619 = vrot.lane.b32.xlu0 %v421, 1
        %v620 = vpop.permute.xlu0 %619
        %621 = vrot.lane.b32.xlu0 %v426, 1
        %v622 = vpop.permute.xlu0 %621
        %623 = vrot.lane.b32.xlu0 %v431, 1
        %v624 = vpop.permute.xlu0 %623
        %625 = vrot.lane.b32.xlu0 %v436, 1
        %v626 = vpop.permute.xlu0 %625
        %627 = vrot.lane.b32.xlu0 %v441, 1
        %v628 = vpop.permute.xlu0 %627
        %629 = vrot.lane.b32.xlu0 %v446, 1
        %v630 = vpop.permute.xlu0 %629
        %631 = vrot.lane.b32.xlu0 %v451, 1
        %v632 = vpop.permute.xlu0 %631
        %633 = vrot.lane.b32.xlu0 %v456, 1
        %v634 = vpop.permute.xlu0 %633
        %635 = vrot.lane.b32.xlu0 %v461, 1
        %v636 = vpop.permute.xlu0 %635
        %637 = vrot.lane.b32.xlu0 %v466, 1
        %v638 = vpop.permute.xlu0 %637
        %639 = vrot.lane.b32.xlu0 %v471, 1
        %v640 = vpop.permute.xlu0 %639
        %641 = vrot.lane.b32.xlu0 %v417, 1
        %v642 = vpop.permute.xlu0 %641
        %643 = vrot.lane.b32.xlu0 %v422, 1
        %v644 = vpop.permute.xlu0 %643
        %645 = vrot.lane.b32.xlu0 %v427, 1
        %v646 = vpop.permute.xlu0 %645
        %647 = vrot.lane.b32.xlu0 %v432, 1
        %v648 = vpop.permute.xlu0 %647
        %649 = vrot.lane.b32.xlu0 %v437, 1
        %v650 = vpop.permute.xlu0 %649
        %651 = vrot.lane.b32.xlu0 %v442, 1
        %v652 = vpop.permute.xlu0 %651
        %653 = vrot.lane.b32.xlu0 %v447, 1
        %v654 = vpop.permute.xlu0 %653
        %655 = vrot.lane.b32.xlu0 %v452, 1
        %v656 = vpop.permute.xlu0 %655
        %657 = vrot.lane.b32.xlu0 %v457, 1
        %v658 = vpop.permute.xlu0 %657
        %659 = vrot.lane.b32.xlu0 %v462, 1
        %v660 = vpop.permute.xlu0 %659
        %661 = vrot.lane.b32.xlu0 %v467, 1
        %v662 = vpop.permute.xlu0 %661
        %663 = vrot.lane.b32.xlu0 %v472, 1
        %v664 = vpop.permute.xlu0 %663
        %665 = vrot.lane.b32.xlu0 %v418, 1
        %v666 = vpop.permute.xlu0 %665
        %667 = vrot.lane.b32.xlu0 %v423, 1
        %v668 = vpop.permute.xlu0 %667
        %669 = vrot.lane.b32.xlu0 %v428, 1
        %v670 = vpop.permute.xlu0 %669
        %671 = vrot.lane.b32.xlu0 %v433, 1
        %v672 = vpop.permute.xlu0 %671
        %673 = vrot.lane.b32.xlu0 %v438, 1
        %v674 = vpop.permute.xlu0 %673
        %675 = vrot.lane.b32.xlu0 %v443, 1
        %v676 = vpop.permute.xlu0 %675
        %677 = vrot.lane.b32.xlu0 %v448, 1
        %v678 = vpop.permute.xlu0 %677
        %679 = vrot.lane.b32.xlu0 %v453, 1
        %v680 = vpop.permute.xlu0 %679
        %681 = vrot.lane.b32.xlu0 %v458, 1
        %v682 = vpop.permute.xlu0 %681
        %683 = vrot.lane.b32.xlu0 %v463, 1
        %v684 = vpop.permute.xlu0 %683
        %685 = vrot.lane.b32.xlu0 %v468, 1
        %v686 = vpop.permute.xlu0 %685
        %687 = vrot.lane.b32.xlu0 %v473, 1
        %v688 = vpop.permute.xlu0 %687
        %689 = vrot.lane.b32.xlu0 %v419, 1
        %v690 = vpop.permute.xlu0 %689
        %691 = vrot.lane.b32.xlu0 %v424, 1
        %v692 = vpop.permute.xlu0 %691
        %693 = vrot.lane.b32.xlu0 %v429, 1
        %v694 = vpop.permute.xlu0 %693
        %695 = vrot.lane.b32.xlu0 %v434, 1
        %v696 = vpop.permute.xlu0 %695
        %697 = vrot.lane.b32.xlu0 %v439, 1
        %v698 = vpop.permute.xlu0 %697
        %699 = vrot.lane.b32.xlu0 %v444, 1
        %v700 = vpop.permute.xlu0 %699
        %701 = vrot.lane.b32.xlu0 %v449, 1
        %v702 = vpop.permute.xlu0 %701
        %703 = vrot.lane.b32.xlu0 %v454, 1
        %v704 = vpop.permute.xlu0 %703
        %705 = vrot.lane.b32.xlu0 %v459, 1
        %v706 = vpop.permute.xlu0 %705
        %707 = vrot.lane.b32.xlu0 %v464, 1
        %v708 = vpop.permute.xlu0 %707
        %709 = vrot.lane.b32.xlu0 %v469, 1
        %v710 = vpop.permute.xlu0 %709
        %711 = vrot.lane.b32.xlu0 %v474, 1
        %v712 = vpop.permute.xlu0 %711
        %vm713 = vcmp.lt.s32.totalorder %v550, 1
        %v714 = vsel %vm713, %v666, %v690
        %v715 = vsel %vm713, %v668, %v692
        %v716 = vsel %vm713, %v670, %v694
        %v717 = vsel %vm713, %v672, %v696
        %v718 = vsel %vm713, %v674, %v698
        %v719 = vsel %vm713, %v676, %v700
        %v720 = vsel %vm713, %v678, %v702
        %v721 = vsel %vm713, %v680, %v704
        %v722 = vsel %vm713, %v682, %v706
        %v723 = vsel %vm713, %v684, %v708
        %v724 = vsel %vm713, %v686, %v710
        %v725 = vsel %vm713, %v688, %v712
        %v726 = vsel %vm713, %v642, %v666
        %v727 = vsel %vm713, %v644, %v668
        %v728 = vsel %vm713, %v646, %v670
        %v729 = vsel %vm713, %v648, %v672
        %v730 = vsel %vm713, %v650, %v674
        %v731 = vsel %vm713, %v652, %v676
        %v732 = vsel %vm713, %v654, %v678
        %v733 = vsel %vm713, %v656, %v680
        %v734 = vsel %vm713, %v658, %v682
        %v735 = vsel %vm713, %v660, %v684
        %v736 = vsel %vm713, %v662, %v686
        %v737 = vsel %vm713, %v664, %v688
        %v738 = vsel %vm713, %v618, %v642
        %v739 = vsel %vm713, %v620, %v644
        %v740 = vsel %vm713, %v622, %v646
        %v741 = vsel %vm713, %v624, %v648
        %v742 = vsel %vm713, %v626, %v650
        %v743 = vsel %vm713, %v628, %v652
        %v744 = vsel %vm713, %v630, %v654
        %v745 = vsel %vm713, %v632, %v656
        %v746 = vsel %vm713, %v634, %v658
        %v747 = vsel %vm713, %v636, %v660
        %v748 = vsel %vm713, %v638, %v662
        %v749 = vsel %vm713, %v640, %v664
        %v750 = vsel %vm713, %v594, %v618
        %v751 = vsel %vm713, %v596, %v620
        %v752 = vsel %vm713, %v598, %v622
        %v753 = vsel %vm713, %v600, %v624
        %v754 = vsel %vm713, %v602, %v626
        %v755 = vsel %vm713, %v604, %v628
        %v756 = vsel %vm713, %v606, %v630
        %v757 = vsel %vm713, %v608, %v632
        %v758 = vsel %vm713, %v610, %v634
        %v759 = vsel %vm713, %v612, %v636
        %v760 = vsel %vm713, %v614, %v638
        %v761 = vsel %vm713, %v616, %v640
        %v762 = vsel %vm713, %v690, %v594
        %v763 = vsel %vm713, %v692, %v596
        %v764 = vsel %vm713, %v694, %v598
        %v765 = vsel %vm713, %v696, %v600
        %v766 = vsel %vm713, %v698, %v602
        %v767 = vsel %vm713, %v700, %v604
        %v768 = vsel %vm713, %v702, %v606
        %v769 = vsel %vm713, %v704, %v608
        %v770 = vsel %vm713, %v706, %v610
        %v771 = vsel %vm713, %v708, %v612
        %v772 = vsel %vm713, %v710, %v614
        %v773 = vsel %vm713, %v712, %v616
        %v774 = vsel %vm573, 0.0, %v762
        %v775 = vsel %vm574, 0.0, %v750
        %v776 = vsel %vm575, 0.0, %v738
        %v777 = vsel %vm576, 0.0, %v726
        %v778 = vsel %vm577, 0.0, %v714
        %v779 = vsel %vm573, 0.0, %v763
        %v780 = vsel %vm574, 0.0, %v751
        %v781 = vsel %vm575, 0.0, %v739
        %v782 = vsel %vm576, 0.0, %v727
        %v783 = vsel %vm577, 0.0, %v715
        %v784 = vsel %vm573, 0.0, %v764
        %v785 = vsel %vm574, 0.0, %v752
        %v786 = vsel %vm575, 0.0, %v740
        %v787 = vsel %vm576, 0.0, %v728
        %v788 = vsel %vm577, 0.0, %v716
        %v789 = vsel %vm573, 0.0, %v765
        %v790 = vsel %vm574, 0.0, %v753
        %v791 = vsel %vm575, 0.0, %v741
        %v792 = vsel %vm576, 0.0, %v729
        %v793 = vsel %vm577, 0.0, %v717
        %v794 = vsel %vm573, 0.0, %v766
        %v795 = vsel %vm574, 0.0, %v754
        %v796 = vsel %vm575, 0.0, %v742
        %v797 = vsel %vm576, 0.0, %v730
        %v798 = vsel %vm577, 0.0, %v718
        %v799 = vsel %vm573, 0.0, %v767
        %v800 = vsel %vm574, 0.0, %v755
        %v801 = vsel %vm575, 0.0, %v743
        %v802 = vsel %vm576, 0.0, %v731
        %v803 = vsel %vm577, 0.0, %v719
        %v804 = vsel %vm573, 0.0, %v768
        %v805 = vsel %vm574, 0.0, %v756
        %v806 = vsel %vm575, 0.0, %v744
        %v807 = vsel %vm576, 0.0, %v732
        %v808 = vsel %vm577, 0.0, %v720
        %v809 = vsel %vm573, 0.0, %v769
        %v810 = vsel %vm574, 0.0, %v757
        %v811 = vsel %vm575, 0.0, %v745
        %v812 = vsel %vm576, 0.0, %v733
        %v813 = vsel %vm577, 0.0, %v721
        %v814 = vsel %vm573, 0.0, %v770
        %v815 = vsel %vm574, 0.0, %v758
        %v816 = vsel %vm575, 0.0, %v746
        %v817 = vsel %vm576, 0.0, %v734
        %v818 = vsel %vm577, 0.0, %v722
        %v819 = vsel %vm573, 0.0, %v771
        %v820 = vsel %vm574, 0.0, %v759
        %v821 = vsel %vm575, 0.0, %v747
        %v822 = vsel %vm576, 0.0, %v735
        %v823 = vsel %vm577, 0.0, %v723
        %v824 = vsel %vm573, 0.0, %v772
        %v825 = vsel %vm574, 0.0, %v760
        %v826 = vsel %vm575, 0.0, %v748
        %v827 = vsel %vm576, 0.0, %v736
        %v828 = vsel %vm577, 0.0, %v724
        %v829 = vsel %vm573, 0.0, %v773
        %v830 = vsel %vm574, 0.0, %v761
        %v831 = vsel %vm575, 0.0, %v749
        %v832 = vsel %vm576, 0.0, %v737
        %v833 = vsel %vm577, 0.0, %v725
        %834 = vrot.lane.b32.xlu0 %v415, 127
        %v835 = vpop.permute.xlu0 %834
        %836 = vrot.lane.b32.xlu0 %v420, 127
        %v837 = vpop.permute.xlu0 %836
        %838 = vrot.lane.b32.xlu0 %v425, 127
        %v839 = vpop.permute.xlu0 %838
        %840 = vrot.lane.b32.xlu0 %v430, 127
        %v841 = vpop.permute.xlu0 %840
        %842 = vrot.lane.b32.xlu0 %v435, 127
        %v843 = vpop.permute.xlu0 %842
        %844 = vrot.lane.b32.xlu0 %v440, 127
        %v845 = vpop.permute.xlu0 %844
        %846 = vrot.lane.b32.xlu0 %v445, 127
        %v847 = vpop.permute.xlu0 %846
        %848 = vrot.lane.b32.xlu0 %v450, 127
        %v849 = vpop.permute.xlu0 %848
        %850 = vrot.lane.b32.xlu0 %v455, 127
        %v851 = vpop.permute.xlu0 %850
        %852 = vrot.lane.b32.xlu0 %v460, 127
        %v853 = vpop.permute.xlu0 %852
        %854 = vrot.lane.b32.xlu0 %v465, 127
        %v855 = vpop.permute.xlu0 %854
        %856 = vrot.lane.b32.xlu0 %v470, 127
        %v857 = vpop.permute.xlu0 %856
        %858 = vrot.lane.b32.xlu0 %v416, 127
        %v859 = vpop.permute.xlu0 %858
        %860 = vrot.lane.b32.xlu0 %v421, 127
        %v861 = vpop.permute.xlu0 %860
        %862 = vrot.lane.b32.xlu0 %v426, 127
        %v863 = vpop.permute.xlu0 %862
        %864 = vrot.lane.b32.xlu0 %v431, 127
        %v865 = vpop.permute.xlu0 %864
        %866 = vrot.lane.b32.xlu0 %v436, 127
        %v867 = vpop.permute.xlu0 %866
        %868 = vrot.lane.b32.xlu0 %v441, 127
        %v869 = vpop.permute.xlu0 %868
        %870 = vrot.lane.b32.xlu0 %v446, 127
        %v871 = vpop.permute.xlu0 %870
        %872 = vrot.lane.b32.xlu0 %v451, 127
        %v873 = vpop.permute.xlu0 %872
        %874 = vrot.lane.b32.xlu0 %v456, 127
        %v875 = vpop.permute.xlu0 %874
        %876 = vrot.lane.b32.xlu0 %v461, 127
        %v877 = vpop.permute.xlu0 %876
        %878 = vrot.lane.b32.xlu0 %v466, 127
        %v879 = vpop.permute.xlu0 %878
        %880 = vrot.lane.b32.xlu0 %v471, 127
        %v881 = vpop.permute.xlu0 %880
        %882 = vrot.lane.b32.xlu0 %v417, 127
        %v883 = vpop.permute.xlu0 %882
        %884 = vrot.lane.b32.xlu0 %v422, 127
        %v885 = vpop.permute.xlu0 %884
        %886 = vrot.lane.b32.xlu0 %v427, 127
        %v887 = vpop.permute.xlu0 %886
        %888 = vrot.lane.b32.xlu0 %v432, 127
        %v889 = vpop.permute.xlu0 %888
        %890 = vrot.lane.b32.xlu0 %v437, 127
        %v891 = vpop.permute.xlu0 %890
        %892 = vrot.lane.b32.xlu0 %v442, 127
        %v893 = vpop.permute.xlu0 %892
        %894 = vrot.lane.b32.xlu0 %v447, 127
        %v895 = vpop.permute.xlu0 %894
        %896 = vrot.lane.b32.xlu0 %v452, 127
        %v897 = vpop.permute.xlu0 %896
        %898 = vrot.lane.b32.xlu0 %v457, 127
        %v899 = vpop.permute.xlu0 %898
        %900 = vrot.lane.b32.xlu0 %v462, 127
        %v901 = vpop.permute.xlu0 %900
        %902 = vrot.lane.b32.xlu0 %v467, 127
        %v903 = vpop.permute.xlu0 %902
        %904 = vrot.lane.b32.xlu0 %v472, 127
        %v905 = vpop.permute.xlu0 %904
        %906 = vrot.lane.b32.xlu0 %v418, 127
        %v907 = vpop.permute.xlu0 %906
        %908 = vrot.lane.b32.xlu0 %v423, 127
        %v909 = vpop.permute.xlu0 %908
        %910 = vrot.lane.b32.xlu0 %v428, 127
        %v911 = vpop.permute.xlu0 %910
        %912 = vrot.lane.b32.xlu0 %v433, 127
        %v913 = vpop.permute.xlu0 %912
        %914 = vrot.lane.b32.xlu0 %v438, 127
        %v915 = vpop.permute.xlu0 %914
        %916 = vrot.lane.b32.xlu0 %v443, 127
        %v917 = vpop.permute.xlu0 %916
        %918 = vrot.lane.b32.xlu0 %v448, 127
        %v919 = vpop.permute.xlu0 %918
        %920 = vrot.lane.b32.xlu0 %v453, 127
        %v921 = vpop.permute.xlu0 %920
        %922 = vrot.lane.b32.xlu0 %v458, 127
        %v923 = vpop.permute.xlu0 %922
        %924 = vrot.lane.b32.xlu0 %v463, 127
        %v925 = vpop.permute.xlu0 %924
        %926 = vrot.lane.b32.xlu0 %v468, 127
        %v927 = vpop.permute.xlu0 %926
        %928 = vrot.lane.b32.xlu0 %v473, 127
        %v929 = vpop.permute.xlu0 %928
        %930 = vrot.lane.b32.xlu0 %v419, 127
        %v931 = vpop.permute.xlu0 %930
        %932 = vrot.lane.b32.xlu0 %v424, 127
        %v933 = vpop.permute.xlu0 %932
        %934 = vrot.lane.b32.xlu0 %v429, 127
        %v935 = vpop.permute.xlu0 %934
        %936 = vrot.lane.b32.xlu0 %v434, 127
        %v937 = vpop.permute.xlu0 %936
        %938 = vrot.lane.b32.xlu0 %v439, 127
        %v939 = vpop.permute.xlu0 %938
        %940 = vrot.lane.b32.xlu0 %v444, 127
        %v941 = vpop.permute.xlu0 %940
        %942 = vrot.lane.b32.xlu0 %v449, 127
        %v943 = vpop.permute.xlu0 %942
        %944 = vrot.lane.b32.xlu0 %v454, 127
        %v945 = vpop.permute.xlu0 %944
        %946 = vrot.lane.b32.xlu0 %v459, 127
        %v947 = vpop.permute.xlu0 %946
        %948 = vrot.lane.b32.xlu0 %v464, 127
        %v949 = vpop.permute.xlu0 %948
        %950 = vrot.lane.b32.xlu0 %v469, 127
        %v951 = vpop.permute.xlu0 %950
        %952 = vrot.lane.b32.xlu0 %v474, 127
        %v953 = vpop.permute.xlu0 %952
        %vm954 = vcmp.lt.s32.totalorder %v550, 127
        %v955 = vsel %vm954, %v907, %v931
        %v956 = vsel %vm954, %v909, %v933
        %v957 = vsel %vm954, %v911, %v935
        %v958 = vsel %vm954, %v913, %v937
        %v959 = vsel %vm954, %v915, %v939
        %v960 = vsel %vm954, %v917, %v941
        %v961 = vsel %vm954, %v919, %v943
        %v962 = vsel %vm954, %v921, %v945
        %v963 = vsel %vm954, %v923, %v947
        %v964 = vsel %vm954, %v925, %v949
        %v965 = vsel %vm954, %v927, %v951
        %v966 = vsel %vm954, %v929, %v953
        %v967 = vsel %vm954, %v883, %v907
        %v968 = vsel %vm954, %v885, %v909
        %v969 = vsel %vm954, %v887, %v911
        %v970 = vsel %vm954, %v889, %v913
        %v971 = vsel %vm954, %v891, %v915
        %v972 = vsel %vm954, %v893, %v917
        %v973 = vsel %vm954, %v895, %v919
        %v974 = vsel %vm954, %v897, %v921
        %v975 = vsel %vm954, %v899, %v923
        %v976 = vsel %vm954, %v901, %v925
        %v977 = vsel %vm954, %v903, %v927
        %v978 = vsel %vm954, %v905, %v929
        %v979 = vsel %vm954, %v859, %v883
        %v980 = vsel %vm954, %v861, %v885
        %v981 = vsel %vm954, %v863, %v887
        %v982 = vsel %vm954, %v865, %v889
        %v983 = vsel %vm954, %v867, %v891
        %v984 = vsel %vm954, %v869, %v893
        %v985 = vsel %vm954, %v871, %v895
        %v986 = vsel %vm954, %v873, %v897
        %v987 = vsel %vm954, %v875, %v899
        %v988 = vsel %vm954, %v877, %v901
        %v989 = vsel %vm954, %v879, %v903
        %v990 = vsel %vm954, %v881, %v905
        %v991 = vsel %vm954, %v835, %v859
        %v992 = vsel %vm954, %v837, %v861
        %v993 = vsel %vm954, %v839, %v863
        %v994 = vsel %vm954, %v841, %v865
        %v995 = vsel %vm954, %v843, %v867
        %v996 = vsel %vm954, %v845, %v869
        %v997 = vsel %vm954, %v847, %v871
        %v998 = vsel %vm954, %v849, %v873
        %v999 = vsel %vm954, %v851, %v875
        %v1000 = vsel %vm954, %v853, %v877
        %v1001 = vsel %vm954, %v855, %v879
        %v1002 = vsel %vm954, %v857, %v881
        %v1003 = vsel %vm954, %v931, %v835
        %v1004 = vsel %vm954, %v933, %v837
        %v1005 = vsel %vm954, %v935, %v839
        %v1006 = vsel %vm954, %v937, %v841
        %v1007 = vsel %vm954, %v939, %v843
        %v1008 = vsel %vm954, %v941, %v845
        %v1009 = vsel %vm954, %v943, %v847
        %v1010 = vsel %vm954, %v945, %v849
        %v1011 = vsel %vm954, %v947, %v851
        %v1012 = vsel %vm954, %v949, %v853
        %v1013 = vsel %vm954, %v951, %v855
        %v1014 = vsel %vm954, %v953, %v857
        %v1015 = vsel %vm578, 0.0, %v991
        %v1016 = vsel %vm579, 0.0, %v979
        %v1017 = vsel %vm580, 0.0, %v967
        %v1018 = vsel %vm581, 0.0, %v955
        %v1019 = vsel %vm582, 0.0, %v1003
        %v1020 = vsel %vm578, 0.0, %v992
        %v1021 = vsel %vm579, 0.0, %v980
        %v1022 = vsel %vm580, 0.0, %v968
        %v1023 = vsel %vm581, 0.0, %v956
        %v1024 = vsel %vm582, 0.0, %v1004
        %v1025 = vsel %vm578, 0.0, %v993
        %v1026 = vsel %vm579, 0.0, %v981
        %v1027 = vsel %vm580, 0.0, %v969
        %v1028 = vsel %vm581, 0.0, %v957
        %v1029 = vsel %vm582, 0.0, %v1005
        %v1030 = vsel %vm578, 0.0, %v994
        %v1031 = vsel %vm579, 0.0, %v982
        %v1032 = vsel %vm580, 0.0, %v970
        %v1033 = vsel %vm581, 0.0, %v958
        %v1034 = vsel %vm582, 0.0, %v1006
        %v1035 = vsel %vm578, 0.0, %v995
        %v1036 = vsel %vm579, 0.0, %v983
        %v1037 = vsel %vm580, 0.0, %v971
        %v1038 = vsel %vm581, 0.0, %v959
        %v1039 = vsel %vm582, 0.0, %v1007
        %v1040 = vsel %vm578, 0.0, %v996
        %v1041 = vsel %vm579, 0.0, %v984
        %v1042 = vsel %vm580, 0.0, %v972
        %v1043 = vsel %vm581, 0.0, %v960
        %v1044 = vsel %vm582, 0.0, %v1008
        %v1045 = vsel %vm578, 0.0, %v997
        %v1046 = vsel %vm579, 0.0, %v985
        %v1047 = vsel %vm580, 0.0, %v973
        %v1048 = vsel %vm581, 0.0, %v961
        %v1049 = vsel %vm582, 0.0, %v1009
        %v1050 = vsel %vm578, 0.0, %v998
        %v1051 = vsel %vm579, 0.0, %v986
        %v1052 = vsel %vm580, 0.0, %v974
        %v1053 = vsel %vm581, 0.0, %v962
        %v1054 = vsel %vm582, 0.0, %v1010
        %v1055 = vsel %vm578, 0.0, %v999
        %v1056 = vsel %vm579, 0.0, %v987
        %v1057 = vsel %vm580, 0.0, %v975
        %v1058 = vsel %vm581, 0.0, %v963
        %v1059 = vsel %vm582, 0.0, %v1011
        %v1060 = vsel %vm578, 0.0, %v1000
        %v1061 = vsel %vm579, 0.0, %v988
        %v1062 = vsel %vm580, 0.0, %v976
        %v1063 = vsel %vm581, 0.0, %v964
        %v1064 = vsel %vm582, 0.0, %v1012
        %v1065 = vsel %vm578, 0.0, %v1001
        %v1066 = vsel %vm579, 0.0, %v989
        %v1067 = vsel %vm580, 0.0, %v977
        %v1068 = vsel %vm581, 0.0, %v965
        %v1069 = vsel %vm582, 0.0, %v1013
        %v1070 = vsel %vm578, 0.0, %v1002
        %v1071 = vsel %vm579, 0.0, %v990
        %v1072 = vsel %vm580, 0.0, %v978
        %v1073 = vsel %vm581, 0.0, %v966
        %v1074 = vsel %vm582, 0.0, %v1014
        %1076 = vset.pattern.permute.xlu0 0
        %1077 = vperm.xlu0 %1076, %v477
        %v1078 = vpop.permute.xlu0 %1077
        %1081 = vset.pattern.permute.xlu0 0
        %1082 = vperm.xlu0 %1081, %v478
        %v1083 = vpop.permute.xlu0 %1082
        %1086 = vset.pattern.permute.xlu0 0
        %1087 = vperm.xlu0 %1086, %v479
        %v1088 = vpop.permute.xlu0 %1087
        %1091 = vset.pattern.permute.xlu0 0
        %1092 = vperm.xlu0 %1091, %v480
        %v1093 = vpop.permute.xlu0 %1092
        %1096 = vset.pattern.permute.xlu0 0
        %1097 = vperm.xlu0 %1096, %v481
        %v1098 = vpop.permute.xlu0 %1097
        %1101 = vset.pattern.permute.xlu0 0
        %1102 = vperm.xlu0 %1101, %v482
        %v1103 = vpop.permute.xlu0 %1102
        %1106 = vset.pattern.permute.xlu0 0
        %1107 = vperm.xlu0 %1106, %v483
        %v1108 = vpop.permute.xlu0 %1107
        %1111 = vset.pattern.permute.xlu0 0
        %1112 = vperm.xlu0 %1111, %v484
        %v1113 = vpop.permute.xlu0 %1112
        %1116 = vset.pattern.permute.xlu0 0
        %1117 = vperm.xlu0 %1116, %v485
        %v1118 = vpop.permute.xlu0 %1117
        %1121 = vset.pattern.permute.xlu0 0
        %1122 = vperm.xlu0 %1121, %v486
        %v1123 = vpop.permute.xlu0 %1122
        %1126 = vset.pattern.permute.xlu0 0
        %1127 = vperm.xlu0 %1126, %v487
        %v1128 = vpop.permute.xlu0 %1127
        %1131 = vset.pattern.permute.xlu0 0
        %1132 = vperm.xlu0 %1131, %v488
        %v1133 = vpop.permute.xlu0 %1132
        %v1135 = vmul.f32 %v1078, %v774
        %v1136 = vmul.f32 %v1078, %v775
        %v1137 = vmul.f32 %v1078, %v776
        %v1138 = vmul.f32 %v1078, %v777
        %v1139 = vmul.f32 %v1078, %v778
        %v1140 = vmul.f32 %v1083, %v779
        %v1141 = vmul.f32 %v1083, %v780
        %v1142 = vmul.f32 %v1083, %v781
        %v1143 = vmul.f32 %v1083, %v782
        %v1144 = vmul.f32 %v1083, %v783
        %v1145 = vmul.f32 %v1088, %v784
        %v1146 = vmul.f32 %v1088, %v785
        %v1147 = vmul.f32 %v1088, %v786
        %v1148 = vmul.f32 %v1088, %v787
        %v1149 = vmul.f32 %v1088, %v788
        %v1150 = vmul.f32 %v1093, %v789
        %v1151 = vmul.f32 %v1093, %v790
        %v1152 = vmul.f32 %v1093, %v791
        %v1153 = vmul.f32 %v1093, %v792
        %v1154 = vmul.f32 %v1093, %v793
        %v1155 = vmul.f32 %v1098, %v794
        %v1156 = vmul.f32 %v1098, %v795
        %v1157 = vmul.f32 %v1098, %v796
        %v1158 = vmul.f32 %v1098, %v797
        %v1159 = vmul.f32 %v1098, %v798
        %v1160 = vmul.f32 %v1103, %v799
        %v1161 = vmul.f32 %v1103, %v800
        %v1162 = vmul.f32 %v1103, %v801
        %v1163 = vmul.f32 %v1103, %v802
        %v1164 = vmul.f32 %v1103, %v803
        %v1165 = vmul.f32 %v1108, %v804
        %v1166 = vmul.f32 %v1108, %v805
        %v1167 = vmul.f32 %v1108, %v806
        %v1168 = vmul.f32 %v1108, %v807
        %v1169 = vmul.f32 %v1108, %v808
        %v1170 = vmul.f32 %v1113, %v809
        %v1171 = vmul.f32 %v1113, %v810
        %v1172 = vmul.f32 %v1113, %v811
        %v1173 = vmul.f32 %v1113, %v812
        %v1174 = vmul.f32 %v1113, %v813
        %v1175 = vmul.f32 %v1118, %v814
        %v1176 = vmul.f32 %v1118, %v815
        %v1177 = vmul.f32 %v1118, %v816
        %v1178 = vmul.f32 %v1118, %v817
        %v1179 = vmul.f32 %v1118, %v818
        %v1180 = vmul.f32 %v1123, %v819
        %v1181 = vmul.f32 %v1123, %v820
        %v1182 = vmul.f32 %v1123, %v821
        %v1183 = vmul.f32 %v1123, %v822
        %v1184 = vmul.f32 %v1123, %v823
        %v1185 = vmul.f32 %v1128, %v824
        %v1186 = vmul.f32 %v1128, %v825
        %v1187 = vmul.f32 %v1128, %v826
        %v1188 = vmul.f32 %v1128, %v827
        %v1189 = vmul.f32 %v1128, %v828
        %v1190 = vmul.f32 %v1133, %v829
        %v1191 = vmul.f32 %v1133, %v830
        %v1192 = vmul.f32 %v1133, %v831
        %v1193 = vmul.f32 %v1133, %v832
        %v1194 = vmul.f32 %v1133, %v833
        %1195 = vset.pattern.permute.xlu0 1
        %1196 = vperm.xlu0 %1195, %v477
        %v1197 = vpop.permute.xlu0 %1196
        %1199 = vset.pattern.permute.xlu0 1
        %1200 = vperm.xlu0 %1199, %v478
        %v1201 = vpop.permute.xlu0 %1200
        %1203 = vset.pattern.permute.xlu0 1
        %1204 = vperm.xlu0 %1203, %v479
        %v1205 = vpop.permute.xlu0 %1204
        %1207 = vset.pattern.permute.xlu0 1
        %1208 = vperm.xlu0 %1207, %v480
        %v1209 = vpop.permute.xlu0 %1208
        %1211 = vset.pattern.permute.xlu0 1
        %1212 = vperm.xlu0 %1211, %v481
        %v1213 = vpop.permute.xlu0 %1212
        %1215 = vset.pattern.permute.xlu0 1
        %1216 = vperm.xlu0 %1215, %v482
        %v1217 = vpop.permute.xlu0 %1216
        %1219 = vset.pattern.permute.xlu0 1
        %1220 = vperm.xlu0 %1219, %v483
        %v1221 = vpop.permute.xlu0 %1220
        %1223 = vset.pattern.permute.xlu0 1
        %1224 = vperm.xlu0 %1223, %v484
        %v1225 = vpop.permute.xlu0 %1224
        %1227 = vset.pattern.permute.xlu0 1
        %1228 = vperm.xlu0 %1227, %v485
        %v1229 = vpop.permute.xlu0 %1228
        %1231 = vset.pattern.permute.xlu0 1
        %1232 = vperm.xlu0 %1231, %v486
        %v1233 = vpop.permute.xlu0 %1232
        %1235 = vset.pattern.permute.xlu0 1
        %1236 = vperm.xlu0 %1235, %v487
        %v1237 = vpop.permute.xlu0 %1236
        %1239 = vset.pattern.permute.xlu0 1
        %1240 = vperm.xlu0 %1239, %v488
        %v1241 = vpop.permute.xlu0 %1240
        %v1243 = vmul.f32 %v1197, %v415
        %v1244 = vmul.f32 %v1197, %v416
        %v1245 = vmul.f32 %v1197, %v417
        %v1246 = vmul.f32 %v1197, %v418
        %v1247 = vmul.f32 %v1197, %v419
        %v1248 = vmul.f32 %v1201, %v420
        %v1249 = vmul.f32 %v1201, %v421
        %v1250 = vmul.f32 %v1201, %v422
        %v1251 = vmul.f32 %v1201, %v423
        %v1252 = vmul.f32 %v1201, %v424
        %v1253 = vmul.f32 %v1205, %v425
        %v1254 = vmul.f32 %v1205, %v426
        %v1255 = vmul.f32 %v1205, %v427
        %v1256 = vmul.f32 %v1205, %v428
        %v1257 = vmul.f32 %v1205, %v429
        %v1258 = vmul.f32 %v1209, %v430
        %v1259 = vmul.f32 %v1209, %v431
        %v1260 = vmul.f32 %v1209, %v432
        %v1261 = vmul.f32 %v1209, %v433
        %v1262 = vmul.f32 %v1209, %v434
        %v1263 = vmul.f32 %v1213, %v435
        %v1264 = vmul.f32 %v1213, %v436
        %v1265 = vmul.f32 %v1213, %v437
        %v1266 = vmul.f32 %v1213, %v438
        %v1267 = vmul.f32 %v1213, %v439
        %v1268 = vmul.f32 %v1217, %v440
        %v1269 = vmul.f32 %v1217, %v441
        %v1270 = vmul.f32 %v1217, %v442
        %v1271 = vmul.f32 %v1217, %v443
        %v1272 = vmul.f32 %v1217, %v444
        %v1273 = vmul.f32 %v1221, %v445
        %v1274 = vmul.f32 %v1221, %v446
        %v1275 = vmul.f32 %v1221, %v447
        %v1276 = vmul.f32 %v1221, %v448
        %v1277 = vmul.f32 %v1221, %v449
        %v1278 = vmul.f32 %v1225, %v450
        %v1279 = vmul.f32 %v1225, %v451
        %v1280 = vmul.f32 %v1225, %v452
        %v1281 = vmul.f32 %v1225, %v453
        %v1282 = vmul.f32 %v1225, %v454
        %v1283 = vmul.f32 %v1229, %v455
        %v1284 = vmul.f32 %v1229, %v456
        %v1285 = vmul.f32 %v1229, %v457
        %v1286 = vmul.f32 %v1229, %v458
        %v1287 = vmul.f32 %v1229, %v459
        %v1288 = vmul.f32 %v1233, %v460
        %v1289 = vmul.f32 %v1233, %v461
        %v1290 = vmul.f32 %v1233, %v462
        %v1291 = vmul.f32 %v1233, %v463
        %v1292 = vmul.f32 %v1233, %v464
        %v1293 = vmul.f32 %v1237, %v465
        %v1294 = vmul.f32 %v1237, %v466
        %v1295 = vmul.f32 %v1237, %v467
        %v1296 = vmul.f32 %v1237, %v468
        %v1297 = vmul.f32 %v1237, %v469
        %v1298 = vmul.f32 %v1241, %v470
        %v1299 = vmul.f32 %v1241, %v471
        %v1300 = vmul.f32 %v1241, %v472
        %v1301 = vmul.f32 %v1241, %v473
        %v1302 = vmul.f32 %v1241, %v474
        %v1303 = vadd.f32 %v1135, %v1243
        %v1304 = vadd.f32 %v1136, %v1244
        %v1305 = vadd.f32 %v1137, %v1245
        %v1306 = vadd.f32 %v1138, %v1246
        %v1307 = vadd.f32 %v1139, %v1247
        %v1308 = vadd.f32 %v1140, %v1248
        %v1309 = vadd.f32 %v1141, %v1249
        %v1310 = vadd.f32 %v1142, %v1250
        %v1311 = vadd.f32 %v1143, %v1251
        %v1312 = vadd.f32 %v1144, %v1252
        %v1313 = vadd.f32 %v1145, %v1253
        %v1314 = vadd.f32 %v1146, %v1254
        %v1315 = vadd.f32 %v1147, %v1255
        %v1316 = vadd.f32 %v1148, %v1256
        %v1317 = vadd.f32 %v1149, %v1257
        %v1318 = vadd.f32 %v1150, %v1258
        %v1319 = vadd.f32 %v1151, %v1259
        %v1320 = vadd.f32 %v1152, %v1260
        %v1321 = vadd.f32 %v1153, %v1261
        %v1322 = vadd.f32 %v1154, %v1262
        %v1323 = vadd.f32 %v1155, %v1263
        %v1324 = vadd.f32 %v1156, %v1264
        %v1325 = vadd.f32 %v1157, %v1265
        %v1326 = vadd.f32 %v1158, %v1266
        %v1327 = vadd.f32 %v1159, %v1267
        %v1328 = vadd.f32 %v1160, %v1268
        %v1329 = vadd.f32 %v1161, %v1269
        %v1330 = vadd.f32 %v1162, %v1270
        %v1331 = vadd.f32 %v1163, %v1271
        %v1332 = vadd.f32 %v1164, %v1272
        %v1333 = vadd.f32 %v1165, %v1273
        %v1334 = vadd.f32 %v1166, %v1274
        %v1335 = vadd.f32 %v1167, %v1275
        %v1336 = vadd.f32 %v1168, %v1276
        %v1337 = vadd.f32 %v1169, %v1277
        %v1338 = vadd.f32 %v1170, %v1278
        %v1339 = vadd.f32 %v1171, %v1279
        %v1340 = vadd.f32 %v1172, %v1280
        %v1341 = vadd.f32 %v1173, %v1281
        %v1342 = vadd.f32 %v1174, %v1282
        %v1343 = vadd.f32 %v1175, %v1283
        %v1344 = vadd.f32 %v1176, %v1284
        %v1345 = vadd.f32 %v1177, %v1285
        %v1346 = vadd.f32 %v1178, %v1286
        %v1347 = vadd.f32 %v1179, %v1287
        %v1348 = vadd.f32 %v1180, %v1288
        %v1349 = vadd.f32 %v1181, %v1289
        %v1350 = vadd.f32 %v1182, %v1290
        %v1351 = vadd.f32 %v1183, %v1291
        %v1352 = vadd.f32 %v1184, %v1292
        %v1353 = vadd.f32 %v1185, %v1293
        %v1354 = vadd.f32 %v1186, %v1294
        %v1355 = vadd.f32 %v1187, %v1295
        %v1356 = vadd.f32 %v1188, %v1296
        %v1357 = vadd.f32 %v1189, %v1297
        %v1358 = vadd.f32 %v1190, %v1298
        %v1359 = vadd.f32 %v1191, %v1299
        %v1360 = vadd.f32 %v1192, %v1300
        %v1361 = vadd.f32 %v1193, %v1301
        %v1362 = vadd.f32 %v1194, %v1302
        %1363 = vset.pattern.permute.xlu0 2
        %1364 = vperm.xlu0 %1363, %v477
        %v1365 = vpop.permute.xlu0 %1364
        %1367 = vset.pattern.permute.xlu0 2
        %1368 = vperm.xlu0 %1367, %v478
        %v1369 = vpop.permute.xlu0 %1368
        %1371 = vset.pattern.permute.xlu0 2
        %1372 = vperm.xlu0 %1371, %v479
        %v1373 = vpop.permute.xlu0 %1372
        %1375 = vset.pattern.permute.xlu0 2
        %1376 = vperm.xlu0 %1375, %v480
        %v1377 = vpop.permute.xlu0 %1376
        %1379 = vset.pattern.permute.xlu0 2
        %1380 = vperm.xlu0 %1379, %v481
        %v1381 = vpop.permute.xlu0 %1380
        %1383 = vset.pattern.permute.xlu0 2
        %1384 = vperm.xlu0 %1383, %v482
        %v1385 = vpop.permute.xlu0 %1384
        %1387 = vset.pattern.permute.xlu0 2
        %1388 = vperm.xlu0 %1387, %v483
        %v1389 = vpop.permute.xlu0 %1388
        %1391 = vset.pattern.permute.xlu0 2
        %1392 = vperm.xlu0 %1391, %v484
        %v1393 = vpop.permute.xlu0 %1392
        %1395 = vset.pattern.permute.xlu0 2
        %1396 = vperm.xlu0 %1395, %v485
        %v1397 = vpop.permute.xlu0 %1396
        %1399 = vset.pattern.permute.xlu0 2
        %1400 = vperm.xlu0 %1399, %v486
        %v1401 = vpop.permute.xlu0 %1400
        %1403 = vset.pattern.permute.xlu0 2
        %1404 = vperm.xlu0 %1403, %v487
        %v1405 = vpop.permute.xlu0 %1404
        %1407 = vset.pattern.permute.xlu0 2
        %1408 = vperm.xlu0 %1407, %v488
        %v1409 = vpop.permute.xlu0 %1408
        %v1411 = vmul.f32 %v1365, %v1015
        %v1412 = vmul.f32 %v1365, %v1016
        %v1413 = vmul.f32 %v1365, %v1017
        %v1414 = vmul.f32 %v1365, %v1018
        %v1415 = vmul.f32 %v1365, %v1019
        %v1416 = vmul.f32 %v1369, %v1020
        %v1417 = vmul.f32 %v1369, %v1021
        %v1418 = vmul.f32 %v1369, %v1022
        %v1419 = vmul.f32 %v1369, %v1023
        %v1420 = vmul.f32 %v1369, %v1024
        %v1421 = vmul.f32 %v1373, %v1025
        %v1422 = vmul.f32 %v1373, %v1026
        %v1423 = vmul.f32 %v1373, %v1027
        %v1424 = vmul.f32 %v1373, %v1028
        %v1425 = vmul.f32 %v1373, %v1029
        %v1426 = vmul.f32 %v1377, %v1030
        %v1427 = vmul.f32 %v1377, %v1031
        %v1428 = vmul.f32 %v1377, %v1032
        %v1429 = vmul.f32 %v1377, %v1033
        %v1430 = vmul.f32 %v1377, %v1034
        %v1431 = vmul.f32 %v1381, %v1035
        %v1432 = vmul.f32 %v1381, %v1036
        %v1433 = vmul.f32 %v1381, %v1037
        %v1434 = vmul.f32 %v1381, %v1038
        %v1435 = vmul.f32 %v1381, %v1039
        %v1436 = vmul.f32 %v1385, %v1040
        %v1437 = vmul.f32 %v1385, %v1041
        %v1438 = vmul.f32 %v1385, %v1042
        %v1439 = vmul.f32 %v1385, %v1043
        %v1440 = vmul.f32 %v1385, %v1044
        %v1441 = vmul.f32 %v1389, %v1045
        %v1442 = vmul.f32 %v1389, %v1046
        %v1443 = vmul.f32 %v1389, %v1047
        %v1444 = vmul.f32 %v1389, %v1048
        %v1445 = vmul.f32 %v1389, %v1049
        %v1446 = vmul.f32 %v1393, %v1050
        %v1447 = vmul.f32 %v1393, %v1051
        %v1448 = vmul.f32 %v1393, %v1052
        %v1449 = vmul.f32 %v1393, %v1053
        %v1450 = vmul.f32 %v1393, %v1054
        %v1451 = vmul.f32 %v1397, %v1055
        %v1452 = vmul.f32 %v1397, %v1056
        %v1453 = vmul.f32 %v1397, %v1057
        %v1454 = vmul.f32 %v1397, %v1058
        %v1455 = vmul.f32 %v1397, %v1059
        %v1456 = vmul.f32 %v1401, %v1060
        %v1457 = vmul.f32 %v1401, %v1061
        %v1458 = vmul.f32 %v1401, %v1062
        %v1459 = vmul.f32 %v1401, %v1063
        %v1460 = vmul.f32 %v1401, %v1064
        %v1461 = vmul.f32 %v1405, %v1065
        %v1462 = vmul.f32 %v1405, %v1066
        %v1463 = vmul.f32 %v1405, %v1067
        %v1464 = vmul.f32 %v1405, %v1068
        %v1465 = vmul.f32 %v1405, %v1069
        %v1466 = vmul.f32 %v1409, %v1070
        %v1467 = vmul.f32 %v1409, %v1071
        %v1468 = vmul.f32 %v1409, %v1072
        %v1469 = vmul.f32 %v1409, %v1073
        %v1470 = vmul.f32 %v1409, %v1074
        %v1471 = vadd.f32 %v1303, %v1411
        %v1472 = vadd.f32 %v1304, %v1412
        %v1473 = vadd.f32 %v1305, %v1413
        %v1474 = vadd.f32 %v1306, %v1414
        %v1475 = vadd.f32 %v1307, %v1415
        %v1476 = vadd.f32 %v1308, %v1416
        %v1477 = vadd.f32 %v1309, %v1417
        %v1478 = vadd.f32 %v1310, %v1418
        %v1479 = vadd.f32 %v1311, %v1419
        %v1480 = vadd.f32 %v1312, %v1420
        %v1481 = vadd.f32 %v1313, %v1421
        %v1482 = vadd.f32 %v1314, %v1422
        %v1483 = vadd.f32 %v1315, %v1423
        %v1484 = vadd.f32 %v1316, %v1424
        %v1485 = vadd.f32 %v1317, %v1425
        %v1486 = vadd.f32 %v1318, %v1426
        %v1487 = vadd.f32 %v1319, %v1427
        %v1488 = vadd.f32 %v1320, %v1428
        %v1489 = vadd.f32 %v1321, %v1429
        %v1490 = vadd.f32 %v1322, %v1430
        %v1491 = vadd.f32 %v1323, %v1431
        %v1492 = vadd.f32 %v1324, %v1432
        %v1493 = vadd.f32 %v1325, %v1433
        %v1494 = vadd.f32 %v1326, %v1434
        %v1495 = vadd.f32 %v1327, %v1435
        %v1496 = vadd.f32 %v1328, %v1436
        %v1497 = vadd.f32 %v1329, %v1437
        %v1498 = vadd.f32 %v1330, %v1438
        %v1499 = vadd.f32 %v1331, %v1439
        %v1500 = vadd.f32 %v1332, %v1440
        %v1501 = vadd.f32 %v1333, %v1441
        %v1502 = vadd.f32 %v1334, %v1442
        %v1503 = vadd.f32 %v1335, %v1443
        %v1504 = vadd.f32 %v1336, %v1444
        %v1505 = vadd.f32 %v1337, %v1445
        %v1506 = vadd.f32 %v1338, %v1446
        %v1507 = vadd.f32 %v1339, %v1447
        %v1508 = vadd.f32 %v1340, %v1448
        %v1509 = vadd.f32 %v1341, %v1449
        %v1510 = vadd.f32 %v1342, %v1450
        %v1511 = vadd.f32 %v1343, %v1451
        %v1512 = vadd.f32 %v1344, %v1452
        %v1513 = vadd.f32 %v1345, %v1453
        %v1514 = vadd.f32 %v1346, %v1454
        %v1515 = vadd.f32 %v1347, %v1455
        %v1516 = vadd.f32 %v1348, %v1456
        %v1517 = vadd.f32 %v1349, %v1457
        %v1518 = vadd.f32 %v1350, %v1458
        %v1519 = vadd.f32 %v1351, %v1459
        %v1520 = vadd.f32 %v1352, %v1460
        %v1521 = vadd.f32 %v1353, %v1461
        %v1522 = vadd.f32 %v1354, %v1462
        %v1523 = vadd.f32 %v1355, %v1463
        %v1524 = vadd.f32 %v1356, %v1464
        %v1525 = vadd.f32 %v1357, %v1465
        %v1526 = vadd.f32 %v1358, %v1466
        %v1527 = vadd.f32 %v1359, %v1467
        %v1528 = vadd.f32 %v1360, %v1468
        %v1529 = vadd.f32 %v1361, %v1469
        %v1530 = vadd.f32 %v1362, %v1470
        %1532 = vset.pattern.permute.xlu0 0
        %1533 = vperm.xlu0 %1532, %v501
        %v1534 = vpop.permute.xlu0 %1533
        %1537 = vset.pattern.permute.xlu0 0
        %1538 = vperm.xlu0 %1537, %v502
        %v1539 = vpop.permute.xlu0 %1538
        %1542 = vset.pattern.permute.xlu0 0
        %1543 = vperm.xlu0 %1542, %v503
        %v1544 = vpop.permute.xlu0 %1543
        %1547 = vset.pattern.permute.xlu0 0
        %1548 = vperm.xlu0 %1547, %v504
        %v1549 = vpop.permute.xlu0 %1548
        %1552 = vset.pattern.permute.xlu0 0
        %1553 = vperm.xlu0 %1552, %v505
        %v1554 = vpop.permute.xlu0 %1553
        %1557 = vset.pattern.permute.xlu0 0
        %1558 = vperm.xlu0 %1557, %v506
        %v1559 = vpop.permute.xlu0 %1558
        %1562 = vset.pattern.permute.xlu0 0
        %1563 = vperm.xlu0 %1562, %v507
        %v1564 = vpop.permute.xlu0 %1563
        %1567 = vset.pattern.permute.xlu0 0
        %1568 = vperm.xlu0 %1567, %v508
        %v1569 = vpop.permute.xlu0 %1568
        %1572 = vset.pattern.permute.xlu0 0
        %1573 = vperm.xlu0 %1572, %v509
        %v1574 = vpop.permute.xlu0 %1573
        %1577 = vset.pattern.permute.xlu0 0
        %1578 = vperm.xlu0 %1577, %v510
        %v1579 = vpop.permute.xlu0 %1578
        %1582 = vset.pattern.permute.xlu0 0
        %1583 = vperm.xlu0 %1582, %v511
        %v1584 = vpop.permute.xlu0 %1583
        %1587 = vset.pattern.permute.xlu0 0
        %1588 = vperm.xlu0 %1587, %v512
        %v1589 = vpop.permute.xlu0 %1588
        %v1591 = vmul.f32 %v1471, %v1534
        %v1592 = vmul.f32 %v1472, %v1534
        %v1593 = vmul.f32 %v1473, %v1534
        %v1594 = vmul.f32 %v1474, %v1534
        %v1595 = vmul.f32 %v1475, %v1534
        %v1596 = vmul.f32 %v1476, %v1539
        %v1597 = vmul.f32 %v1477, %v1539
        %v1598 = vmul.f32 %v1478, %v1539
        %v1599 = vmul.f32 %v1479, %v1539
        %v1600 = vmul.f32 %v1480, %v1539
        %v1601 = vmul.f32 %v1481, %v1544
        %v1602 = vmul.f32 %v1482, %v1544
        %v1603 = vmul.f32 %v1483, %v1544
        %v1604 = vmul.f32 %v1484, %v1544
        %v1605 = vmul.f32 %v1485, %v1544
        %v1606 = vmul.f32 %v1486, %v1549
        %v1607 = vmul.f32 %v1487, %v1549
        %v1608 = vmul.f32 %v1488, %v1549
        %v1609 = vmul.f32 %v1489, %v1549
        %v1610 = vmul.f32 %v1490, %v1549
        %v1611 = vmul.f32 %v1491, %v1554
        %v1612 = vmul.f32 %v1492, %v1554
        %v1613 = vmul.f32 %v1493, %v1554
        %v1614 = vmul.f32 %v1494, %v1554
        %v1615 = vmul.f32 %v1495, %v1554
        %v1616 = vmul.f32 %v1496, %v1559
        %v1617 = vmul.f32 %v1497, %v1559
        %v1618 = vmul.f32 %v1498, %v1559
        %v1619 = vmul.f32 %v1499, %v1559
        %v1620 = vmul.f32 %v1500, %v1559
        %v1621 = vmul.f32 %v1501, %v1564
        %v1622 = vmul.f32 %v1502, %v1564
        %v1623 = vmul.f32 %v1503, %v1564
        %v1624 = vmul.f32 %v1504, %v1564
        %v1625 = vmul.f32 %v1505, %v1564
        %v1626 = vmul.f32 %v1506, %v1569
        %v1627 = vmul.f32 %v1507, %v1569
        %v1628 = vmul.f32 %v1508, %v1569
        %v1629 = vmul.f32 %v1509, %v1569
        %v1630 = vmul.f32 %v1510, %v1569
        %v1631 = vmul.f32 %v1511, %v1574
        %v1632 = vmul.f32 %v1512, %v1574
        %v1633 = vmul.f32 %v1513, %v1574
        %v1634 = vmul.f32 %v1514, %v1574
        %v1635 = vmul.f32 %v1515, %v1574
        %v1636 = vmul.f32 %v1516, %v1579
        %v1637 = vmul.f32 %v1517, %v1579
        %v1638 = vmul.f32 %v1518, %v1579
        %v1639 = vmul.f32 %v1519, %v1579
        %v1640 = vmul.f32 %v1520, %v1579
        %v1641 = vmul.f32 %v1521, %v1584
        %v1642 = vmul.f32 %v1522, %v1584
        %v1643 = vmul.f32 %v1523, %v1584
        %v1644 = vmul.f32 %v1524, %v1584
        %v1645 = vmul.f32 %v1525, %v1584
        %v1646 = vmul.f32 %v1526, %v1589
        %v1647 = vmul.f32 %v1527, %v1589
        %v1648 = vmul.f32 %v1528, %v1589
        %v1649 = vmul.f32 %v1529, %v1589
        %v1650 = vmul.f32 %v1530, %v1589
        %1652 = vset.pattern.permute.xlu0 0
        %1653 = vperm.xlu0 %1652, %v513
        %v1654 = vpop.permute.xlu0 %1653
        %1657 = vset.pattern.permute.xlu0 0
        %1658 = vperm.xlu0 %1657, %v514
        %v1659 = vpop.permute.xlu0 %1658
        %1662 = vset.pattern.permute.xlu0 0
        %1663 = vperm.xlu0 %1662, %v515
        %v1664 = vpop.permute.xlu0 %1663
        %1667 = vset.pattern.permute.xlu0 0
        %1668 = vperm.xlu0 %1667, %v516
        %v1669 = vpop.permute.xlu0 %1668
        %1672 = vset.pattern.permute.xlu0 0
        %1673 = vperm.xlu0 %1672, %v517
        %v1674 = vpop.permute.xlu0 %1673
        %1677 = vset.pattern.permute.xlu0 0
        %1678 = vperm.xlu0 %1677, %v518
        %v1679 = vpop.permute.xlu0 %1678
        %1682 = vset.pattern.permute.xlu0 0
        %1683 = vperm.xlu0 %1682, %v519
        %v1684 = vpop.permute.xlu0 %1683
        %1687 = vset.pattern.permute.xlu0 0
        %1688 = vperm.xlu0 %1687, %v520
        %v1689 = vpop.permute.xlu0 %1688
        %1692 = vset.pattern.permute.xlu0 0
        %1693 = vperm.xlu0 %1692, %v521
        %v1694 = vpop.permute.xlu0 %1693
        %1697 = vset.pattern.permute.xlu0 0
        %1698 = vperm.xlu0 %1697, %v522
        %v1699 = vpop.permute.xlu0 %1698
        %1702 = vset.pattern.permute.xlu0 0
        %1703 = vperm.xlu0 %1702, %v523
        %v1704 = vpop.permute.xlu0 %1703
        %1707 = vset.pattern.permute.xlu0 0
        %1708 = vperm.xlu0 %1707, %v524
        %v1709 = vpop.permute.xlu0 %1708
        %v1711 = vadd.f32 %v1591, %v1654
        %v1712 = vadd.f32 %v1592, %v1654
        %v1713 = vadd.f32 %v1593, %v1654
        %v1714 = vadd.f32 %v1594, %v1654
        %v1715 = vadd.f32 %v1595, %v1654
        %v1716 = vadd.f32 %v1596, %v1659
        %v1717 = vadd.f32 %v1597, %v1659
        %v1718 = vadd.f32 %v1598, %v1659
        %v1719 = vadd.f32 %v1599, %v1659
        %v1720 = vadd.f32 %v1600, %v1659
        %v1721 = vadd.f32 %v1601, %v1664
        %v1722 = vadd.f32 %v1602, %v1664
        %v1723 = vadd.f32 %v1603, %v1664
        %v1724 = vadd.f32 %v1604, %v1664
        %v1725 = vadd.f32 %v1605, %v1664
        %v1726 = vadd.f32 %v1606, %v1669
        %v1727 = vadd.f32 %v1607, %v1669
        %v1728 = vadd.f32 %v1608, %v1669
        %v1729 = vadd.f32 %v1609, %v1669
        %v1730 = vadd.f32 %v1610, %v1669
        %v1731 = vadd.f32 %v1611, %v1674
        %v1732 = vadd.f32 %v1612, %v1674
        %v1733 = vadd.f32 %v1613, %v1674
        %v1734 = vadd.f32 %v1614, %v1674
        %v1735 = vadd.f32 %v1615, %v1674
        %v1736 = vadd.f32 %v1616, %v1679
        %v1737 = vadd.f32 %v1617, %v1679
        %v1738 = vadd.f32 %v1618, %v1679
        %v1739 = vadd.f32 %v1619, %v1679
        %v1740 = vadd.f32 %v1620, %v1679
        %v1741 = vadd.f32 %v1621, %v1684
        %v1742 = vadd.f32 %v1622, %v1684
        %v1743 = vadd.f32 %v1623, %v1684
        %v1744 = vadd.f32 %v1624, %v1684
        %v1745 = vadd.f32 %v1625, %v1684
        %v1746 = vadd.f32 %v1626, %v1689
        %v1747 = vadd.f32 %v1627, %v1689
        %v1748 = vadd.f32 %v1628, %v1689
        %v1749 = vadd.f32 %v1629, %v1689
        %v1750 = vadd.f32 %v1630, %v1689
        %v1751 = vadd.f32 %v1631, %v1694
        %v1752 = vadd.f32 %v1632, %v1694
        %v1753 = vadd.f32 %v1633, %v1694
        %v1754 = vadd.f32 %v1634, %v1694
        %v1755 = vadd.f32 %v1635, %v1694
        %v1756 = vadd.f32 %v1636, %v1699
        %v1757 = vadd.f32 %v1637, %v1699
        %v1758 = vadd.f32 %v1638, %v1699
        %v1759 = vadd.f32 %v1639, %v1699
        %v1760 = vadd.f32 %v1640, %v1699
        %v1761 = vadd.f32 %v1641, %v1704
        %v1762 = vadd.f32 %v1642, %v1704
        %v1763 = vadd.f32 %v1643, %v1704
        %v1764 = vadd.f32 %v1644, %v1704
        %v1765 = vadd.f32 %v1645, %v1704
        %v1766 = vadd.f32 %v1646, %v1709
        %v1767 = vadd.f32 %v1647, %v1709
        %v1768 = vadd.f32 %v1648, %v1709
        %v1769 = vadd.f32 %v1649, %v1709
        %v1770 = vadd.f32 %v1650, %v1709
        %v1771 = vmul.f32 %v1711, 0.5
        %v1772 = vmul.f32 %v1712, 0.5
        %v1773 = vmul.f32 %v1713, 0.5
        %v1774 = vmul.f32 %v1714, 0.5
        %v1775 = vmul.f32 %v1715, 0.5
        %v1776 = vmul.f32 %v1716, 0.5
        %v1777 = vmul.f32 %v1717, 0.5
        %v1778 = vmul.f32 %v1718, 0.5
        %v1779 = vmul.f32 %v1719, 0.5
        %v1780 = vmul.f32 %v1720, 0.5
        %v1781 = vmul.f32 %v1721, 0.5
        %v1782 = vmul.f32 %v1722, 0.5
        %v1783 = vmul.f32 %v1723, 0.5
        %v1784 = vmul.f32 %v1724, 0.5
        %v1785 = vmul.f32 %v1725, 0.5
        %v1786 = vmul.f32 %v1726, 0.5
        %v1787 = vmul.f32 %v1727, 0.5
        %v1788 = vmul.f32 %v1728, 0.5
        %v1789 = vmul.f32 %v1729, 0.5
        %v1790 = vmul.f32 %v1730, 0.5
        %v1791 = vmul.f32 %v1731, 0.5
        %v1792 = vmul.f32 %v1732, 0.5
        %v1793 = vmul.f32 %v1733, 0.5
        %v1794 = vmul.f32 %v1734, 0.5
        %v1795 = vmul.f32 %v1735, 0.5
        %v1796 = vmul.f32 %v1736, 0.5
        %v1797 = vmul.f32 %v1737, 0.5
        %v1798 = vmul.f32 %v1738, 0.5
        %v1799 = vmul.f32 %v1739, 0.5
        %v1800 = vmul.f32 %v1740, 0.5
        %v1801 = vmul.f32 %v1741, 0.5
        %v1802 = vmul.f32 %v1742, 0.5
        %v1803 = vmul.f32 %v1743, 0.5
        %v1804 = vmul.f32 %v1744, 0.5
        %v1805 = vmul.f32 %v1745, 0.5
        %v1806 = vmul.f32 %v1746, 0.5
        %v1807 = vmul.f32 %v1747, 0.5
        %v1808 = vmul.f32 %v1748, 0.5
        %v1809 = vmul.f32 %v1749, 0.5
        %v1810 = vmul.f32 %v1750, 0.5
        %v1811 = vmul.f32 %v1751, 0.5
        %v1812 = vmul.f32 %v1752, 0.5
        %v1813 = vmul.f32 %v1753, 0.5
        %v1814 = vmul.f32 %v1754, 0.5
        %v1815 = vmul.f32 %v1755, 0.5
        %v1816 = vmul.f32 %v1756, 0.5
        %v1817 = vmul.f32 %v1757, 0.5
        %v1818 = vmul.f32 %v1758, 0.5
        %v1819 = vmul.f32 %v1759, 0.5
        %v1820 = vmul.f32 %v1760, 0.5
        %v1821 = vmul.f32 %v1761, 0.5
        %v1822 = vmul.f32 %v1762, 0.5
        %v1823 = vmul.f32 %v1763, 0.5
        %v1824 = vmul.f32 %v1764, 0.5
        %v1825 = vmul.f32 %v1765, 0.5
        %v1826 = vmul.f32 %v1766, 0.5
        %v1827 = vmul.f32 %v1767, 0.5
        %v1828 = vmul.f32 %v1768, 0.5
        %v1829 = vmul.f32 %v1769, 0.5
        %v1830 = vmul.f32 %v1770, 0.5
        %v1831 = vtanh.pop %v1771
        %v1832 = vtanh.pop %v1772
        %v1833 = vtanh.pop %v1773
        %v1834 = vtanh.pop %v1774
        %v1835 = vtanh.pop %v1775
        %v1836 = vtanh.pop %v1776
        %v1837 = vtanh.pop %v1777
        %v1838 = vtanh.pop %v1778
        %v1839 = vtanh.pop %v1779
        %v1840 = vtanh.pop %v1780
        %v1841 = vtanh.pop %v1781
        %v1842 = vtanh.pop %v1782
        %v1843 = vtanh.pop %v1783
        %v1844 = vtanh.pop %v1784
        %v1845 = vtanh.pop %v1785
        %v1846 = vtanh.pop %v1786
        %v1847 = vtanh.pop %v1787
        %v1848 = vtanh.pop %v1788
        %v1849 = vtanh.pop %v1789
        %v1850 = vtanh.pop %v1790
        %v1851 = vtanh.pop %v1791
        %v1852 = vtanh.pop %v1792
        %v1853 = vtanh.pop %v1793
        %v1854 = vtanh.pop %v1794
        %v1855 = vtanh.pop %v1795
        %v1856 = vtanh.pop %v1796
        %v1857 = vtanh.pop %v1797
        %v1858 = vtanh.pop %v1798
        %v1859 = vtanh.pop %v1799
        %v1860 = vtanh.pop %v1800
        %v1861 = vtanh.pop %v1801
        %v1862 = vtanh.pop %v1802
        %v1863 = vtanh.pop %v1803
        %v1864 = vtanh.pop %v1804
        %v1865 = vtanh.pop %v1805
        %v1866 = vtanh.pop %v1806
        %v1867 = vtanh.pop %v1807
        %v1868 = vtanh.pop %v1808
        %v1869 = vtanh.pop %v1809
        %v1870 = vtanh.pop %v1810
        %v1871 = vtanh.pop %v1811
        %v1872 = vtanh.pop %v1812
        %v1873 = vtanh.pop %v1813
        %v1874 = vtanh.pop %v1814
        %v1875 = vtanh.pop %v1815
        %v1876 = vtanh.pop %v1816
        %v1877 = vtanh.pop %v1817
        %v1878 = vtanh.pop %v1818
        %v1879 = vtanh.pop %v1819
        %v1880 = vtanh.pop %v1820
        %v1881 = vtanh.pop %v1821
        %v1882 = vtanh.pop %v1822
        %v1883 = vtanh.pop %v1823
        %v1884 = vtanh.pop %v1824
        %v1885 = vtanh.pop %v1825
        %v1886 = vtanh.pop %v1826
        %v1887 = vtanh.pop %v1827
        %v1888 = vtanh.pop %v1828
        %v1889 = vtanh.pop %v1829
        %v1890 = vtanh.pop %v1830
        %v1891 = vmul.f32 %v1831, 0.5
        %v1892 = vmul.f32 %v1832, 0.5
        %v1893 = vmul.f32 %v1833, 0.5
        %v1894 = vmul.f32 %v1834, 0.5
        %v1895 = vmul.f32 %v1835, 0.5
        %v1896 = vmul.f32 %v1836, 0.5
        %v1897 = vmul.f32 %v1837, 0.5
        %v1898 = vmul.f32 %v1838, 0.5
        %v1899 = vmul.f32 %v1839, 0.5
        %v1900 = vmul.f32 %v1840, 0.5
        %v1901 = vmul.f32 %v1841, 0.5
        %v1902 = vmul.f32 %v1842, 0.5
        %v1903 = vmul.f32 %v1843, 0.5
        %v1904 = vmul.f32 %v1844, 0.5
        %v1905 = vmul.f32 %v1845, 0.5
        %v1906 = vmul.f32 %v1846, 0.5
        %v1907 = vmul.f32 %v1847, 0.5
        %v1908 = vmul.f32 %v1848, 0.5
        %v1909 = vmul.f32 %v1849, 0.5
        %v1910 = vmul.f32 %v1850, 0.5
        %v1911 = vmul.f32 %v1851, 0.5
        %v1912 = vmul.f32 %v1852, 0.5
        %v1913 = vmul.f32 %v1853, 0.5
        %v1914 = vmul.f32 %v1854, 0.5
        %v1915 = vmul.f32 %v1855, 0.5
        %v1916 = vmul.f32 %v1856, 0.5
        %v1917 = vmul.f32 %v1857, 0.5
        %v1918 = vmul.f32 %v1858, 0.5
        %v1919 = vmul.f32 %v1859, 0.5
        %v1920 = vmul.f32 %v1860, 0.5
        %v1921 = vmul.f32 %v1861, 0.5
        %v1922 = vmul.f32 %v1862, 0.5
        %v1923 = vmul.f32 %v1863, 0.5
        %v1924 = vmul.f32 %v1864, 0.5
        %v1925 = vmul.f32 %v1865, 0.5
        %v1926 = vmul.f32 %v1866, 0.5
        %v1927 = vmul.f32 %v1867, 0.5
        %v1928 = vmul.f32 %v1868, 0.5
        %v1929 = vmul.f32 %v1869, 0.5
        %v1930 = vmul.f32 %v1870, 0.5
        %v1931 = vmul.f32 %v1871, 0.5
        %v1932 = vmul.f32 %v1872, 0.5
        %v1933 = vmul.f32 %v1873, 0.5
        %v1934 = vmul.f32 %v1874, 0.5
        %v1935 = vmul.f32 %v1875, 0.5
        %v1936 = vmul.f32 %v1876, 0.5
        %v1937 = vmul.f32 %v1877, 0.5
        %v1938 = vmul.f32 %v1878, 0.5
        %v1939 = vmul.f32 %v1879, 0.5
        %v1940 = vmul.f32 %v1880, 0.5
        %v1941 = vmul.f32 %v1881, 0.5
        %v1942 = vmul.f32 %v1882, 0.5
        %v1943 = vmul.f32 %v1883, 0.5
        %v1944 = vmul.f32 %v1884, 0.5
        %v1945 = vmul.f32 %v1885, 0.5
        %v1946 = vmul.f32 %v1886, 0.5
        %v1947 = vmul.f32 %v1887, 0.5
        %v1948 = vmul.f32 %v1888, 0.5
        %v1949 = vmul.f32 %v1889, 0.5
        %v1950 = vmul.f32 %v1890, 0.5
        %v1951 = vadd.f32 %v1891, 0.5
        %v1952 = vadd.f32 %v1892, 0.5
        %v1953 = vadd.f32 %v1893, 0.5
        %v1954 = vadd.f32 %v1894, 0.5
        %v1955 = vadd.f32 %v1895, 0.5
        %v1956 = vadd.f32 %v1896, 0.5
        %v1957 = vadd.f32 %v1897, 0.5
        %v1958 = vadd.f32 %v1898, 0.5
        %v1959 = vadd.f32 %v1899, 0.5
        %v1960 = vadd.f32 %v1900, 0.5
        %v1961 = vadd.f32 %v1901, 0.5
        %v1962 = vadd.f32 %v1902, 0.5
        %v1963 = vadd.f32 %v1903, 0.5
        %v1964 = vadd.f32 %v1904, 0.5
        %v1965 = vadd.f32 %v1905, 0.5
        %v1966 = vadd.f32 %v1906, 0.5
        %v1967 = vadd.f32 %v1907, 0.5
        %v1968 = vadd.f32 %v1908, 0.5
        %v1969 = vadd.f32 %v1909, 0.5
        %v1970 = vadd.f32 %v1910, 0.5
        %v1971 = vadd.f32 %v1911, 0.5
        %v1972 = vadd.f32 %v1912, 0.5
        %v1973 = vadd.f32 %v1913, 0.5
        %v1974 = vadd.f32 %v1914, 0.5
        %v1975 = vadd.f32 %v1915, 0.5
        %v1976 = vadd.f32 %v1916, 0.5
        %v1977 = vadd.f32 %v1917, 0.5
        %v1978 = vadd.f32 %v1918, 0.5
        %v1979 = vadd.f32 %v1919, 0.5
        %v1980 = vadd.f32 %v1920, 0.5
        %v1981 = vadd.f32 %v1921, 0.5
        %v1982 = vadd.f32 %v1922, 0.5
        %v1983 = vadd.f32 %v1923, 0.5
        %v1984 = vadd.f32 %v1924, 0.5
        %v1985 = vadd.f32 %v1925, 0.5
        %v1986 = vadd.f32 %v1926, 0.5
        %v1987 = vadd.f32 %v1927, 0.5
        %v1988 = vadd.f32 %v1928, 0.5
        %v1989 = vadd.f32 %v1929, 0.5
        %v1990 = vadd.f32 %v1930, 0.5
        %v1991 = vadd.f32 %v1931, 0.5
        %v1992 = vadd.f32 %v1932, 0.5
        %v1993 = vadd.f32 %v1933, 0.5
        %v1994 = vadd.f32 %v1934, 0.5
        %v1995 = vadd.f32 %v1935, 0.5
        %v1996 = vadd.f32 %v1936, 0.5
        %v1997 = vadd.f32 %v1937, 0.5
        %v1998 = vadd.f32 %v1938, 0.5
        %v1999 = vadd.f32 %v1939, 0.5
        %v2000 = vadd.f32 %v1940, 0.5
        %v2001 = vadd.f32 %v1941, 0.5
        %v2002 = vadd.f32 %v1942, 0.5
        %v2003 = vadd.f32 %v1943, 0.5
        %v2004 = vadd.f32 %v1944, 0.5
        %v2005 = vadd.f32 %v1945, 0.5
        %v2006 = vadd.f32 %v1946, 0.5
        %v2007 = vadd.f32 %v1947, 0.5
        %v2008 = vadd.f32 %v1948, 0.5
        %v2009 = vadd.f32 %v1949, 0.5
        %v2010 = vadd.f32 %v1950, 0.5
        %v2011 = vmul.f32 %v1711, %v1951
        %v2012 = vmul.f32 %v1712, %v1952
        %v2013 = vmul.f32 %v1713, %v1953
        %v2014 = vmul.f32 %v1714, %v1954
        %v2015 = vmul.f32 %v1715, %v1955
        %v2016 = vmul.f32 %v1716, %v1956
        %v2017 = vmul.f32 %v1717, %v1957
        %v2018 = vmul.f32 %v1718, %v1958
        %v2019 = vmul.f32 %v1719, %v1959
        %v2020 = vmul.f32 %v1720, %v1960
        %v2021 = vmul.f32 %v1721, %v1961
        %v2022 = vmul.f32 %v1722, %v1962
        %v2023 = vmul.f32 %v1723, %v1963
        %v2024 = vmul.f32 %v1724, %v1964
        %v2025 = vmul.f32 %v1725, %v1965
        %v2026 = vmul.f32 %v1726, %v1966
        %v2027 = vmul.f32 %v1727, %v1967
        %v2028 = vmul.f32 %v1728, %v1968
        %v2029 = vmul.f32 %v1729, %v1969
        %v2030 = vmul.f32 %v1730, %v1970
        %v2031 = vmul.f32 %v1731, %v1971
        %v2032 = vmul.f32 %v1732, %v1972
        %v2033 = vmul.f32 %v1733, %v1973
        %v2034 = vmul.f32 %v1734, %v1974
        %v2035 = vmul.f32 %v1735, %v1975
        %v2036 = vmul.f32 %v1736, %v1976
        %v2037 = vmul.f32 %v1737, %v1977
        %v2038 = vmul.f32 %v1738, %v1978
        %v2039 = vmul.f32 %v1739, %v1979
        %v2040 = vmul.f32 %v1740, %v1980
        %v2041 = vmul.f32 %v1741, %v1981
        %v2042 = vmul.f32 %v1742, %v1982
        %v2043 = vmul.f32 %v1743, %v1983
        %v2044 = vmul.f32 %v1744, %v1984
        %v2045 = vmul.f32 %v1745, %v1985
        %v2046 = vmul.f32 %v1746, %v1986
        %v2047 = vmul.f32 %v1747, %v1987
        %v2048 = vmul.f32 %v1748, %v1988
        %v2049 = vmul.f32 %v1749, %v1989
        %v2050 = vmul.f32 %v1750, %v1990
        %v2051 = vmul.f32 %v1751, %v1991
        %v2052 = vmul.f32 %v1752, %v1992
        %v2053 = vmul.f32 %v1753, %v1993
        %v2054 = vmul.f32 %v1754, %v1994
        %v2055 = vmul.f32 %v1755, %v1995
        %v2056 = vmul.f32 %v1756, %v1996
        %v2057 = vmul.f32 %v1757, %v1997
        %v2058 = vmul.f32 %v1758, %v1998
        %v2059 = vmul.f32 %v1759, %v1999
        %v2060 = vmul.f32 %v1760, %v2000
        %v2061 = vmul.f32 %v1761, %v2001
        %v2062 = vmul.f32 %v1762, %v2002
        %v2063 = vmul.f32 %v1763, %v2003
        %v2064 = vmul.f32 %v1764, %v2004
        %v2065 = vmul.f32 %v1765, %v2005
        %v2066 = vmul.f32 %v1766, %v2006
        %v2067 = vmul.f32 %v1767, %v2007
        %v2068 = vmul.f32 %v1768, %v2008
        %v2069 = vmul.f32 %v1769, %v2009
        %v2070 = vmul.f32 %v1770, %v2010
        %2071 = vrot.lane.b32.xlu0 %v2011, 127
        %v2072 = vpop.permute.xlu0 %2071
        %2073 = vrot.lane.b32.xlu0 %v2016, 127
        %v2074 = vpop.permute.xlu0 %2073
        %2075 = vrot.lane.b32.xlu0 %v2021, 127
        %v2076 = vpop.permute.xlu0 %2075
        %2077 = vrot.lane.b32.xlu0 %v2026, 127
        %v2078 = vpop.permute.xlu0 %2077
        %2079 = vrot.lane.b32.xlu0 %v2031, 127
        %v2080 = vpop.permute.xlu0 %2079
        %2081 = vrot.lane.b32.xlu0 %v2036, 127
        %v2082 = vpop.permute.xlu0 %2081
        %2083 = vrot.lane.b32.xlu0 %v2041, 127
        %v2084 = vpop.permute.xlu0 %2083
        %2085 = vrot.lane.b32.xlu0 %v2046, 127
        %v2086 = vpop.permute.xlu0 %2085
        %2087 = vrot.lane.b32.xlu0 %v2051, 127
        %v2088 = vpop.permute.xlu0 %2087
        %2089 = vrot.lane.b32.xlu0 %v2056, 127
        %v2090 = vpop.permute.xlu0 %2089
        %2091 = vrot.lane.b32.xlu0 %v2061, 127
        %v2092 = vpop.permute.xlu0 %2091
        %2093 = vrot.lane.b32.xlu0 %v2066, 127
        %v2094 = vpop.permute.xlu0 %2093
        %2095 = vrot.lane.b32.xlu0 %v2012, 127
        %v2096 = vpop.permute.xlu0 %2095
        %2097 = vrot.lane.b32.xlu0 %v2017, 127
        %v2098 = vpop.permute.xlu0 %2097
        %2099 = vrot.lane.b32.xlu0 %v2022, 127
        %v2100 = vpop.permute.xlu0 %2099
        %2101 = vrot.lane.b32.xlu0 %v2027, 127
        %v2102 = vpop.permute.xlu0 %2101
        %2103 = vrot.lane.b32.xlu0 %v2032, 127
        %v2104 = vpop.permute.xlu0 %2103
        %2105 = vrot.lane.b32.xlu0 %v2037, 127
        %v2106 = vpop.permute.xlu0 %2105
        %2107 = vrot.lane.b32.xlu0 %v2042, 127
        %v2108 = vpop.permute.xlu0 %2107
        %2109 = vrot.lane.b32.xlu0 %v2047, 127
        %v2110 = vpop.permute.xlu0 %2109
        %2111 = vrot.lane.b32.xlu0 %v2052, 127
        %v2112 = vpop.permute.xlu0 %2111
        %2113 = vrot.lane.b32.xlu0 %v2057, 127
        %v2114 = vpop.permute.xlu0 %2113
        %2115 = vrot.lane.b32.xlu0 %v2062, 127
        %v2116 = vpop.permute.xlu0 %2115
        %2117 = vrot.lane.b32.xlu0 %v2067, 127
        %v2118 = vpop.permute.xlu0 %2117
        %2119 = vrot.lane.b32.xlu0 %v2013, 127
        %v2120 = vpop.permute.xlu0 %2119
        %2121 = vrot.lane.b32.xlu0 %v2018, 127
        %v2122 = vpop.permute.xlu0 %2121
        %2123 = vrot.lane.b32.xlu0 %v2023, 127
        %v2124 = vpop.permute.xlu0 %2123
        %2125 = vrot.lane.b32.xlu0 %v2028, 127
        %v2126 = vpop.permute.xlu0 %2125
        %2127 = vrot.lane.b32.xlu0 %v2033, 127
        %v2128 = vpop.permute.xlu0 %2127
        %2129 = vrot.lane.b32.xlu0 %v2038, 127
        %v2130 = vpop.permute.xlu0 %2129
        %2131 = vrot.lane.b32.xlu0 %v2043, 127
        %v2132 = vpop.permute.xlu0 %2131
        %2133 = vrot.lane.b32.xlu0 %v2048, 127
        %v2134 = vpop.permute.xlu0 %2133
        %2135 = vrot.lane.b32.xlu0 %v2053, 127
        %v2136 = vpop.permute.xlu0 %2135
        %2137 = vrot.lane.b32.xlu0 %v2058, 127
        %v2138 = vpop.permute.xlu0 %2137
        %2139 = vrot.lane.b32.xlu0 %v2063, 127
        %v2140 = vpop.permute.xlu0 %2139
        %2141 = vrot.lane.b32.xlu0 %v2068, 127
        %v2142 = vpop.permute.xlu0 %2141
        %2143 = vrot.lane.b32.xlu0 %v2014, 127
        %v2144 = vpop.permute.xlu0 %2143
        %2145 = vrot.lane.b32.xlu0 %v2019, 127
        %v2146 = vpop.permute.xlu0 %2145
        %2147 = vrot.lane.b32.xlu0 %v2024, 127
        %v2148 = vpop.permute.xlu0 %2147
        %2149 = vrot.lane.b32.xlu0 %v2029, 127
        %v2150 = vpop.permute.xlu0 %2149
        %2151 = vrot.lane.b32.xlu0 %v2034, 127
        %v2152 = vpop.permute.xlu0 %2151
        %2153 = vrot.lane.b32.xlu0 %v2039, 127
        %v2154 = vpop.permute.xlu0 %2153
        %2155 = vrot.lane.b32.xlu0 %v2044, 127
        %v2156 = vpop.permute.xlu0 %2155
        %2157 = vrot.lane.b32.xlu0 %v2049, 127
        %v2158 = vpop.permute.xlu0 %2157
        %2159 = vrot.lane.b32.xlu0 %v2054, 127
        %v2160 = vpop.permute.xlu0 %2159
        %2161 = vrot.lane.b32.xlu0 %v2059, 127
        %v2162 = vpop.permute.xlu0 %2161
        %2163 = vrot.lane.b32.xlu0 %v2064, 127
        %v2164 = vpop.permute.xlu0 %2163
        %2165 = vrot.lane.b32.xlu0 %v2069, 127
        %v2166 = vpop.permute.xlu0 %2165
        %2167 = vrot.lane.b32.xlu0 %v2015, 127
        %v2168 = vpop.permute.xlu0 %2167
        %2169 = vrot.lane.b32.xlu0 %v2020, 127
        %v2170 = vpop.permute.xlu0 %2169
        %2171 = vrot.lane.b32.xlu0 %v2025, 127
        %v2172 = vpop.permute.xlu0 %2171
        %2173 = vrot.lane.b32.xlu0 %v2030, 127
        %v2174 = vpop.permute.xlu0 %2173
        %2175 = vrot.lane.b32.xlu0 %v2035, 127
        %v2176 = vpop.permute.xlu0 %2175
        %2177 = vrot.lane.b32.xlu0 %v2040, 127
        %v2178 = vpop.permute.xlu0 %2177
        %2179 = vrot.lane.b32.xlu0 %v2045, 127
        %v2180 = vpop.permute.xlu0 %2179
        %2181 = vrot.lane.b32.xlu0 %v2050, 127
        %v2182 = vpop.permute.xlu0 %2181
        %2183 = vrot.lane.b32.xlu0 %v2055, 127
        %v2184 = vpop.permute.xlu0 %2183
        %2185 = vrot.lane.b32.xlu0 %v2060, 127
        %v2186 = vpop.permute.xlu0 %2185
        %2187 = vrot.lane.b32.xlu0 %v2065, 127
        %v2188 = vpop.permute.xlu0 %2187
        %2189 = vrot.lane.b32.xlu0 %v2070, 127
        %v2190 = vpop.permute.xlu0 %2189
        %v2191 = vsel %vm954, %v2144, %v2168
        %v2192 = vsel %vm954, %v2146, %v2170
        %v2193 = vsel %vm954, %v2148, %v2172
        %v2194 = vsel %vm954, %v2150, %v2174
        %v2195 = vsel %vm954, %v2152, %v2176
        %v2196 = vsel %vm954, %v2154, %v2178
        %v2197 = vsel %vm954, %v2156, %v2180
        %v2198 = vsel %vm954, %v2158, %v2182
        %v2199 = vsel %vm954, %v2160, %v2184
        %v2200 = vsel %vm954, %v2162, %v2186
        %v2201 = vsel %vm954, %v2164, %v2188
        %v2202 = vsel %vm954, %v2166, %v2190
        %v2203 = vsel %vm954, %v2120, %v2144
        %v2204 = vsel %vm954, %v2122, %v2146
        %v2205 = vsel %vm954, %v2124, %v2148
        %v2206 = vsel %vm954, %v2126, %v2150
        %v2207 = vsel %vm954, %v2128, %v2152
        %v2208 = vsel %vm954, %v2130, %v2154
        %v2209 = vsel %vm954, %v2132, %v2156
        %v2210 = vsel %vm954, %v2134, %v2158
        %v2211 = vsel %vm954, %v2136, %v2160
        %v2212 = vsel %vm954, %v2138, %v2162
        %v2213 = vsel %vm954, %v2140, %v2164
        %v2214 = vsel %vm954, %v2142, %v2166
        %v2215 = vsel %vm954, %v2096, %v2120
        %v2216 = vsel %vm954, %v2098, %v2122
        %v2217 = vsel %vm954, %v2100, %v2124
        %v2218 = vsel %vm954, %v2102, %v2126
        %v2219 = vsel %vm954, %v2104, %v2128
        %v2220 = vsel %vm954, %v2106, %v2130
        %v2221 = vsel %vm954, %v2108, %v2132
        %v2222 = vsel %vm954, %v2110, %v2134
        %v2223 = vsel %vm954, %v2112, %v2136
        %v2224 = vsel %vm954, %v2114, %v2138
        %v2225 = vsel %vm954, %v2116, %v2140
        %v2226 = vsel %vm954, %v2118, %v2142
        %v2227 = vsel %vm954, %v2072, %v2096
        %v2228 = vsel %vm954, %v2074, %v2098
        %v2229 = vsel %vm954, %v2076, %v2100
        %v2230 = vsel %vm954, %v2078, %v2102
        %v2231 = vsel %vm954, %v2080, %v2104
        %v2232 = vsel %vm954, %v2082, %v2106
        %v2233 = vsel %vm954, %v2084, %v2108
        %v2234 = vsel %vm954, %v2086, %v2110
        %v2235 = vsel %vm954, %v2088, %v2112
        %v2236 = vsel %vm954, %v2090, %v2114
        %v2237 = vsel %vm954, %v2092, %v2116
        %v2238 = vsel %vm954, %v2094, %v2118
        %v2239 = vsel %vm954, %v2168, %v2072
        %v2240 = vsel %vm954, %v2170, %v2074
        %v2241 = vsel %vm954, %v2172, %v2076
        %v2242 = vsel %vm954, %v2174, %v2078
        %v2243 = vsel %vm954, %v2176, %v2080
        %v2244 = vsel %vm954, %v2178, %v2082
        %v2245 = vsel %vm954, %v2180, %v2084
        %v2246 = vsel %vm954, %v2182, %v2086
        %v2247 = vsel %vm954, %v2184, %v2088
        %v2248 = vsel %vm954, %v2186, %v2090
        %v2249 = vsel %vm954, %v2188, %v2092
        %v2250 = vsel %vm954, %v2190, %v2094
        %v2251 = vadd.f32 %v2011, %v2227
        %v2252 = vadd.f32 %v2012, %v2215
        %v2253 = vadd.f32 %v2013, %v2203
        %v2254 = vadd.f32 %v2014, %v2191
        %v2255 = vadd.f32 %v2015, %v2239
        %v2256 = vadd.f32 %v2016, %v2228
        %v2257 = vadd.f32 %v2017, %v2216
        %v2258 = vadd.f32 %v2018, %v2204
        %v2259 = vadd.f32 %v2019, %v2192
        %v2260 = vadd.f32 %v2020, %v2240
        %v2261 = vadd.f32 %v2021, %v2229
        %v2262 = vadd.f32 %v2022, %v2217
        %v2263 = vadd.f32 %v2023, %v2205
        %v2264 = vadd.f32 %v2024, %v2193
        %v2265 = vadd.f32 %v2025, %v2241
        %v2266 = vadd.f32 %v2026, %v2230
        %v2267 = vadd.f32 %v2027, %v2218
        %v2268 = vadd.f32 %v2028, %v2206
        %v2269 = vadd.f32 %v2029, %v2194
        %v2270 = vadd.f32 %v2030, %v2242
        %v2271 = vadd.f32 %v2031, %v2231
        %v2272 = vadd.f32 %v2032, %v2219
        %v2273 = vadd.f32 %v2033, %v2207
        %v2274 = vadd.f32 %v2034, %v2195
        %v2275 = vadd.f32 %v2035, %v2243
        %v2276 = vadd.f32 %v2036, %v2232
        %v2277 = vadd.f32 %v2037, %v2220
        %v2278 = vadd.f32 %v2038, %v2208
        %v2279 = vadd.f32 %v2039, %v2196
        %v2280 = vadd.f32 %v2040, %v2244
        %v2281 = vadd.f32 %v2041, %v2233
        %v2282 = vadd.f32 %v2042, %v2221
        %v2283 = vadd.f32 %v2043, %v2209
        %v2284 = vadd.f32 %v2044, %v2197
        %v2285 = vadd.f32 %v2045, %v2245
        %v2286 = vadd.f32 %v2046, %v2234
        %v2287 = vadd.f32 %v2047, %v2222
        %v2288 = vadd.f32 %v2048, %v2210
        %v2289 = vadd.f32 %v2049, %v2198
        %v2290 = vadd.f32 %v2050, %v2246
        %v2291 = vadd.f32 %v2051, %v2235
        %v2292 = vadd.f32 %v2052, %v2223
        %v2293 = vadd.f32 %v2053, %v2211
        %v2294 = vadd.f32 %v2054, %v2199
        %v2295 = vadd.f32 %v2055, %v2247
        %v2296 = vadd.f32 %v2056, %v2236
        %v2297 = vadd.f32 %v2057, %v2224
        %v2298 = vadd.f32 %v2058, %v2212
        %v2299 = vadd.f32 %v2059, %v2200
        %v2300 = vadd.f32 %v2060, %v2248
        %v2301 = vadd.f32 %v2061, %v2237
        %v2302 = vadd.f32 %v2062, %v2225
        %v2303 = vadd.f32 %v2063, %v2213
        %v2304 = vadd.f32 %v2064, %v2201
        %v2305 = vadd.f32 %v2065, %v2249
        %v2306 = vadd.f32 %v2066, %v2238
        %v2307 = vadd.f32 %v2067, %v2226
        %v2308 = vadd.f32 %v2068, %v2214
        %v2309 = vadd.f32 %v2069, %v2202
        %v2310 = vadd.f32 %v2070, %v2250
        %v2311 = vmul.f32 %v2251, 0.5
        %v2312 = vmul.f32 %v2252, 0.5
        %v2313 = vmul.f32 %v2253, 0.5
        %v2314 = vmul.f32 %v2254, 0.5
        %v2315 = vmul.f32 %v2255, 0.5
        %v2316 = vmul.f32 %v2256, 0.5
        %v2317 = vmul.f32 %v2257, 0.5
        %v2318 = vmul.f32 %v2258, 0.5
        %v2319 = vmul.f32 %v2259, 0.5
        %v2320 = vmul.f32 %v2260, 0.5
        %v2321 = vmul.f32 %v2261, 0.5
        %v2322 = vmul.f32 %v2262, 0.5
        %v2323 = vmul.f32 %v2263, 0.5
        %v2324 = vmul.f32 %v2264, 0.5
        %v2325 = vmul.f32 %v2265, 0.5
        %v2326 = vmul.f32 %v2266, 0.5
        %v2327 = vmul.f32 %v2267, 0.5
        %v2328 = vmul.f32 %v2268, 0.5
        %v2329 = vmul.f32 %v2269, 0.5
        %v2330 = vmul.f32 %v2270, 0.5
        %v2331 = vmul.f32 %v2271, 0.5
        %v2332 = vmul.f32 %v2272, 0.5
        %v2333 = vmul.f32 %v2273, 0.5
        %v2334 = vmul.f32 %v2274, 0.5
        %v2335 = vmul.f32 %v2275, 0.5
        %v2336 = vmul.f32 %v2276, 0.5
        %v2337 = vmul.f32 %v2277, 0.5
        %v2338 = vmul.f32 %v2278, 0.5
        %v2339 = vmul.f32 %v2279, 0.5
        %v2340 = vmul.f32 %v2280, 0.5
        %v2341 = vmul.f32 %v2281, 0.5
        %v2342 = vmul.f32 %v2282, 0.5
        %v2343 = vmul.f32 %v2283, 0.5
        %v2344 = vmul.f32 %v2284, 0.5
        %v2345 = vmul.f32 %v2285, 0.5
        %v2346 = vmul.f32 %v2286, 0.5
        %v2347 = vmul.f32 %v2287, 0.5
        %v2348 = vmul.f32 %v2288, 0.5
        %v2349 = vmul.f32 %v2289, 0.5
        %v2350 = vmul.f32 %v2290, 0.5
        %v2351 = vmul.f32 %v2291, 0.5
        %v2352 = vmul.f32 %v2292, 0.5
        %v2353 = vmul.f32 %v2293, 0.5
        %v2354 = vmul.f32 %v2294, 0.5
        %v2355 = vmul.f32 %v2295, 0.5
        %v2356 = vmul.f32 %v2296, 0.5
        %v2357 = vmul.f32 %v2297, 0.5
        %v2358 = vmul.f32 %v2298, 0.5
        %v2359 = vmul.f32 %v2299, 0.5
        %v2360 = vmul.f32 %v2300, 0.5
        %v2361 = vmul.f32 %v2301, 0.5
        %v2362 = vmul.f32 %v2302, 0.5
        %v2363 = vmul.f32 %v2303, 0.5
        %v2364 = vmul.f32 %v2304, 0.5
        %v2365 = vmul.f32 %v2305, 0.5
        %v2366 = vmul.f32 %v2306, 0.5
        %v2367 = vmul.f32 %v2307, 0.5
        %v2368 = vmul.f32 %v2308, 0.5
        %v2369 = vmul.f32 %v2309, 0.5
        %v2370 = vmul.f32 %v2310, 0.5
        %2371 = vrot.lane.b32.xlu0 %v2311, 1
        %v2372 = vpop.permute.xlu0 %2371
        %2373 = vrot.lane.b32.xlu0 %v2316, 1
        %v2374 = vpop.permute.xlu0 %2373
        %2375 = vrot.lane.b32.xlu0 %v2321, 1
        %v2376 = vpop.permute.xlu0 %2375
        %2377 = vrot.lane.b32.xlu0 %v2326, 1
        %v2378 = vpop.permute.xlu0 %2377
        %2379 = vrot.lane.b32.xlu0 %v2331, 1
        %v2380 = vpop.permute.xlu0 %2379
        %2381 = vrot.lane.b32.xlu0 %v2336, 1
        %v2382 = vpop.permute.xlu0 %2381
        %2383 = vrot.lane.b32.xlu0 %v2341, 1
        %v2384 = vpop.permute.xlu0 %2383
        %2385 = vrot.lane.b32.xlu0 %v2346, 1
        %v2386 = vpop.permute.xlu0 %2385
        %2387 = vrot.lane.b32.xlu0 %v2351, 1
        %v2388 = vpop.permute.xlu0 %2387
        %2389 = vrot.lane.b32.xlu0 %v2356, 1
        %v2390 = vpop.permute.xlu0 %2389
        %2391 = vrot.lane.b32.xlu0 %v2361, 1
        %v2392 = vpop.permute.xlu0 %2391
        %2393 = vrot.lane.b32.xlu0 %v2366, 1
        %v2394 = vpop.permute.xlu0 %2393
        %2395 = vrot.lane.b32.xlu0 %v2312, 1
        %v2396 = vpop.permute.xlu0 %2395
        %2397 = vrot.lane.b32.xlu0 %v2317, 1
        %v2398 = vpop.permute.xlu0 %2397
        %2399 = vrot.lane.b32.xlu0 %v2322, 1
        %v2400 = vpop.permute.xlu0 %2399
        %2401 = vrot.lane.b32.xlu0 %v2327, 1
        %v2402 = vpop.permute.xlu0 %2401
        %2403 = vrot.lane.b32.xlu0 %v2332, 1
        %v2404 = vpop.permute.xlu0 %2403
        %2405 = vrot.lane.b32.xlu0 %v2337, 1
        %v2406 = vpop.permute.xlu0 %2405
        %2407 = vrot.lane.b32.xlu0 %v2342, 1
        %v2408 = vpop.permute.xlu0 %2407
        %2409 = vrot.lane.b32.xlu0 %v2347, 1
        %v2410 = vpop.permute.xlu0 %2409
        %2411 = vrot.lane.b32.xlu0 %v2352, 1
        %v2412 = vpop.permute.xlu0 %2411
        %2413 = vrot.lane.b32.xlu0 %v2357, 1
        %v2414 = vpop.permute.xlu0 %2413
        %2415 = vrot.lane.b32.xlu0 %v2362, 1
        %v2416 = vpop.permute.xlu0 %2415
        %2417 = vrot.lane.b32.xlu0 %v2367, 1
        %v2418 = vpop.permute.xlu0 %2417
        %2419 = vrot.lane.b32.xlu0 %v2313, 1
        %v2420 = vpop.permute.xlu0 %2419
        %2421 = vrot.lane.b32.xlu0 %v2318, 1
        %v2422 = vpop.permute.xlu0 %2421
        %2423 = vrot.lane.b32.xlu0 %v2323, 1
        %v2424 = vpop.permute.xlu0 %2423
        %2425 = vrot.lane.b32.xlu0 %v2328, 1
        %v2426 = vpop.permute.xlu0 %2425
        %2427 = vrot.lane.b32.xlu0 %v2333, 1
        %v2428 = vpop.permute.xlu0 %2427
        %2429 = vrot.lane.b32.xlu0 %v2338, 1
        %v2430 = vpop.permute.xlu0 %2429
        %2431 = vrot.lane.b32.xlu0 %v2343, 1
        %v2432 = vpop.permute.xlu0 %2431
        %2433 = vrot.lane.b32.xlu0 %v2348, 1
        %v2434 = vpop.permute.xlu0 %2433
        %2435 = vrot.lane.b32.xlu0 %v2353, 1
        %v2436 = vpop.permute.xlu0 %2435
        %2437 = vrot.lane.b32.xlu0 %v2358, 1
        %v2438 = vpop.permute.xlu0 %2437
        %2439 = vrot.lane.b32.xlu0 %v2363, 1
        %v2440 = vpop.permute.xlu0 %2439
        %2441 = vrot.lane.b32.xlu0 %v2368, 1
        %v2442 = vpop.permute.xlu0 %2441
        %2443 = vrot.lane.b32.xlu0 %v2314, 1
        %v2444 = vpop.permute.xlu0 %2443
        %2445 = vrot.lane.b32.xlu0 %v2319, 1
        %v2446 = vpop.permute.xlu0 %2445
        %2447 = vrot.lane.b32.xlu0 %v2324, 1
        %v2448 = vpop.permute.xlu0 %2447
        %2449 = vrot.lane.b32.xlu0 %v2329, 1
        %v2450 = vpop.permute.xlu0 %2449
        %2451 = vrot.lane.b32.xlu0 %v2334, 1
        %v2452 = vpop.permute.xlu0 %2451
        %2453 = vrot.lane.b32.xlu0 %v2339, 1
        %v2454 = vpop.permute.xlu0 %2453
        %2455 = vrot.lane.b32.xlu0 %v2344, 1
        %v2456 = vpop.permute.xlu0 %2455
        %2457 = vrot.lane.b32.xlu0 %v2349, 1
        %v2458 = vpop.permute.xlu0 %2457
        %2459 = vrot.lane.b32.xlu0 %v2354, 1
        %v2460 = vpop.permute.xlu0 %2459
        %2461 = vrot.lane.b32.xlu0 %v2359, 1
        %v2462 = vpop.permute.xlu0 %2461
        %2463 = vrot.lane.b32.xlu0 %v2364, 1
        %v2464 = vpop.permute.xlu0 %2463
        %2465 = vrot.lane.b32.xlu0 %v2369, 1
        %v2466 = vpop.permute.xlu0 %2465
        %2467 = vrot.lane.b32.xlu0 %v2315, 1
        %v2468 = vpop.permute.xlu0 %2467
        %2469 = vrot.lane.b32.xlu0 %v2320, 1
        %v2470 = vpop.permute.xlu0 %2469
        %2471 = vrot.lane.b32.xlu0 %v2325, 1
        %v2472 = vpop.permute.xlu0 %2471
        %2473 = vrot.lane.b32.xlu0 %v2330, 1
        %v2474 = vpop.permute.xlu0 %2473
        %2475 = vrot.lane.b32.xlu0 %v2335, 1
        %v2476 = vpop.permute.xlu0 %2475
        %2477 = vrot.lane.b32.xlu0 %v2340, 1
        %v2478 = vpop.permute.xlu0 %2477
        %2479 = vrot.lane.b32.xlu0 %v2345, 1
        %v2480 = vpop.permute.xlu0 %2479
        %2481 = vrot.lane.b32.xlu0 %v2350, 1
        %v2482 = vpop.permute.xlu0 %2481
        %2483 = vrot.lane.b32.xlu0 %v2355, 1
        %v2484 = vpop.permute.xlu0 %2483
        %2485 = vrot.lane.b32.xlu0 %v2360, 1
        %v2486 = vpop.permute.xlu0 %2485
        %2487 = vrot.lane.b32.xlu0 %v2365, 1
        %v2488 = vpop.permute.xlu0 %2487
        %2489 = vrot.lane.b32.xlu0 %v2370, 1
        %v2490 = vpop.permute.xlu0 %2489
        %v2491 = vsel %vm713, %v2444, %v2468
        %v2492 = vsel %vm713, %v2446, %v2470
        %v2493 = vsel %vm713, %v2448, %v2472
        %v2494 = vsel %vm713, %v2450, %v2474
        %v2495 = vsel %vm713, %v2452, %v2476
        %v2496 = vsel %vm713, %v2454, %v2478
        %v2497 = vsel %vm713, %v2456, %v2480
        %v2498 = vsel %vm713, %v2458, %v2482
        %v2499 = vsel %vm713, %v2460, %v2484
        %v2500 = vsel %vm713, %v2462, %v2486
        %v2501 = vsel %vm713, %v2464, %v2488
        %v2502 = vsel %vm713, %v2466, %v2490
        %v2503 = vsel %vm713, %v2420, %v2444
        %v2504 = vsel %vm713, %v2422, %v2446
        %v2505 = vsel %vm713, %v2424, %v2448
        %v2506 = vsel %vm713, %v2426, %v2450
        %v2507 = vsel %vm713, %v2428, %v2452
        %v2508 = vsel %vm713, %v2430, %v2454
        %v2509 = vsel %vm713, %v2432, %v2456
        %v2510 = vsel %vm713, %v2434, %v2458
        %v2511 = vsel %vm713, %v2436, %v2460
        %v2512 = vsel %vm713, %v2438, %v2462
        %v2513 = vsel %vm713, %v2440, %v2464
        %v2514 = vsel %vm713, %v2442, %v2466
        %v2515 = vsel %vm713, %v2396, %v2420
        %v2516 = vsel %vm713, %v2398, %v2422
        %v2517 = vsel %vm713, %v2400, %v2424
        %v2518 = vsel %vm713, %v2402, %v2426
        %v2519 = vsel %vm713, %v2404, %v2428
        %v2520 = vsel %vm713, %v2406, %v2430
        %v2521 = vsel %vm713, %v2408, %v2432
        %v2522 = vsel %vm713, %v2410, %v2434
        %v2523 = vsel %vm713, %v2412, %v2436
        %v2524 = vsel %vm713, %v2414, %v2438
        %v2525 = vsel %vm713, %v2416, %v2440
        %v2526 = vsel %vm713, %v2418, %v2442
        %v2527 = vsel %vm713, %v2372, %v2396
        %v2528 = vsel %vm713, %v2374, %v2398
        %v2529 = vsel %vm713, %v2376, %v2400
        %v2530 = vsel %vm713, %v2378, %v2402
        %v2531 = vsel %vm713, %v2380, %v2404
        %v2532 = vsel %vm713, %v2382, %v2406
        %v2533 = vsel %vm713, %v2384, %v2408
        %v2534 = vsel %vm713, %v2386, %v2410
        %v2535 = vsel %vm713, %v2388, %v2412
        %v2536 = vsel %vm713, %v2390, %v2414
        %v2537 = vsel %vm713, %v2392, %v2416
        %v2538 = vsel %vm713, %v2394, %v2418
        %v2539 = vsel %vm713, %v2468, %v2372
        %v2540 = vsel %vm713, %v2470, %v2374
        %v2541 = vsel %vm713, %v2472, %v2376
        %v2542 = vsel %vm713, %v2474, %v2378
        %v2543 = vsel %vm713, %v2476, %v2380
        %v2544 = vsel %vm713, %v2478, %v2382
        %v2545 = vsel %vm713, %v2480, %v2384
        %v2546 = vsel %vm713, %v2482, %v2386
        %v2547 = vsel %vm713, %v2484, %v2388
        %v2548 = vsel %vm713, %v2486, %v2390
        %v2549 = vsel %vm713, %v2488, %v2392
        %v2550 = vsel %vm713, %v2490, %v2394
        %v2551 = vsel %vm568, %v2539, %v2311
        %v2552 = vsel %vm569, %v2527, %v2312
        %v2553 = vsel %vm570, %v2515, %v2313
        %v2554 = vsel %vm571, %v2503, %v2314
        %v2555 = vsel %vm572, %v2491, %v2315
        %v2556 = vsel %vm568, %v2540, %v2316
        %v2557 = vsel %vm569, %v2528, %v2317
        %v2558 = vsel %vm570, %v2516, %v2318
        %v2559 = vsel %vm571, %v2504, %v2319
        %v2560 = vsel %vm572, %v2492, %v2320
        %v2561 = vsel %vm568, %v2541, %v2321
        %v2562 = vsel %vm569, %v2529, %v2322
        %v2563 = vsel %vm570, %v2517, %v2323
        %v2564 = vsel %vm571, %v2505, %v2324
        %v2565 = vsel %vm572, %v2493, %v2325
        %v2566 = vsel %vm568, %v2542, %v2326
        %v2567 = vsel %vm569, %v2530, %v2327
        %v2568 = vsel %vm570, %v2518, %v2328
        %v2569 = vsel %vm571, %v2506, %v2329
        %v2570 = vsel %vm572, %v2494, %v2330
        %v2571 = vsel %vm568, %v2543, %v2331
        %v2572 = vsel %vm569, %v2531, %v2332
        %v2573 = vsel %vm570, %v2519, %v2333
        %v2574 = vsel %vm571, %v2507, %v2334
        %v2575 = vsel %vm572, %v2495, %v2335
        %v2576 = vsel %vm568, %v2544, %v2336
        %v2577 = vsel %vm569, %v2532, %v2337
        %v2578 = vsel %vm570, %v2520, %v2338
        %v2579 = vsel %vm571, %v2508, %v2339
        %v2580 = vsel %vm572, %v2496, %v2340
        %v2581 = vsel %vm568, %v2545, %v2341
        %v2582 = vsel %vm569, %v2533, %v2342
        %v2583 = vsel %vm570, %v2521, %v2343
        %v2584 = vsel %vm571, %v2509, %v2344
        %v2585 = vsel %vm572, %v2497, %v2345
        %v2586 = vsel %vm568, %v2546, %v2346
        %v2587 = vsel %vm569, %v2534, %v2347
        %v2588 = vsel %vm570, %v2522, %v2348
        %v2589 = vsel %vm571, %v2510, %v2349
        %v2590 = vsel %vm572, %v2498, %v2350
        %v2591 = vsel %vm568, %v2547, %v2351
        %v2592 = vsel %vm569, %v2535, %v2352
        %v2593 = vsel %vm570, %v2523, %v2353
        %v2594 = vsel %vm571, %v2511, %v2354
        %v2595 = vsel %vm572, %v2499, %v2355
        %v2596 = vsel %vm568, %v2548, %v2356
        %v2597 = vsel %vm569, %v2536, %v2357
        %v2598 = vsel %vm570, %v2524, %v2358
        %v2599 = vsel %vm571, %v2512, %v2359
        %v2600 = vsel %vm572, %v2500, %v2360
        %v2601 = vsel %vm568, %v2549, %v2361
        %v2602 = vsel %vm569, %v2537, %v2362
        %v2603 = vsel %vm570, %v2525, %v2363
        %v2604 = vsel %vm571, %v2513, %v2364
        %v2605 = vsel %vm572, %v2501, %v2365
        %v2606 = vsel %vm568, %v2550, %v2366
        %v2607 = vsel %vm569, %v2538, %v2367
        %v2608 = vsel %vm570, %v2526, %v2368
        %v2609 = vsel %vm571, %v2514, %v2369
        %v2610 = vsel %vm572, %v2502, %v2370
        %2611 = vrot.lane.b32.xlu0 %v2551, 2
        %v2612 = vpop.permute.xlu0 %2611
        %2613 = vrot.lane.b32.xlu0 %v2556, 2
        %v2614 = vpop.permute.xlu0 %2613
        %2615 = vrot.lane.b32.xlu0 %v2561, 2
        %v2616 = vpop.permute.xlu0 %2615
        %2617 = vrot.lane.b32.xlu0 %v2566, 2
        %v2618 = vpop.permute.xlu0 %2617
        %2619 = vrot.lane.b32.xlu0 %v2571, 2
        %v2620 = vpop.permute.xlu0 %2619
        %2621 = vrot.lane.b32.xlu0 %v2576, 2
        %v2622 = vpop.permute.xlu0 %2621
        %2623 = vrot.lane.b32.xlu0 %v2581, 2
        %v2624 = vpop.permute.xlu0 %2623
        %2625 = vrot.lane.b32.xlu0 %v2586, 2
        %v2626 = vpop.permute.xlu0 %2625
        %2627 = vrot.lane.b32.xlu0 %v2591, 2
        %v2628 = vpop.permute.xlu0 %2627
        %2629 = vrot.lane.b32.xlu0 %v2596, 2
        %v2630 = vpop.permute.xlu0 %2629
        %2631 = vrot.lane.b32.xlu0 %v2601, 2
        %v2632 = vpop.permute.xlu0 %2631
        %2633 = vrot.lane.b32.xlu0 %v2606, 2
        %v2634 = vpop.permute.xlu0 %2633
        %2635 = vrot.lane.b32.xlu0 %v2552, 2
        %v2636 = vpop.permute.xlu0 %2635
        %2637 = vrot.lane.b32.xlu0 %v2557, 2
        %v2638 = vpop.permute.xlu0 %2637
        %2639 = vrot.lane.b32.xlu0 %v2562, 2
        %v2640 = vpop.permute.xlu0 %2639
        %2641 = vrot.lane.b32.xlu0 %v2567, 2
        %v2642 = vpop.permute.xlu0 %2641
        %2643 = vrot.lane.b32.xlu0 %v2572, 2
        %v2644 = vpop.permute.xlu0 %2643
        %2645 = vrot.lane.b32.xlu0 %v2577, 2
        %v2646 = vpop.permute.xlu0 %2645
        %2647 = vrot.lane.b32.xlu0 %v2582, 2
        %v2648 = vpop.permute.xlu0 %2647
        %2649 = vrot.lane.b32.xlu0 %v2587, 2
        %v2650 = vpop.permute.xlu0 %2649
        %2651 = vrot.lane.b32.xlu0 %v2592, 2
        %v2652 = vpop.permute.xlu0 %2651
        %2653 = vrot.lane.b32.xlu0 %v2597, 2
        %v2654 = vpop.permute.xlu0 %2653
        %2655 = vrot.lane.b32.xlu0 %v2602, 2
        %v2656 = vpop.permute.xlu0 %2655
        %2657 = vrot.lane.b32.xlu0 %v2607, 2
        %v2658 = vpop.permute.xlu0 %2657
        %2659 = vrot.lane.b32.xlu0 %v2553, 2
        %v2660 = vpop.permute.xlu0 %2659
        %2661 = vrot.lane.b32.xlu0 %v2558, 2
        %v2662 = vpop.permute.xlu0 %2661
        %2663 = vrot.lane.b32.xlu0 %v2563, 2
        %v2664 = vpop.permute.xlu0 %2663
        %2665 = vrot.lane.b32.xlu0 %v2568, 2
        %v2666 = vpop.permute.xlu0 %2665
        %2667 = vrot.lane.b32.xlu0 %v2573, 2
        %v2668 = vpop.permute.xlu0 %2667
        %2669 = vrot.lane.b32.xlu0 %v2578, 2
        %v2670 = vpop.permute.xlu0 %2669
        %2671 = vrot.lane.b32.xlu0 %v2583, 2
        %v2672 = vpop.permute.xlu0 %2671
        %2673 = vrot.lane.b32.xlu0 %v2588, 2
        %v2674 = vpop.permute.xlu0 %2673
        %2675 = vrot.lane.b32.xlu0 %v2593, 2
        %v2676 = vpop.permute.xlu0 %2675
        %2677 = vrot.lane.b32.xlu0 %v2598, 2
        %v2678 = vpop.permute.xlu0 %2677
        %2679 = vrot.lane.b32.xlu0 %v2603, 2
        %v2680 = vpop.permute.xlu0 %2679
        %2681 = vrot.lane.b32.xlu0 %v2608, 2
        %v2682 = vpop.permute.xlu0 %2681
        %2683 = vrot.lane.b32.xlu0 %v2554, 2
        %v2684 = vpop.permute.xlu0 %2683
        %2685 = vrot.lane.b32.xlu0 %v2559, 2
        %v2686 = vpop.permute.xlu0 %2685
        %2687 = vrot.lane.b32.xlu0 %v2564, 2
        %v2688 = vpop.permute.xlu0 %2687
        %2689 = vrot.lane.b32.xlu0 %v2569, 2
        %v2690 = vpop.permute.xlu0 %2689
        %2691 = vrot.lane.b32.xlu0 %v2574, 2
        %v2692 = vpop.permute.xlu0 %2691
        %2693 = vrot.lane.b32.xlu0 %v2579, 2
        %v2694 = vpop.permute.xlu0 %2693
        %2695 = vrot.lane.b32.xlu0 %v2584, 2
        %v2696 = vpop.permute.xlu0 %2695
        %2697 = vrot.lane.b32.xlu0 %v2589, 2
        %v2698 = vpop.permute.xlu0 %2697
        %2699 = vrot.lane.b32.xlu0 %v2594, 2
        %v2700 = vpop.permute.xlu0 %2699
        %2701 = vrot.lane.b32.xlu0 %v2599, 2
        %v2702 = vpop.permute.xlu0 %2701
        %2703 = vrot.lane.b32.xlu0 %v2604, 2
        %v2704 = vpop.permute.xlu0 %2703
        %2705 = vrot.lane.b32.xlu0 %v2609, 2
        %v2706 = vpop.permute.xlu0 %2705
        %2707 = vrot.lane.b32.xlu0 %v2555, 2
        %v2708 = vpop.permute.xlu0 %2707
        %2709 = vrot.lane.b32.xlu0 %v2560, 2
        %v2710 = vpop.permute.xlu0 %2709
        %2711 = vrot.lane.b32.xlu0 %v2565, 2
        %v2712 = vpop.permute.xlu0 %2711
        %2713 = vrot.lane.b32.xlu0 %v2570, 2
        %v2714 = vpop.permute.xlu0 %2713
        %2715 = vrot.lane.b32.xlu0 %v2575, 2
        %v2716 = vpop.permute.xlu0 %2715
        %2717 = vrot.lane.b32.xlu0 %v2580, 2
        %v2718 = vpop.permute.xlu0 %2717
        %2719 = vrot.lane.b32.xlu0 %v2585, 2
        %v2720 = vpop.permute.xlu0 %2719
        %2721 = vrot.lane.b32.xlu0 %v2590, 2
        %v2722 = vpop.permute.xlu0 %2721
        %2723 = vrot.lane.b32.xlu0 %v2595, 2
        %v2724 = vpop.permute.xlu0 %2723
        %2725 = vrot.lane.b32.xlu0 %v2600, 2
        %v2726 = vpop.permute.xlu0 %2725
        %2727 = vrot.lane.b32.xlu0 %v2605, 2
        %v2728 = vpop.permute.xlu0 %2727
        %2729 = vrot.lane.b32.xlu0 %v2610, 2
        %v2730 = vpop.permute.xlu0 %2729
        %vm2731 = vcmp.lt.s32.totalorder %v550, 2
        %v2732 = vsel %vm2731, %v2684, %v2708
        %v2733 = vsel %vm2731, %v2686, %v2710
        %v2734 = vsel %vm2731, %v2688, %v2712
        %v2735 = vsel %vm2731, %v2690, %v2714
        %v2736 = vsel %vm2731, %v2692, %v2716
        %v2737 = vsel %vm2731, %v2694, %v2718
        %v2738 = vsel %vm2731, %v2696, %v2720
        %v2739 = vsel %vm2731, %v2698, %v2722
        %v2740 = vsel %vm2731, %v2700, %v2724
        %v2741 = vsel %vm2731, %v2702, %v2726
        %v2742 = vsel %vm2731, %v2704, %v2728
        %v2743 = vsel %vm2731, %v2706, %v2730
        %v2744 = vsel %vm2731, %v2660, %v2684
        %v2745 = vsel %vm2731, %v2662, %v2686
        %v2746 = vsel %vm2731, %v2664, %v2688
        %v2747 = vsel %vm2731, %v2666, %v2690
        %v2748 = vsel %vm2731, %v2668, %v2692
        %v2749 = vsel %vm2731, %v2670, %v2694
        %v2750 = vsel %vm2731, %v2672, %v2696
        %v2751 = vsel %vm2731, %v2674, %v2698
        %v2752 = vsel %vm2731, %v2676, %v2700
        %v2753 = vsel %vm2731, %v2678, %v2702
        %v2754 = vsel %vm2731, %v2680, %v2704
        %v2755 = vsel %vm2731, %v2682, %v2706
        %v2756 = vsel %vm2731, %v2636, %v2660
        %v2757 = vsel %vm2731, %v2638, %v2662
        %v2758 = vsel %vm2731, %v2640, %v2664
        %v2759 = vsel %vm2731, %v2642, %v2666
        %v2760 = vsel %vm2731, %v2644, %v2668
        %v2761 = vsel %vm2731, %v2646, %v2670
        %v2762 = vsel %vm2731, %v2648, %v2672
        %v2763 = vsel %vm2731, %v2650, %v2674
        %v2764 = vsel %vm2731, %v2652, %v2676
        %v2765 = vsel %vm2731, %v2654, %v2678
        %v2766 = vsel %vm2731, %v2656, %v2680
        %v2767 = vsel %vm2731, %v2658, %v2682
        %v2768 = vsel %vm2731, %v2612, %v2636
        %v2769 = vsel %vm2731, %v2614, %v2638
        %v2770 = vsel %vm2731, %v2616, %v2640
        %v2771 = vsel %vm2731, %v2618, %v2642
        %v2772 = vsel %vm2731, %v2620, %v2644
        %v2773 = vsel %vm2731, %v2622, %v2646
        %v2774 = vsel %vm2731, %v2624, %v2648
        %v2775 = vsel %vm2731, %v2626, %v2650
        %v2776 = vsel %vm2731, %v2628, %v2652
        %v2777 = vsel %vm2731, %v2630, %v2654
        %v2778 = vsel %vm2731, %v2632, %v2656
        %v2779 = vsel %vm2731, %v2634, %v2658
        %v2780 = vsel %vm2731, %v2708, %v2612
        %v2781 = vsel %vm2731, %v2710, %v2614
        %v2782 = vsel %vm2731, %v2712, %v2616
        %v2783 = vsel %vm2731, %v2714, %v2618
        %v2784 = vsel %vm2731, %v2716, %v2620
        %v2785 = vsel %vm2731, %v2718, %v2622
        %v2786 = vsel %vm2731, %v2720, %v2624
        %v2787 = vsel %vm2731, %v2722, %v2626
        %v2788 = vsel %vm2731, %v2724, %v2628
        %v2789 = vsel %vm2731, %v2726, %v2630
        %v2790 = vsel %vm2731, %v2728, %v2632
        %v2791 = vsel %vm2731, %v2730, %v2634
        %v2792 = vsel %vm583, 0.0, %v2780
        %v2793 = vsel %vm584, 0.0, %v2768
        %v2794 = vsel %vm585, 0.0, %v2756
        %v2795 = vsel %vm586, 0.0, %v2744
        %v2796 = vsel %vm587, 0.0, %v2732
        %v2797 = vsel %vm583, 0.0, %v2781
        %v2798 = vsel %vm584, 0.0, %v2769
        %v2799 = vsel %vm585, 0.0, %v2757
        %v2800 = vsel %vm586, 0.0, %v2745
        %v2801 = vsel %vm587, 0.0, %v2733
        %v2802 = vsel %vm583, 0.0, %v2782
        %v2803 = vsel %vm584, 0.0, %v2770
        %v2804 = vsel %vm585, 0.0, %v2758
        %v2805 = vsel %vm586, 0.0, %v2746
        %v2806 = vsel %vm587, 0.0, %v2734
        %v2807 = vsel %vm583, 0.0, %v2783
        %v2808 = vsel %vm584, 0.0, %v2771
        %v2809 = vsel %vm585, 0.0, %v2759
        %v2810 = vsel %vm586, 0.0, %v2747
        %v2811 = vsel %vm587, 0.0, %v2735
        %v2812 = vsel %vm583, 0.0, %v2784
        %v2813 = vsel %vm584, 0.0, %v2772
        %v2814 = vsel %vm585, 0.0, %v2760
        %v2815 = vsel %vm586, 0.0, %v2748
        %v2816 = vsel %vm587, 0.0, %v2736
        %v2817 = vsel %vm583, 0.0, %v2785
        %v2818 = vsel %vm584, 0.0, %v2773
        %v2819 = vsel %vm585, 0.0, %v2761
        %v2820 = vsel %vm586, 0.0, %v2749
        %v2821 = vsel %vm587, 0.0, %v2737
        %v2822 = vsel %vm583, 0.0, %v2786
        %v2823 = vsel %vm584, 0.0, %v2774
        %v2824 = vsel %vm585, 0.0, %v2762
        %v2825 = vsel %vm586, 0.0, %v2750
        %v2826 = vsel %vm587, 0.0, %v2738
        %v2827 = vsel %vm583, 0.0, %v2787
        %v2828 = vsel %vm584, 0.0, %v2775
        %v2829 = vsel %vm585, 0.0, %v2763
        %v2830 = vsel %vm586, 0.0, %v2751
        %v2831 = vsel %vm587, 0.0, %v2739
        %v2832 = vsel %vm583, 0.0, %v2788
        %v2833 = vsel %vm584, 0.0, %v2776
        %v2834 = vsel %vm585, 0.0, %v2764
        %v2835 = vsel %vm586, 0.0, %v2752
        %v2836 = vsel %vm587, 0.0, %v2740
        %v2837 = vsel %vm583, 0.0, %v2789
        %v2838 = vsel %vm584, 0.0, %v2777
        %v2839 = vsel %vm585, 0.0, %v2765
        %v2840 = vsel %vm586, 0.0, %v2753
        %v2841 = vsel %vm587, 0.0, %v2741
        %v2842 = vsel %vm583, 0.0, %v2790
        %v2843 = vsel %vm584, 0.0, %v2778
        %v2844 = vsel %vm585, 0.0, %v2766
        %v2845 = vsel %vm586, 0.0, %v2754
        %v2846 = vsel %vm587, 0.0, %v2742
        %v2847 = vsel %vm583, 0.0, %v2791
        %v2848 = vsel %vm584, 0.0, %v2779
        %v2849 = vsel %vm585, 0.0, %v2767
        %v2850 = vsel %vm586, 0.0, %v2755
        %v2851 = vsel %vm587, 0.0, %v2743
        %2852 = vrot.lane.b32.xlu0 %v2551, 126
        %v2853 = vpop.permute.xlu0 %2852
        %2854 = vrot.lane.b32.xlu0 %v2556, 126
        %v2855 = vpop.permute.xlu0 %2854
        %2856 = vrot.lane.b32.xlu0 %v2561, 126
        %v2857 = vpop.permute.xlu0 %2856
        %2858 = vrot.lane.b32.xlu0 %v2566, 126
        %v2859 = vpop.permute.xlu0 %2858
        %2860 = vrot.lane.b32.xlu0 %v2571, 126
        %v2861 = vpop.permute.xlu0 %2860
        %2862 = vrot.lane.b32.xlu0 %v2576, 126
        %v2863 = vpop.permute.xlu0 %2862
        %2864 = vrot.lane.b32.xlu0 %v2581, 126
        %v2865 = vpop.permute.xlu0 %2864
        %2866 = vrot.lane.b32.xlu0 %v2586, 126
        %v2867 = vpop.permute.xlu0 %2866
        %2868 = vrot.lane.b32.xlu0 %v2591, 126
        %v2869 = vpop.permute.xlu0 %2868
        %2870 = vrot.lane.b32.xlu0 %v2596, 126
        %v2871 = vpop.permute.xlu0 %2870
        %2872 = vrot.lane.b32.xlu0 %v2601, 126
        %v2873 = vpop.permute.xlu0 %2872
        %2874 = vrot.lane.b32.xlu0 %v2606, 126
        %v2875 = vpop.permute.xlu0 %2874
        %2876 = vrot.lane.b32.xlu0 %v2552, 126
        %v2877 = vpop.permute.xlu0 %2876
        %2878 = vrot.lane.b32.xlu0 %v2557, 126
        %v2879 = vpop.permute.xlu0 %2878
        %2880 = vrot.lane.b32.xlu0 %v2562, 126
        %v2881 = vpop.permute.xlu0 %2880
        %2882 = vrot.lane.b32.xlu0 %v2567, 126
        %v2883 = vpop.permute.xlu0 %2882
        %2884 = vrot.lane.b32.xlu0 %v2572, 126
        %v2885 = vpop.permute.xlu0 %2884
        %2886 = vrot.lane.b32.xlu0 %v2577, 126
        %v2887 = vpop.permute.xlu0 %2886
        %2888 = vrot.lane.b32.xlu0 %v2582, 126
        %v2889 = vpop.permute.xlu0 %2888
        %2890 = vrot.lane.b32.xlu0 %v2587, 126
        %v2891 = vpop.permute.xlu0 %2890
        %2892 = vrot.lane.b32.xlu0 %v2592, 126
        %v2893 = vpop.permute.xlu0 %2892
        %2894 = vrot.lane.b32.xlu0 %v2597, 126
        %v2895 = vpop.permute.xlu0 %2894
        %2896 = vrot.lane.b32.xlu0 %v2602, 126
        %v2897 = vpop.permute.xlu0 %2896
        %2898 = vrot.lane.b32.xlu0 %v2607, 126
        %v2899 = vpop.permute.xlu0 %2898
        %2900 = vrot.lane.b32.xlu0 %v2553, 126
        %v2901 = vpop.permute.xlu0 %2900
        %2902 = vrot.lane.b32.xlu0 %v2558, 126
        %v2903 = vpop.permute.xlu0 %2902
        %2904 = vrot.lane.b32.xlu0 %v2563, 126
        %v2905 = vpop.permute.xlu0 %2904
        %2906 = vrot.lane.b32.xlu0 %v2568, 126
        %v2907 = vpop.permute.xlu0 %2906
        %2908 = vrot.lane.b32.xlu0 %v2573, 126
        %v2909 = vpop.permute.xlu0 %2908
        %2910 = vrot.lane.b32.xlu0 %v2578, 126
        %v2911 = vpop.permute.xlu0 %2910
        %2912 = vrot.lane.b32.xlu0 %v2583, 126
        %v2913 = vpop.permute.xlu0 %2912
        %2914 = vrot.lane.b32.xlu0 %v2588, 126
        %v2915 = vpop.permute.xlu0 %2914
        %2916 = vrot.lane.b32.xlu0 %v2593, 126
        %v2917 = vpop.permute.xlu0 %2916
        %2918 = vrot.lane.b32.xlu0 %v2598, 126
        %v2919 = vpop.permute.xlu0 %2918
        %2920 = vrot.lane.b32.xlu0 %v2603, 126
        %v2921 = vpop.permute.xlu0 %2920
        %2922 = vrot.lane.b32.xlu0 %v2608, 126
        %v2923 = vpop.permute.xlu0 %2922
        %2924 = vrot.lane.b32.xlu0 %v2554, 126
        %v2925 = vpop.permute.xlu0 %2924
        %2926 = vrot.lane.b32.xlu0 %v2559, 126
        %v2927 = vpop.permute.xlu0 %2926
        %2928 = vrot.lane.b32.xlu0 %v2564, 126
        %v2929 = vpop.permute.xlu0 %2928
        %2930 = vrot.lane.b32.xlu0 %v2569, 126
        %v2931 = vpop.permute.xlu0 %2930
        %2932 = vrot.lane.b32.xlu0 %v2574, 126
        %v2933 = vpop.permute.xlu0 %2932
        %2934 = vrot.lane.b32.xlu0 %v2579, 126
        %v2935 = vpop.permute.xlu0 %2934
        %2936 = vrot.lane.b32.xlu0 %v2584, 126
        %v2937 = vpop.permute.xlu0 %2936
        %2938 = vrot.lane.b32.xlu0 %v2589, 126
        %v2939 = vpop.permute.xlu0 %2938
        %2940 = vrot.lane.b32.xlu0 %v2594, 126
        %v2941 = vpop.permute.xlu0 %2940
        %2942 = vrot.lane.b32.xlu0 %v2599, 126
        %v2943 = vpop.permute.xlu0 %2942
        %2944 = vrot.lane.b32.xlu0 %v2604, 126
        %v2945 = vpop.permute.xlu0 %2944
        %2946 = vrot.lane.b32.xlu0 %v2609, 126
        %v2947 = vpop.permute.xlu0 %2946
        %2948 = vrot.lane.b32.xlu0 %v2555, 126
        %v2949 = vpop.permute.xlu0 %2948
        %2950 = vrot.lane.b32.xlu0 %v2560, 126
        %v2951 = vpop.permute.xlu0 %2950
        %2952 = vrot.lane.b32.xlu0 %v2565, 126
        %v2953 = vpop.permute.xlu0 %2952
        %2954 = vrot.lane.b32.xlu0 %v2570, 126
        %v2955 = vpop.permute.xlu0 %2954
        %2956 = vrot.lane.b32.xlu0 %v2575, 126
        %v2957 = vpop.permute.xlu0 %2956
        %2958 = vrot.lane.b32.xlu0 %v2580, 126
        %v2959 = vpop.permute.xlu0 %2958
        %2960 = vrot.lane.b32.xlu0 %v2585, 126
        %v2961 = vpop.permute.xlu0 %2960
        %2962 = vrot.lane.b32.xlu0 %v2590, 126
        %v2963 = vpop.permute.xlu0 %2962
        %2964 = vrot.lane.b32.xlu0 %v2595, 126
        %v2965 = vpop.permute.xlu0 %2964
        %2966 = vrot.lane.b32.xlu0 %v2600, 126
        %v2967 = vpop.permute.xlu0 %2966
        %2968 = vrot.lane.b32.xlu0 %v2605, 126
        %v2969 = vpop.permute.xlu0 %2968
        %2970 = vrot.lane.b32.xlu0 %v2610, 126
        %v2971 = vpop.permute.xlu0 %2970
        %vm2972 = vcmp.lt.s32.totalorder %v550, 126
        %v2973 = vsel %vm2972, %v2925, %v2949
        %v2974 = vsel %vm2972, %v2927, %v2951
        %v2975 = vsel %vm2972, %v2929, %v2953
        %v2976 = vsel %vm2972, %v2931, %v2955
        %v2977 = vsel %vm2972, %v2933, %v2957
        %v2978 = vsel %vm2972, %v2935, %v2959
        %v2979 = vsel %vm2972, %v2937, %v2961
        %v2980 = vsel %vm2972, %v2939, %v2963
        %v2981 = vsel %vm2972, %v2941, %v2965
        %v2982 = vsel %vm2972, %v2943, %v2967
        %v2983 = vsel %vm2972, %v2945, %v2969
        %v2984 = vsel %vm2972, %v2947, %v2971
        %v2985 = vsel %vm2972, %v2901, %v2925
        %v2986 = vsel %vm2972, %v2903, %v2927
        %v2987 = vsel %vm2972, %v2905, %v2929
        %v2988 = vsel %vm2972, %v2907, %v2931
        %v2989 = vsel %vm2972, %v2909, %v2933
        %v2990 = vsel %vm2972, %v2911, %v2935
        %v2991 = vsel %vm2972, %v2913, %v2937
        %v2992 = vsel %vm2972, %v2915, %v2939
        %v2993 = vsel %vm2972, %v2917, %v2941
        %v2994 = vsel %vm2972, %v2919, %v2943
        %v2995 = vsel %vm2972, %v2921, %v2945
        %v2996 = vsel %vm2972, %v2923, %v2947
        %v2997 = vsel %vm2972, %v2877, %v2901
        %v2998 = vsel %vm2972, %v2879, %v2903
        %v2999 = vsel %vm2972, %v2881, %v2905
        %v3000 = vsel %vm2972, %v2883, %v2907
        %v3001 = vsel %vm2972, %v2885, %v2909
        %v3002 = vsel %vm2972, %v2887, %v2911
        %v3003 = vsel %vm2972, %v2889, %v2913
        %v3004 = vsel %vm2972, %v2891, %v2915
        %v3005 = vsel %vm2972, %v2893, %v2917
        %v3006 = vsel %vm2972, %v2895, %v2919
        %v3007 = vsel %vm2972, %v2897, %v2921
        %v3008 = vsel %vm2972, %v2899, %v2923
        %v3009 = vsel %vm2972, %v2853, %v2877
        %v3010 = vsel %vm2972, %v2855, %v2879
        %v3011 = vsel %vm2972, %v2857, %v2881
        %v3012 = vsel %vm2972, %v2859, %v2883
        %v3013 = vsel %vm2972, %v2861, %v2885
        %v3014 = vsel %vm2972, %v2863, %v2887
        %v3015 = vsel %vm2972, %v2865, %v2889
        %v3016 = vsel %vm2972, %v2867, %v2891
        %v3017 = vsel %vm2972, %v2869, %v2893
        %v3018 = vsel %vm2972, %v2871, %v2895
        %v3019 = vsel %vm2972, %v2873, %v2897
        %v3020 = vsel %vm2972, %v2875, %v2899
        %v3021 = vsel %vm2972, %v2949, %v2853
        %v3022 = vsel %vm2972, %v2951, %v2855
        %v3023 = vsel %vm2972, %v2953, %v2857
        %v3024 = vsel %vm2972, %v2955, %v2859
        %v3025 = vsel %vm2972, %v2957, %v2861
        %v3026 = vsel %vm2972, %v2959, %v2863
        %v3027 = vsel %vm2972, %v2961, %v2865
        %v3028 = vsel %vm2972, %v2963, %v2867
        %v3029 = vsel %vm2972, %v2965, %v2869
        %v3030 = vsel %vm2972, %v2967, %v2871
        %v3031 = vsel %vm2972, %v2969, %v2873
        %v3032 = vsel %vm2972, %v2971, %v2875
        %v3033 = vsel %vm588, 0.0, %v3009
        %v3034 = vsel %vm589, 0.0, %v2997
        %v3035 = vsel %vm590, 0.0, %v2985
        %v3036 = vsel %vm591, 0.0, %v2973
        %v3037 = vsel %vm592, 0.0, %v3021
        %v3038 = vsel %vm588, 0.0, %v3010
        %v3039 = vsel %vm589, 0.0, %v2998
        %v3040 = vsel %vm590, 0.0, %v2986
        %v3041 = vsel %vm591, 0.0, %v2974
        %v3042 = vsel %vm592, 0.0, %v3022
        %v3043 = vsel %vm588, 0.0, %v3011
        %v3044 = vsel %vm589, 0.0, %v2999
        %v3045 = vsel %vm590, 0.0, %v2987
        %v3046 = vsel %vm591, 0.0, %v2975
        %v3047 = vsel %vm592, 0.0, %v3023
        %v3048 = vsel %vm588, 0.0, %v3012
        %v3049 = vsel %vm589, 0.0, %v3000
        %v3050 = vsel %vm590, 0.0, %v2988
        %v3051 = vsel %vm591, 0.0, %v2976
        %v3052 = vsel %vm592, 0.0, %v3024
        %v3053 = vsel %vm588, 0.0, %v3013
        %v3054 = vsel %vm589, 0.0, %v3001
        %v3055 = vsel %vm590, 0.0, %v2989
        %v3056 = vsel %vm591, 0.0, %v2977
        %v3057 = vsel %vm592, 0.0, %v3025
        %v3058 = vsel %vm588, 0.0, %v3014
        %v3059 = vsel %vm589, 0.0, %v3002
        %v3060 = vsel %vm590, 0.0, %v2990
        %v3061 = vsel %vm591, 0.0, %v2978
        %v3062 = vsel %vm592, 0.0, %v3026
        %v3063 = vsel %vm588, 0.0, %v3015
        %v3064 = vsel %vm589, 0.0, %v3003
        %v3065 = vsel %vm590, 0.0, %v2991
        %v3066 = vsel %vm591, 0.0, %v2979
        %v3067 = vsel %vm592, 0.0, %v3027
        %v3068 = vsel %vm588, 0.0, %v3016
        %v3069 = vsel %vm589, 0.0, %v3004
        %v3070 = vsel %vm590, 0.0, %v2992
        %v3071 = vsel %vm591, 0.0, %v2980
        %v3072 = vsel %vm592, 0.0, %v3028
        %v3073 = vsel %vm588, 0.0, %v3017
        %v3074 = vsel %vm589, 0.0, %v3005
        %v3075 = vsel %vm590, 0.0, %v2993
        %v3076 = vsel %vm591, 0.0, %v2981
        %v3077 = vsel %vm592, 0.0, %v3029
        %v3078 = vsel %vm588, 0.0, %v3018
        %v3079 = vsel %vm589, 0.0, %v3006
        %v3080 = vsel %vm590, 0.0, %v2994
        %v3081 = vsel %vm591, 0.0, %v2982
        %v3082 = vsel %vm592, 0.0, %v3030
        %v3083 = vsel %vm588, 0.0, %v3019
        %v3084 = vsel %vm589, 0.0, %v3007
        %v3085 = vsel %vm590, 0.0, %v2995
        %v3086 = vsel %vm591, 0.0, %v2983
        %v3087 = vsel %vm592, 0.0, %v3031
        %v3088 = vsel %vm588, 0.0, %v3020
        %v3089 = vsel %vm589, 0.0, %v3008
        %v3090 = vsel %vm590, 0.0, %v2996
        %v3091 = vsel %vm591, 0.0, %v2984
        %v3092 = vsel %vm592, 0.0, %v3032
        %3094 = vset.pattern.permute.xlu0 0
        %3095 = vperm.xlu0 %3094, %v489
        %v3096 = vpop.permute.xlu0 %3095
        %3099 = vset.pattern.permute.xlu0 0
        %3100 = vperm.xlu0 %3099, %v490
        %v3101 = vpop.permute.xlu0 %3100
        %3104 = vset.pattern.permute.xlu0 0
        %3105 = vperm.xlu0 %3104, %v491
        %v3106 = vpop.permute.xlu0 %3105
        %3109 = vset.pattern.permute.xlu0 0
        %3110 = vperm.xlu0 %3109, %v492
        %v3111 = vpop.permute.xlu0 %3110
        %3114 = vset.pattern.permute.xlu0 0
        %3115 = vperm.xlu0 %3114, %v493
        %v3116 = vpop.permute.xlu0 %3115
        %3119 = vset.pattern.permute.xlu0 0
        %3120 = vperm.xlu0 %3119, %v494
        %v3121 = vpop.permute.xlu0 %3120
        %3124 = vset.pattern.permute.xlu0 0
        %3125 = vperm.xlu0 %3124, %v495
        %v3126 = vpop.permute.xlu0 %3125
        %3129 = vset.pattern.permute.xlu0 0
        %3130 = vperm.xlu0 %3129, %v496
        %v3131 = vpop.permute.xlu0 %3130
        %3134 = vset.pattern.permute.xlu0 0
        %3135 = vperm.xlu0 %3134, %v497
        %v3136 = vpop.permute.xlu0 %3135
        %3139 = vset.pattern.permute.xlu0 0
        %3140 = vperm.xlu0 %3139, %v498
        %v3141 = vpop.permute.xlu0 %3140
        %3144 = vset.pattern.permute.xlu0 0
        %3145 = vperm.xlu0 %3144, %v499
        %v3146 = vpop.permute.xlu0 %3145
        %3149 = vset.pattern.permute.xlu0 0
        %3150 = vperm.xlu0 %3149, %v500
        %v3151 = vpop.permute.xlu0 %3150
        %v3153 = vmul.f32 %v3096, %v2792
        %v3154 = vmul.f32 %v3096, %v2793
        %v3155 = vmul.f32 %v3096, %v2794
        %v3156 = vmul.f32 %v3096, %v2795
        %v3157 = vmul.f32 %v3096, %v2796
        %v3158 = vmul.f32 %v3101, %v2797
        %v3159 = vmul.f32 %v3101, %v2798
        %v3160 = vmul.f32 %v3101, %v2799
        %v3161 = vmul.f32 %v3101, %v2800
        %v3162 = vmul.f32 %v3101, %v2801
        %v3163 = vmul.f32 %v3106, %v2802
        %v3164 = vmul.f32 %v3106, %v2803
        %v3165 = vmul.f32 %v3106, %v2804
        %v3166 = vmul.f32 %v3106, %v2805
        %v3167 = vmul.f32 %v3106, %v2806
        %v3168 = vmul.f32 %v3111, %v2807
        %v3169 = vmul.f32 %v3111, %v2808
        %v3170 = vmul.f32 %v3111, %v2809
        %v3171 = vmul.f32 %v3111, %v2810
        %v3172 = vmul.f32 %v3111, %v2811
        %v3173 = vmul.f32 %v3116, %v2812
        %v3174 = vmul.f32 %v3116, %v2813
        %v3175 = vmul.f32 %v3116, %v2814
        %v3176 = vmul.f32 %v3116, %v2815
        %v3177 = vmul.f32 %v3116, %v2816
        %v3178 = vmul.f32 %v3121, %v2817
        %v3179 = vmul.f32 %v3121, %v2818
        %v3180 = vmul.f32 %v3121, %v2819
        %v3181 = vmul.f32 %v3121, %v2820
        %v3182 = vmul.f32 %v3121, %v2821
        %v3183 = vmul.f32 %v3126, %v2822
        %v3184 = vmul.f32 %v3126, %v2823
        %v3185 = vmul.f32 %v3126, %v2824
        %v3186 = vmul.f32 %v3126, %v2825
        %v3187 = vmul.f32 %v3126, %v2826
        %v3188 = vmul.f32 %v3131, %v2827
        %v3189 = vmul.f32 %v3131, %v2828
        %v3190 = vmul.f32 %v3131, %v2829
        %v3191 = vmul.f32 %v3131, %v2830
        %v3192 = vmul.f32 %v3131, %v2831
        %v3193 = vmul.f32 %v3136, %v2832
        %v3194 = vmul.f32 %v3136, %v2833
        %v3195 = vmul.f32 %v3136, %v2834
        %v3196 = vmul.f32 %v3136, %v2835
        %v3197 = vmul.f32 %v3136, %v2836
        %v3198 = vmul.f32 %v3141, %v2837
        %v3199 = vmul.f32 %v3141, %v2838
        %v3200 = vmul.f32 %v3141, %v2839
        %v3201 = vmul.f32 %v3141, %v2840
        %v3202 = vmul.f32 %v3141, %v2841
        %v3203 = vmul.f32 %v3146, %v2842
        %v3204 = vmul.f32 %v3146, %v2843
        %v3205 = vmul.f32 %v3146, %v2844
        %v3206 = vmul.f32 %v3146, %v2845
        %v3207 = vmul.f32 %v3146, %v2846
        %v3208 = vmul.f32 %v3151, %v2847
        %v3209 = vmul.f32 %v3151, %v2848
        %v3210 = vmul.f32 %v3151, %v2849
        %v3211 = vmul.f32 %v3151, %v2850
        %v3212 = vmul.f32 %v3151, %v2851
        %3213 = vset.pattern.permute.xlu0 1
        %3214 = vperm.xlu0 %3213, %v489
        %v3215 = vpop.permute.xlu0 %3214
        %3217 = vset.pattern.permute.xlu0 1
        %3218 = vperm.xlu0 %3217, %v490
        %v3219 = vpop.permute.xlu0 %3218
        %3221 = vset.pattern.permute.xlu0 1
        %3222 = vperm.xlu0 %3221, %v491
        %v3223 = vpop.permute.xlu0 %3222
        %3225 = vset.pattern.permute.xlu0 1
        %3226 = vperm.xlu0 %3225, %v492
        %v3227 = vpop.permute.xlu0 %3226
        %3229 = vset.pattern.permute.xlu0 1
        %3230 = vperm.xlu0 %3229, %v493
        %v3231 = vpop.permute.xlu0 %3230
        %3233 = vset.pattern.permute.xlu0 1
        %3234 = vperm.xlu0 %3233, %v494
        %v3235 = vpop.permute.xlu0 %3234
        %3237 = vset.pattern.permute.xlu0 1
        %3238 = vperm.xlu0 %3237, %v495
        %v3239 = vpop.permute.xlu0 %3238
        %3241 = vset.pattern.permute.xlu0 1
        %3242 = vperm.xlu0 %3241, %v496
        %v3243 = vpop.permute.xlu0 %3242
        %3245 = vset.pattern.permute.xlu0 1
        %3246 = vperm.xlu0 %3245, %v497
        %v3247 = vpop.permute.xlu0 %3246
        %3249 = vset.pattern.permute.xlu0 1
        %3250 = vperm.xlu0 %3249, %v498
        %v3251 = vpop.permute.xlu0 %3250
        %3253 = vset.pattern.permute.xlu0 1
        %3254 = vperm.xlu0 %3253, %v499
        %v3255 = vpop.permute.xlu0 %3254
        %3257 = vset.pattern.permute.xlu0 1
        %3258 = vperm.xlu0 %3257, %v500
        %v3259 = vpop.permute.xlu0 %3258
        %v3261 = vmul.f32 %v3215, %v2551
        %v3262 = vmul.f32 %v3215, %v2552
        %v3263 = vmul.f32 %v3215, %v2553
        %v3264 = vmul.f32 %v3215, %v2554
        %v3265 = vmul.f32 %v3215, %v2555
        %v3266 = vmul.f32 %v3219, %v2556
        %v3267 = vmul.f32 %v3219, %v2557
        %v3268 = vmul.f32 %v3219, %v2558
        %v3269 = vmul.f32 %v3219, %v2559
        %v3270 = vmul.f32 %v3219, %v2560
        %v3271 = vmul.f32 %v3223, %v2561
        %v3272 = vmul.f32 %v3223, %v2562
        %v3273 = vmul.f32 %v3223, %v2563
        %v3274 = vmul.f32 %v3223, %v2564
        %v3275 = vmul.f32 %v3223, %v2565
        %v3276 = vmul.f32 %v3227, %v2566
        %v3277 = vmul.f32 %v3227, %v2567
        %v3278 = vmul.f32 %v3227, %v2568
        %v3279 = vmul.f32 %v3227, %v2569
        %v3280 = vmul.f32 %v3227, %v2570
        %v3281 = vmul.f32 %v3231, %v2571
        %v3282 = vmul.f32 %v3231, %v2572
        %v3283 = vmul.f32 %v3231, %v2573
        %v3284 = vmul.f32 %v3231, %v2574
        %v3285 = vmul.f32 %v3231, %v2575
        %v3286 = vmul.f32 %v3235, %v2576
        %v3287 = vmul.f32 %v3235, %v2577
        %v3288 = vmul.f32 %v3235, %v2578
        %v3289 = vmul.f32 %v3235, %v2579
        %v3290 = vmul.f32 %v3235, %v2580
        %v3291 = vmul.f32 %v3239, %v2581
        %v3292 = vmul.f32 %v3239, %v2582
        %v3293 = vmul.f32 %v3239, %v2583
        %v3294 = vmul.f32 %v3239, %v2584
        %v3295 = vmul.f32 %v3239, %v2585
        %v3296 = vmul.f32 %v3243, %v2586
        %v3297 = vmul.f32 %v3243, %v2587
        %v3298 = vmul.f32 %v3243, %v2588
        %v3299 = vmul.f32 %v3243, %v2589
        %v3300 = vmul.f32 %v3243, %v2590
        %v3301 = vmul.f32 %v3247, %v2591
        %v3302 = vmul.f32 %v3247, %v2592
        %v3303 = vmul.f32 %v3247, %v2593
        %v3304 = vmul.f32 %v3247, %v2594
        %v3305 = vmul.f32 %v3247, %v2595
        %v3306 = vmul.f32 %v3251, %v2596
        %v3307 = vmul.f32 %v3251, %v2597
        %v3308 = vmul.f32 %v3251, %v2598
        %v3309 = vmul.f32 %v3251, %v2599
        %v3310 = vmul.f32 %v3251, %v2600
        %v3311 = vmul.f32 %v3255, %v2601
        %v3312 = vmul.f32 %v3255, %v2602
        %v3313 = vmul.f32 %v3255, %v2603
        %v3314 = vmul.f32 %v3255, %v2604
        %v3315 = vmul.f32 %v3255, %v2605
        %v3316 = vmul.f32 %v3259, %v2606
        %v3317 = vmul.f32 %v3259, %v2607
        %v3318 = vmul.f32 %v3259, %v2608
        %v3319 = vmul.f32 %v3259, %v2609
        %v3320 = vmul.f32 %v3259, %v2610
        %v3321 = vadd.f32 %v3153, %v3261
        %v3322 = vadd.f32 %v3154, %v3262
        %v3323 = vadd.f32 %v3155, %v3263
        %v3324 = vadd.f32 %v3156, %v3264
        %v3325 = vadd.f32 %v3157, %v3265
        %v3326 = vadd.f32 %v3158, %v3266
        %v3327 = vadd.f32 %v3159, %v3267
        %v3328 = vadd.f32 %v3160, %v3268
        %v3329 = vadd.f32 %v3161, %v3269
        %v3330 = vadd.f32 %v3162, %v3270
        %v3331 = vadd.f32 %v3163, %v3271
        %v3332 = vadd.f32 %v3164, %v3272
        %v3333 = vadd.f32 %v3165, %v3273
        %v3334 = vadd.f32 %v3166, %v3274
        %v3335 = vadd.f32 %v3167, %v3275
        %v3336 = vadd.f32 %v3168, %v3276
        %v3337 = vadd.f32 %v3169, %v3277
        %v3338 = vadd.f32 %v3170, %v3278
        %v3339 = vadd.f32 %v3171, %v3279
        %v3340 = vadd.f32 %v3172, %v3280
        %v3341 = vadd.f32 %v3173, %v3281
        %v3342 = vadd.f32 %v3174, %v3282
        %v3343 = vadd.f32 %v3175, %v3283
        %v3344 = vadd.f32 %v3176, %v3284
        %v3345 = vadd.f32 %v3177, %v3285
        %v3346 = vadd.f32 %v3178, %v3286
        %v3347 = vadd.f32 %v3179, %v3287
        %v3348 = vadd.f32 %v3180, %v3288
        %v3349 = vadd.f32 %v3181, %v3289
        %v3350 = vadd.f32 %v3182, %v3290
        %v3351 = vadd.f32 %v3183, %v3291
        %v3352 = vadd.f32 %v3184, %v3292
        %v3353 = vadd.f32 %v3185, %v3293
        %v3354 = vadd.f32 %v3186, %v3294
        %v3355 = vadd.f32 %v3187, %v3295
        %v3356 = vadd.f32 %v3188, %v3296
        %v3357 = vadd.f32 %v3189, %v3297
        %v3358 = vadd.f32 %v3190, %v3298
        %v3359 = vadd.f32 %v3191, %v3299
        %v3360 = vadd.f32 %v3192, %v3300
        %v3361 = vadd.f32 %v3193, %v3301
        %v3362 = vadd.f32 %v3194, %v3302
        %v3363 = vadd.f32 %v3195, %v3303
        %v3364 = vadd.f32 %v3196, %v3304
        %v3365 = vadd.f32 %v3197, %v3305
        %v3366 = vadd.f32 %v3198, %v3306
        %v3367 = vadd.f32 %v3199, %v3307
        %v3368 = vadd.f32 %v3200, %v3308
        %v3369 = vadd.f32 %v3201, %v3309
        %v3370 = vadd.f32 %v3202, %v3310
        %v3371 = vadd.f32 %v3203, %v3311
        %v3372 = vadd.f32 %v3204, %v3312
        %v3373 = vadd.f32 %v3205, %v3313
        %v3374 = vadd.f32 %v3206, %v3314
        %v3375 = vadd.f32 %v3207, %v3315
        %v3376 = vadd.f32 %v3208, %v3316
        %v3377 = vadd.f32 %v3209, %v3317
        %v3378 = vadd.f32 %v3210, %v3318
        %v3379 = vadd.f32 %v3211, %v3319
        %v3380 = vadd.f32 %v3212, %v3320
        %3381 = vset.pattern.permute.xlu0 2
        %3382 = vperm.xlu0 %3381, %v489
        %v3383 = vpop.permute.xlu0 %3382
        %3385 = vset.pattern.permute.xlu0 2
        %3386 = vperm.xlu0 %3385, %v490
        %v3387 = vpop.permute.xlu0 %3386
        %3389 = vset.pattern.permute.xlu0 2
        %3390 = vperm.xlu0 %3389, %v491
        %v3391 = vpop.permute.xlu0 %3390
        %3393 = vset.pattern.permute.xlu0 2
        %3394 = vperm.xlu0 %3393, %v492
        %v3395 = vpop.permute.xlu0 %3394
        %3397 = vset.pattern.permute.xlu0 2
        %3398 = vperm.xlu0 %3397, %v493
        %v3399 = vpop.permute.xlu0 %3398
        %3401 = vset.pattern.permute.xlu0 2
        %3402 = vperm.xlu0 %3401, %v494
        %v3403 = vpop.permute.xlu0 %3402
        %3405 = vset.pattern.permute.xlu0 2
        %3406 = vperm.xlu0 %3405, %v495
        %v3407 = vpop.permute.xlu0 %3406
        %3409 = vset.pattern.permute.xlu0 2
        %3410 = vperm.xlu0 %3409, %v496
        %v3411 = vpop.permute.xlu0 %3410
        %3413 = vset.pattern.permute.xlu0 2
        %3414 = vperm.xlu0 %3413, %v497
        %v3415 = vpop.permute.xlu0 %3414
        %3417 = vset.pattern.permute.xlu0 2
        %3418 = vperm.xlu0 %3417, %v498
        %v3419 = vpop.permute.xlu0 %3418
        %3421 = vset.pattern.permute.xlu0 2
        %3422 = vperm.xlu0 %3421, %v499
        %v3423 = vpop.permute.xlu0 %3422
        %3425 = vset.pattern.permute.xlu0 2
        %3426 = vperm.xlu0 %3425, %v500
        %v3427 = vpop.permute.xlu0 %3426
        %v3429 = vmul.f32 %v3383, %v3033
        %v3430 = vmul.f32 %v3383, %v3034
        %v3431 = vmul.f32 %v3383, %v3035
        %v3432 = vmul.f32 %v3383, %v3036
        %v3433 = vmul.f32 %v3383, %v3037
        %v3434 = vmul.f32 %v3387, %v3038
        %v3435 = vmul.f32 %v3387, %v3039
        %v3436 = vmul.f32 %v3387, %v3040
        %v3437 = vmul.f32 %v3387, %v3041
        %v3438 = vmul.f32 %v3387, %v3042
        %v3439 = vmul.f32 %v3391, %v3043
        %v3440 = vmul.f32 %v3391, %v3044
        %v3441 = vmul.f32 %v3391, %v3045
        %v3442 = vmul.f32 %v3391, %v3046
        %v3443 = vmul.f32 %v3391, %v3047
        %v3444 = vmul.f32 %v3395, %v3048
        %v3445 = vmul.f32 %v3395, %v3049
        %v3446 = vmul.f32 %v3395, %v3050
        %v3447 = vmul.f32 %v3395, %v3051
        %v3448 = vmul.f32 %v3395, %v3052
        %v3449 = vmul.f32 %v3399, %v3053
        %v3450 = vmul.f32 %v3399, %v3054
        %v3451 = vmul.f32 %v3399, %v3055
        %v3452 = vmul.f32 %v3399, %v3056
        %v3453 = vmul.f32 %v3399, %v3057
        %v3454 = vmul.f32 %v3403, %v3058
        %v3455 = vmul.f32 %v3403, %v3059
        %v3456 = vmul.f32 %v3403, %v3060
        %v3457 = vmul.f32 %v3403, %v3061
        %v3458 = vmul.f32 %v3403, %v3062
        %v3459 = vmul.f32 %v3407, %v3063
        %v3460 = vmul.f32 %v3407, %v3064
        %v3461 = vmul.f32 %v3407, %v3065
        %v3462 = vmul.f32 %v3407, %v3066
        %v3463 = vmul.f32 %v3407, %v3067
        %v3464 = vmul.f32 %v3411, %v3068
        %v3465 = vmul.f32 %v3411, %v3069
        %v3466 = vmul.f32 %v3411, %v3070
        %v3467 = vmul.f32 %v3411, %v3071
        %v3468 = vmul.f32 %v3411, %v3072
        %v3469 = vmul.f32 %v3415, %v3073
        %v3470 = vmul.f32 %v3415, %v3074
        %v3471 = vmul.f32 %v3415, %v3075
        %v3472 = vmul.f32 %v3415, %v3076
        %v3473 = vmul.f32 %v3415, %v3077
        %v3474 = vmul.f32 %v3419, %v3078
        %v3475 = vmul.f32 %v3419, %v3079
        %v3476 = vmul.f32 %v3419, %v3080
        %v3477 = vmul.f32 %v3419, %v3081
        %v3478 = vmul.f32 %v3419, %v3082
        %v3479 = vmul.f32 %v3423, %v3083
        %v3480 = vmul.f32 %v3423, %v3084
        %v3481 = vmul.f32 %v3423, %v3085
        %v3482 = vmul.f32 %v3423, %v3086
        %v3483 = vmul.f32 %v3423, %v3087
        %v3484 = vmul.f32 %v3427, %v3088
        %v3485 = vmul.f32 %v3427, %v3089
        %v3486 = vmul.f32 %v3427, %v3090
        %v3487 = vmul.f32 %v3427, %v3091
        %v3488 = vmul.f32 %v3427, %v3092
        %v3489 = vadd.f32 %v3321, %v3429
        %v3490 = vadd.f32 %v3322, %v3430
        %v3491 = vadd.f32 %v3323, %v3431
        %v3492 = vadd.f32 %v3324, %v3432
        %v3493 = vadd.f32 %v3325, %v3433
        %v3494 = vadd.f32 %v3326, %v3434
        %v3495 = vadd.f32 %v3327, %v3435
        %v3496 = vadd.f32 %v3328, %v3436
        %v3497 = vadd.f32 %v3329, %v3437
        %v3498 = vadd.f32 %v3330, %v3438
        %v3499 = vadd.f32 %v3331, %v3439
        %v3500 = vadd.f32 %v3332, %v3440
        %v3501 = vadd.f32 %v3333, %v3441
        %v3502 = vadd.f32 %v3334, %v3442
        %v3503 = vadd.f32 %v3335, %v3443
        %v3504 = vadd.f32 %v3336, %v3444
        %v3505 = vadd.f32 %v3337, %v3445
        %v3506 = vadd.f32 %v3338, %v3446
        %v3507 = vadd.f32 %v3339, %v3447
        %v3508 = vadd.f32 %v3340, %v3448
        %v3509 = vadd.f32 %v3341, %v3449
        %v3510 = vadd.f32 %v3342, %v3450
        %v3511 = vadd.f32 %v3343, %v3451
        %v3512 = vadd.f32 %v3344, %v3452
        %v3513 = vadd.f32 %v3345, %v3453
        %v3514 = vadd.f32 %v3346, %v3454
        %v3515 = vadd.f32 %v3347, %v3455
        %v3516 = vadd.f32 %v3348, %v3456
        %v3517 = vadd.f32 %v3349, %v3457
        %v3518 = vadd.f32 %v3350, %v3458
        %v3519 = vadd.f32 %v3351, %v3459
        %v3520 = vadd.f32 %v3352, %v3460
        %v3521 = vadd.f32 %v3353, %v3461
        %v3522 = vadd.f32 %v3354, %v3462
        %v3523 = vadd.f32 %v3355, %v3463
        %v3524 = vadd.f32 %v3356, %v3464
        %v3525 = vadd.f32 %v3357, %v3465
        %v3526 = vadd.f32 %v3358, %v3466
        %v3527 = vadd.f32 %v3359, %v3467
        %v3528 = vadd.f32 %v3360, %v3468
        %v3529 = vadd.f32 %v3361, %v3469
        %v3530 = vadd.f32 %v3362, %v3470
        %v3531 = vadd.f32 %v3363, %v3471
        %v3532 = vadd.f32 %v3364, %v3472
        %v3533 = vadd.f32 %v3365, %v3473
        %v3534 = vadd.f32 %v3366, %v3474
        %v3535 = vadd.f32 %v3367, %v3475
        %v3536 = vadd.f32 %v3368, %v3476
        %v3537 = vadd.f32 %v3369, %v3477
        %v3538 = vadd.f32 %v3370, %v3478
        %v3539 = vadd.f32 %v3371, %v3479
        %v3540 = vadd.f32 %v3372, %v3480
        %v3541 = vadd.f32 %v3373, %v3481
        %v3542 = vadd.f32 %v3374, %v3482
        %v3543 = vadd.f32 %v3375, %v3483
        %v3544 = vadd.f32 %v3376, %v3484
        %v3545 = vadd.f32 %v3377, %v3485
        %v3546 = vadd.f32 %v3378, %v3486
        %v3547 = vadd.f32 %v3379, %v3487
        %v3548 = vadd.f32 %v3380, %v3488
        %3550 = vset.pattern.permute.xlu0 0
        %3551 = vperm.xlu0 %3550, %v525
        %v3552 = vpop.permute.xlu0 %3551
        %3555 = vset.pattern.permute.xlu0 0
        %3556 = vperm.xlu0 %3555, %v526
        %v3557 = vpop.permute.xlu0 %3556
        %3560 = vset.pattern.permute.xlu0 0
        %3561 = vperm.xlu0 %3560, %v527
        %v3562 = vpop.permute.xlu0 %3561
        %3565 = vset.pattern.permute.xlu0 0
        %3566 = vperm.xlu0 %3565, %v528
        %v3567 = vpop.permute.xlu0 %3566
        %3570 = vset.pattern.permute.xlu0 0
        %3571 = vperm.xlu0 %3570, %v529
        %v3572 = vpop.permute.xlu0 %3571
        %3575 = vset.pattern.permute.xlu0 0
        %3576 = vperm.xlu0 %3575, %v530
        %v3577 = vpop.permute.xlu0 %3576
        %3580 = vset.pattern.permute.xlu0 0
        %3581 = vperm.xlu0 %3580, %v531
        %v3582 = vpop.permute.xlu0 %3581
        %3585 = vset.pattern.permute.xlu0 0
        %3586 = vperm.xlu0 %3585, %v532
        %v3587 = vpop.permute.xlu0 %3586
        %3590 = vset.pattern.permute.xlu0 0
        %3591 = vperm.xlu0 %3590, %v533
        %v3592 = vpop.permute.xlu0 %3591
        %3595 = vset.pattern.permute.xlu0 0
        %3596 = vperm.xlu0 %3595, %v534
        %v3597 = vpop.permute.xlu0 %3596
        %3600 = vset.pattern.permute.xlu0 0
        %3601 = vperm.xlu0 %3600, %v535
        %v3602 = vpop.permute.xlu0 %3601
        %3605 = vset.pattern.permute.xlu0 0
        %3606 = vperm.xlu0 %3605, %v536
        %v3607 = vpop.permute.xlu0 %3606
        %v3609 = vmul.f32 %v3489, %v3552
        %v3610 = vmul.f32 %v3490, %v3552
        %v3611 = vmul.f32 %v3491, %v3552
        %v3612 = vmul.f32 %v3492, %v3552
        %v3613 = vmul.f32 %v3493, %v3552
        %v3614 = vmul.f32 %v3494, %v3557
        %v3615 = vmul.f32 %v3495, %v3557
        %v3616 = vmul.f32 %v3496, %v3557
        %v3617 = vmul.f32 %v3497, %v3557
        %v3618 = vmul.f32 %v3498, %v3557
        %v3619 = vmul.f32 %v3499, %v3562
        %v3620 = vmul.f32 %v3500, %v3562
        %v3621 = vmul.f32 %v3501, %v3562
        %v3622 = vmul.f32 %v3502, %v3562
        %v3623 = vmul.f32 %v3503, %v3562
        %v3624 = vmul.f32 %v3504, %v3567
        %v3625 = vmul.f32 %v3505, %v3567
        %v3626 = vmul.f32 %v3506, %v3567
        %v3627 = vmul.f32 %v3507, %v3567
        %v3628 = vmul.f32 %v3508, %v3567
        %v3629 = vmul.f32 %v3509, %v3572
        %v3630 = vmul.f32 %v3510, %v3572
        %v3631 = vmul.f32 %v3511, %v3572
        %v3632 = vmul.f32 %v3512, %v3572
        %v3633 = vmul.f32 %v3513, %v3572
        %v3634 = vmul.f32 %v3514, %v3577
        %v3635 = vmul.f32 %v3515, %v3577
        %v3636 = vmul.f32 %v3516, %v3577
        %v3637 = vmul.f32 %v3517, %v3577
        %v3638 = vmul.f32 %v3518, %v3577
        %v3639 = vmul.f32 %v3519, %v3582
        %v3640 = vmul.f32 %v3520, %v3582
        %v3641 = vmul.f32 %v3521, %v3582
        %v3642 = vmul.f32 %v3522, %v3582
        %v3643 = vmul.f32 %v3523, %v3582
        %v3644 = vmul.f32 %v3524, %v3587
        %v3645 = vmul.f32 %v3525, %v3587
        %v3646 = vmul.f32 %v3526, %v3587
        %v3647 = vmul.f32 %v3527, %v3587
        %v3648 = vmul.f32 %v3528, %v3587
        %v3649 = vmul.f32 %v3529, %v3592
        %v3650 = vmul.f32 %v3530, %v3592
        %v3651 = vmul.f32 %v3531, %v3592
        %v3652 = vmul.f32 %v3532, %v3592
        %v3653 = vmul.f32 %v3533, %v3592
        %v3654 = vmul.f32 %v3534, %v3597
        %v3655 = vmul.f32 %v3535, %v3597
        %v3656 = vmul.f32 %v3536, %v3597
        %v3657 = vmul.f32 %v3537, %v3597
        %v3658 = vmul.f32 %v3538, %v3597
        %v3659 = vmul.f32 %v3539, %v3602
        %v3660 = vmul.f32 %v3540, %v3602
        %v3661 = vmul.f32 %v3541, %v3602
        %v3662 = vmul.f32 %v3542, %v3602
        %v3663 = vmul.f32 %v3543, %v3602
        %v3664 = vmul.f32 %v3544, %v3607
        %v3665 = vmul.f32 %v3545, %v3607
        %v3666 = vmul.f32 %v3546, %v3607
        %v3667 = vmul.f32 %v3547, %v3607
        %v3668 = vmul.f32 %v3548, %v3607
        %3670 = vset.pattern.permute.xlu0 0
        %3671 = vperm.xlu0 %3670, %v537
        %v3672 = vpop.permute.xlu0 %3671
        %3675 = vset.pattern.permute.xlu0 0
        %3676 = vperm.xlu0 %3675, %v538
        %v3677 = vpop.permute.xlu0 %3676
        %3680 = vset.pattern.permute.xlu0 0
        %3681 = vperm.xlu0 %3680, %v539
        %v3682 = vpop.permute.xlu0 %3681
        %3685 = vset.pattern.permute.xlu0 0
        %3686 = vperm.xlu0 %3685, %v540
        %v3687 = vpop.permute.xlu0 %3686
        %3690 = vset.pattern.permute.xlu0 0
        %3691 = vperm.xlu0 %3690, %v541
        %v3692 = vpop.permute.xlu0 %3691
        %3695 = vset.pattern.permute.xlu0 0
        %3696 = vperm.xlu0 %3695, %v542
        %v3697 = vpop.permute.xlu0 %3696
        %3700 = vset.pattern.permute.xlu0 0
        %3701 = vperm.xlu0 %3700, %v543
        %v3702 = vpop.permute.xlu0 %3701
        %3705 = vset.pattern.permute.xlu0 0
        %3706 = vperm.xlu0 %3705, %v544
        %v3707 = vpop.permute.xlu0 %3706
        %3710 = vset.pattern.permute.xlu0 0
        %3711 = vperm.xlu0 %3710, %v545
        %v3712 = vpop.permute.xlu0 %3711
        %3715 = vset.pattern.permute.xlu0 0
        %3716 = vperm.xlu0 %3715, %v546
        %v3717 = vpop.permute.xlu0 %3716
        %3720 = vset.pattern.permute.xlu0 0
        %3721 = vperm.xlu0 %3720, %v547
        %v3722 = vpop.permute.xlu0 %3721
        %3725 = vset.pattern.permute.xlu0 0
        %3726 = vperm.xlu0 %3725, %v548
        %v3727 = vpop.permute.xlu0 %3726
        %v3729 = vadd.f32 %v3609, %v3672
        %v3730 = vadd.f32 %v3610, %v3672
        %v3731 = vadd.f32 %v3611, %v3672
        %v3732 = vadd.f32 %v3612, %v3672
        %v3733 = vadd.f32 %v3613, %v3672
        %v3734 = vadd.f32 %v3614, %v3677
        %v3735 = vadd.f32 %v3615, %v3677
        %v3736 = vadd.f32 %v3616, %v3677
        %v3737 = vadd.f32 %v3617, %v3677
        %v3738 = vadd.f32 %v3618, %v3677
        %v3739 = vadd.f32 %v3619, %v3682
        %v3740 = vadd.f32 %v3620, %v3682
        %v3741 = vadd.f32 %v3621, %v3682
        %v3742 = vadd.f32 %v3622, %v3682
        %v3743 = vadd.f32 %v3623, %v3682
        %v3744 = vadd.f32 %v3624, %v3687
        %v3745 = vadd.f32 %v3625, %v3687
        %v3746 = vadd.f32 %v3626, %v3687
        %v3747 = vadd.f32 %v3627, %v3687
        %v3748 = vadd.f32 %v3628, %v3687
        %v3749 = vadd.f32 %v3629, %v3692
        %v3750 = vadd.f32 %v3630, %v3692
        %v3751 = vadd.f32 %v3631, %v3692
        %v3752 = vadd.f32 %v3632, %v3692
        %v3753 = vadd.f32 %v3633, %v3692
        %v3754 = vadd.f32 %v3634, %v3697
        %v3755 = vadd.f32 %v3635, %v3697
        %v3756 = vadd.f32 %v3636, %v3697
        %v3757 = vadd.f32 %v3637, %v3697
        %v3758 = vadd.f32 %v3638, %v3697
        %v3759 = vadd.f32 %v3639, %v3702
        %v3760 = vadd.f32 %v3640, %v3702
        %v3761 = vadd.f32 %v3641, %v3702
        %v3762 = vadd.f32 %v3642, %v3702
        %v3763 = vadd.f32 %v3643, %v3702
        %v3764 = vadd.f32 %v3644, %v3707
        %v3765 = vadd.f32 %v3645, %v3707
        %v3766 = vadd.f32 %v3646, %v3707
        %v3767 = vadd.f32 %v3647, %v3707
        %v3768 = vadd.f32 %v3648, %v3707
        %v3769 = vadd.f32 %v3649, %v3712
        %v3770 = vadd.f32 %v3650, %v3712
        %v3771 = vadd.f32 %v3651, %v3712
        %v3772 = vadd.f32 %v3652, %v3712
        %v3773 = vadd.f32 %v3653, %v3712
        %v3774 = vadd.f32 %v3654, %v3717
        %v3775 = vadd.f32 %v3655, %v3717
        %v3776 = vadd.f32 %v3656, %v3717
        %v3777 = vadd.f32 %v3657, %v3717
        %v3778 = vadd.f32 %v3658, %v3717
        %v3779 = vadd.f32 %v3659, %v3722
        %v3780 = vadd.f32 %v3660, %v3722
        %v3781 = vadd.f32 %v3661, %v3722
        %v3782 = vadd.f32 %v3662, %v3722
        %v3783 = vadd.f32 %v3663, %v3722
        %v3784 = vadd.f32 %v3664, %v3727
        %v3785 = vadd.f32 %v3665, %v3727
        %v3786 = vadd.f32 %v3666, %v3727
        %v3787 = vadd.f32 %v3667, %v3727
        %v3788 = vadd.f32 %v3668, %v3727
        %v3789 = vmul.f32 %v3729, 0.5
        %v3790 = vmul.f32 %v3730, 0.5
        %v3791 = vmul.f32 %v3731, 0.5
        %v3792 = vmul.f32 %v3732, 0.5
        %v3793 = vmul.f32 %v3733, 0.5
        %v3794 = vmul.f32 %v3734, 0.5
        %v3795 = vmul.f32 %v3735, 0.5
        %v3796 = vmul.f32 %v3736, 0.5
        %v3797 = vmul.f32 %v3737, 0.5
        %v3798 = vmul.f32 %v3738, 0.5
        %v3799 = vmul.f32 %v3739, 0.5
        %v3800 = vmul.f32 %v3740, 0.5
        %v3801 = vmul.f32 %v3741, 0.5
        %v3802 = vmul.f32 %v3742, 0.5
        %v3803 = vmul.f32 %v3743, 0.5
        %v3804 = vmul.f32 %v3744, 0.5
        %v3805 = vmul.f32 %v3745, 0.5
        %v3806 = vmul.f32 %v3746, 0.5
        %v3807 = vmul.f32 %v3747, 0.5
        %v3808 = vmul.f32 %v3748, 0.5
        %v3809 = vmul.f32 %v3749, 0.5
        %v3810 = vmul.f32 %v3750, 0.5
        %v3811 = vmul.f32 %v3751, 0.5
        %v3812 = vmul.f32 %v3752, 0.5
        %v3813 = vmul.f32 %v3753, 0.5
        %v3814 = vmul.f32 %v3754, 0.5
        %v3815 = vmul.f32 %v3755, 0.5
        %v3816 = vmul.f32 %v3756, 0.5
        %v3817 = vmul.f32 %v3757, 0.5
        %v3818 = vmul.f32 %v3758, 0.5
        %v3819 = vmul.f32 %v3759, 0.5
        %v3820 = vmul.f32 %v3760, 0.5
        %v3821 = vmul.f32 %v3761, 0.5
        %v3822 = vmul.f32 %v3762, 0.5
        %v3823 = vmul.f32 %v3763, 0.5
        %v3824 = vmul.f32 %v3764, 0.5
        %v3825 = vmul.f32 %v3765, 0.5
        %v3826 = vmul.f32 %v3766, 0.5
        %v3827 = vmul.f32 %v3767, 0.5
        %v3828 = vmul.f32 %v3768, 0.5
        %v3829 = vmul.f32 %v3769, 0.5
        %v3830 = vmul.f32 %v3770, 0.5
        %v3831 = vmul.f32 %v3771, 0.5
        %v3832 = vmul.f32 %v3772, 0.5
        %v3833 = vmul.f32 %v3773, 0.5
        %v3834 = vmul.f32 %v3774, 0.5
        %v3835 = vmul.f32 %v3775, 0.5
        %v3836 = vmul.f32 %v3776, 0.5
        %v3837 = vmul.f32 %v3777, 0.5
        %v3838 = vmul.f32 %v3778, 0.5
        %v3839 = vmul.f32 %v3779, 0.5
        %v3840 = vmul.f32 %v3780, 0.5
        %v3841 = vmul.f32 %v3781, 0.5
        %v3842 = vmul.f32 %v3782, 0.5
        %v3843 = vmul.f32 %v3783, 0.5
        %v3844 = vmul.f32 %v3784, 0.5
        %v3845 = vmul.f32 %v3785, 0.5
        %v3846 = vmul.f32 %v3786, 0.5
        %v3847 = vmul.f32 %v3787, 0.5
        %v3848 = vmul.f32 %v3788, 0.5
        %v3849 = vtanh.pop %v3789
        %v3850 = vtanh.pop %v3790
        %v3851 = vtanh.pop %v3791
        %v3852 = vtanh.pop %v3792
        %v3853 = vtanh.pop %v3793
        %v3854 = vtanh.pop %v3794
        %v3855 = vtanh.pop %v3795
        %v3856 = vtanh.pop %v3796
        %v3857 = vtanh.pop %v3797
        %v3858 = vtanh.pop %v3798
        %v3859 = vtanh.pop %v3799
        %v3860 = vtanh.pop %v3800
        %v3861 = vtanh.pop %v3801
        %v3862 = vtanh.pop %v3802
        %v3863 = vtanh.pop %v3803
        %v3864 = vtanh.pop %v3804
        %v3865 = vtanh.pop %v3805
        %v3866 = vtanh.pop %v3806
        %v3867 = vtanh.pop %v3807
        %v3868 = vtanh.pop %v3808
        %v3869 = vtanh.pop %v3809
        %v3870 = vtanh.pop %v3810
        %v3871 = vtanh.pop %v3811
        %v3872 = vtanh.pop %v3812
        %v3873 = vtanh.pop %v3813
        %v3874 = vtanh.pop %v3814
        %v3875 = vtanh.pop %v3815
        %v3876 = vtanh.pop %v3816
        %v3877 = vtanh.pop %v3817
        %v3878 = vtanh.pop %v3818
        %v3879 = vtanh.pop %v3819
        %v3880 = vtanh.pop %v3820
        %v3881 = vtanh.pop %v3821
        %v3882 = vtanh.pop %v3822
        %v3883 = vtanh.pop %v3823
        %v3884 = vtanh.pop %v3824
        %v3885 = vtanh.pop %v3825
        %v3886 = vtanh.pop %v3826
        %v3887 = vtanh.pop %v3827
        %v3888 = vtanh.pop %v3828
        %v3889 = vtanh.pop %v3829
        %v3890 = vtanh.pop %v3830
        %v3891 = vtanh.pop %v3831
        %v3892 = vtanh.pop %v3832
        %v3893 = vtanh.pop %v3833
        %v3894 = vtanh.pop %v3834
        %v3895 = vtanh.pop %v3835
        %v3896 = vtanh.pop %v3836
        %v3897 = vtanh.pop %v3837
        %v3898 = vtanh.pop %v3838
        %v3899 = vtanh.pop %v3839
        %v3900 = vtanh.pop %v3840
        %v3901 = vtanh.pop %v3841
        %v3902 = vtanh.pop %v3842
        %v3903 = vtanh.pop %v3843
        %v3904 = vtanh.pop %v3844
        %v3905 = vtanh.pop %v3845
        %v3906 = vtanh.pop %v3846
        %v3907 = vtanh.pop %v3847
        %v3908 = vtanh.pop %v3848
        %v3909 = vmul.f32 %v3849, 0.5
        %v3910 = vmul.f32 %v3850, 0.5
        %v3911 = vmul.f32 %v3851, 0.5
        %v3912 = vmul.f32 %v3852, 0.5
        %v3913 = vmul.f32 %v3853, 0.5
        %v3914 = vmul.f32 %v3854, 0.5
        %v3915 = vmul.f32 %v3855, 0.5
        %v3916 = vmul.f32 %v3856, 0.5
        %v3917 = vmul.f32 %v3857, 0.5
        %v3918 = vmul.f32 %v3858, 0.5
        %v3919 = vmul.f32 %v3859, 0.5
        %v3920 = vmul.f32 %v3860, 0.5
        %v3921 = vmul.f32 %v3861, 0.5
        %v3922 = vmul.f32 %v3862, 0.5
        %v3923 = vmul.f32 %v3863, 0.5
        %v3924 = vmul.f32 %v3864, 0.5
        %v3925 = vmul.f32 %v3865, 0.5
        %v3926 = vmul.f32 %v3866, 0.5
        %v3927 = vmul.f32 %v3867, 0.5
        %v3928 = vmul.f32 %v3868, 0.5
        %v3929 = vmul.f32 %v3869, 0.5
        %v3930 = vmul.f32 %v3870, 0.5
        %v3931 = vmul.f32 %v3871, 0.5
        %v3932 = vmul.f32 %v3872, 0.5
        %v3933 = vmul.f32 %v3873, 0.5
        %v3934 = vmul.f32 %v3874, 0.5
        %v3935 = vmul.f32 %v3875, 0.5
        %v3936 = vmul.f32 %v3876, 0.5
        %v3937 = vmul.f32 %v3877, 0.5
        %v3938 = vmul.f32 %v3878, 0.5
        %v3939 = vmul.f32 %v3879, 0.5
        %v3940 = vmul.f32 %v3880, 0.5
        %v3941 = vmul.f32 %v3881, 0.5
        %v3942 = vmul.f32 %v3882, 0.5
        %v3943 = vmul.f32 %v3883, 0.5
        %v3944 = vmul.f32 %v3884, 0.5
        %v3945 = vmul.f32 %v3885, 0.5
        %v3946 = vmul.f32 %v3886, 0.5
        %v3947 = vmul.f32 %v3887, 0.5
        %v3948 = vmul.f32 %v3888, 0.5
        %v3949 = vmul.f32 %v3889, 0.5
        %v3950 = vmul.f32 %v3890, 0.5
        %v3951 = vmul.f32 %v3891, 0.5
        %v3952 = vmul.f32 %v3892, 0.5
        %v3953 = vmul.f32 %v3893, 0.5
        %v3954 = vmul.f32 %v3894, 0.5
        %v3955 = vmul.f32 %v3895, 0.5
        %v3956 = vmul.f32 %v3896, 0.5
        %v3957 = vmul.f32 %v3897, 0.5
        %v3958 = vmul.f32 %v3898, 0.5
        %v3959 = vmul.f32 %v3899, 0.5
        %v3960 = vmul.f32 %v3900, 0.5
        %v3961 = vmul.f32 %v3901, 0.5
        %v3962 = vmul.f32 %v3902, 0.5
        %v3963 = vmul.f32 %v3903, 0.5
        %v3964 = vmul.f32 %v3904, 0.5
        %v3965 = vmul.f32 %v3905, 0.5
        %v3966 = vmul.f32 %v3906, 0.5
        %v3967 = vmul.f32 %v3907, 0.5
        %v3968 = vmul.f32 %v3908, 0.5
        %v3969 = vadd.f32 %v3909, 0.5
        %v3970 = vadd.f32 %v3910, 0.5
        %v3971 = vadd.f32 %v3911, 0.5
        %v3972 = vadd.f32 %v3912, 0.5
        %v3973 = vadd.f32 %v3913, 0.5
        %v3974 = vadd.f32 %v3914, 0.5
        %v3975 = vadd.f32 %v3915, 0.5
        %v3976 = vadd.f32 %v3916, 0.5
        %v3977 = vadd.f32 %v3917, 0.5
        %v3978 = vadd.f32 %v3918, 0.5
        %v3979 = vadd.f32 %v3919, 0.5
        %v3980 = vadd.f32 %v3920, 0.5
        %v3981 = vadd.f32 %v3921, 0.5
        %v3982 = vadd.f32 %v3922, 0.5
        %v3983 = vadd.f32 %v3923, 0.5
        %v3984 = vadd.f32 %v3924, 0.5
        %v3985 = vadd.f32 %v3925, 0.5
        %v3986 = vadd.f32 %v3926, 0.5
        %v3987 = vadd.f32 %v3927, 0.5
        %v3988 = vadd.f32 %v3928, 0.5
        %v3989 = vadd.f32 %v3929, 0.5
        %v3990 = vadd.f32 %v3930, 0.5
        %v3991 = vadd.f32 %v3931, 0.5
        %v3992 = vadd.f32 %v3932, 0.5
        %v3993 = vadd.f32 %v3933, 0.5
        %v3994 = vadd.f32 %v3934, 0.5
        %v3995 = vadd.f32 %v3935, 0.5
        %v3996 = vadd.f32 %v3936, 0.5
        %v3997 = vadd.f32 %v3937, 0.5
        %v3998 = vadd.f32 %v3938, 0.5
        %v3999 = vadd.f32 %v3939, 0.5
        %v4000 = vadd.f32 %v3940, 0.5
        %v4001 = vadd.f32 %v3941, 0.5
        %v4002 = vadd.f32 %v3942, 0.5
        %v4003 = vadd.f32 %v3943, 0.5
        %v4004 = vadd.f32 %v3944, 0.5
        %v4005 = vadd.f32 %v3945, 0.5
        %v4006 = vadd.f32 %v3946, 0.5
        %v4007 = vadd.f32 %v3947, 0.5
        %v4008 = vadd.f32 %v3948, 0.5
        %v4009 = vadd.f32 %v3949, 0.5
        %v4010 = vadd.f32 %v3950, 0.5
        %v4011 = vadd.f32 %v3951, 0.5
        %v4012 = vadd.f32 %v3952, 0.5
        %v4013 = vadd.f32 %v3953, 0.5
        %v4014 = vadd.f32 %v3954, 0.5
        %v4015 = vadd.f32 %v3955, 0.5
        %v4016 = vadd.f32 %v3956, 0.5
        %v4017 = vadd.f32 %v3957, 0.5
        %v4018 = vadd.f32 %v3958, 0.5
        %v4019 = vadd.f32 %v3959, 0.5
        %v4020 = vadd.f32 %v3960, 0.5
        %v4021 = vadd.f32 %v3961, 0.5
        %v4022 = vadd.f32 %v3962, 0.5
        %v4023 = vadd.f32 %v3963, 0.5
        %v4024 = vadd.f32 %v3964, 0.5
        %v4025 = vadd.f32 %v3965, 0.5
        %v4026 = vadd.f32 %v3966, 0.5
        %v4027 = vadd.f32 %v3967, 0.5
        %v4028 = vadd.f32 %v3968, 0.5
        %v4029 = vmul.f32 %v3729, %v3969
        %v4030 = vmul.f32 %v3730, %v3970
        %v4031 = vmul.f32 %v3731, %v3971
        %v4032 = vmul.f32 %v3732, %v3972
        %v4033 = vmul.f32 %v3733, %v3973
        %v4034 = vmul.f32 %v3734, %v3974
        %v4035 = vmul.f32 %v3735, %v3975
        %v4036 = vmul.f32 %v3736, %v3976
        %v4037 = vmul.f32 %v3737, %v3977
        %v4038 = vmul.f32 %v3738, %v3978
        %v4039 = vmul.f32 %v3739, %v3979
        %v4040 = vmul.f32 %v3740, %v3980
        %v4041 = vmul.f32 %v3741, %v3981
        %v4042 = vmul.f32 %v3742, %v3982
        %v4043 = vmul.f32 %v3743, %v3983
        %v4044 = vmul.f32 %v3744, %v3984
        %v4045 = vmul.f32 %v3745, %v3985
        %v4046 = vmul.f32 %v3746, %v3986
        %v4047 = vmul.f32 %v3747, %v3987
        %v4048 = vmul.f32 %v3748, %v3988
        %v4049 = vmul.f32 %v3749, %v3989
        %v4050 = vmul.f32 %v3750, %v3990
        %v4051 = vmul.f32 %v3751, %v3991
        %v4052 = vmul.f32 %v3752, %v3992
        %v4053 = vmul.f32 %v3753, %v3993
        %v4054 = vmul.f32 %v3754, %v3994
        %v4055 = vmul.f32 %v3755, %v3995
        %v4056 = vmul.f32 %v3756, %v3996
        %v4057 = vmul.f32 %v3757, %v3997
        %v4058 = vmul.f32 %v3758, %v3998
        %v4059 = vmul.f32 %v3759, %v3999
        %v4060 = vmul.f32 %v3760, %v4000
        %v4061 = vmul.f32 %v3761, %v4001
        %v4062 = vmul.f32 %v3762, %v4002
        %v4063 = vmul.f32 %v3763, %v4003
        %v4064 = vmul.f32 %v3764, %v4004
        %v4065 = vmul.f32 %v3765, %v4005
        %v4066 = vmul.f32 %v3766, %v4006
        %v4067 = vmul.f32 %v3767, %v4007
        %v4068 = vmul.f32 %v3768, %v4008
        %v4069 = vmul.f32 %v3769, %v4009
        %v4070 = vmul.f32 %v3770, %v4010
        %v4071 = vmul.f32 %v3771, %v4011
        %v4072 = vmul.f32 %v3772, %v4012
        %v4073 = vmul.f32 %v3773, %v4013
        %v4074 = vmul.f32 %v3774, %v4014
        %v4075 = vmul.f32 %v3775, %v4015
        %v4076 = vmul.f32 %v3776, %v4016
        %v4077 = vmul.f32 %v3777, %v4017
        %v4078 = vmul.f32 %v3778, %v4018
        %v4079 = vmul.f32 %v3779, %v4019
        %v4080 = vmul.f32 %v3780, %v4020
        %v4081 = vmul.f32 %v3781, %v4021
        %v4082 = vmul.f32 %v3782, %v4022
        %v4083 = vmul.f32 %v3783, %v4023
        %v4084 = vmul.f32 %v3784, %v4024
        %v4085 = vmul.f32 %v3785, %v4025
        %v4086 = vmul.f32 %v3786, %v4026
        %v4087 = vmul.f32 %v3787, %v4027
        %v4088 = vmul.f32 %v3788, %v4028
        %4089 = vrot.lane.b32.xlu0 %v4029, 1
        %v4090 = vpop.permute.xlu0 %4089
        %4091 = vrot.lane.b32.xlu0 %v4034, 1
        %v4092 = vpop.permute.xlu0 %4091
        %4093 = vrot.lane.b32.xlu0 %v4039, 1
        %v4094 = vpop.permute.xlu0 %4093
        %4095 = vrot.lane.b32.xlu0 %v4044, 1
        %v4096 = vpop.permute.xlu0 %4095
        %4097 = vrot.lane.b32.xlu0 %v4049, 1
        %v4098 = vpop.permute.xlu0 %4097
        %4099 = vrot.lane.b32.xlu0 %v4054, 1
        %v4100 = vpop.permute.xlu0 %4099
        %4101 = vrot.lane.b32.xlu0 %v4059, 1
        %v4102 = vpop.permute.xlu0 %4101
        %4103 = vrot.lane.b32.xlu0 %v4064, 1
        %v4104 = vpop.permute.xlu0 %4103
        %4105 = vrot.lane.b32.xlu0 %v4069, 1
        %v4106 = vpop.permute.xlu0 %4105
        %4107 = vrot.lane.b32.xlu0 %v4074, 1
        %v4108 = vpop.permute.xlu0 %4107
        %4109 = vrot.lane.b32.xlu0 %v4079, 1
        %v4110 = vpop.permute.xlu0 %4109
        %4111 = vrot.lane.b32.xlu0 %v4084, 1
        %v4112 = vpop.permute.xlu0 %4111
        %4113 = vrot.lane.b32.xlu0 %v4030, 1
        %v4114 = vpop.permute.xlu0 %4113
        %4115 = vrot.lane.b32.xlu0 %v4035, 1
        %v4116 = vpop.permute.xlu0 %4115
        %4117 = vrot.lane.b32.xlu0 %v4040, 1
        %v4118 = vpop.permute.xlu0 %4117
        %4119 = vrot.lane.b32.xlu0 %v4045, 1
        %v4120 = vpop.permute.xlu0 %4119
        %4121 = vrot.lane.b32.xlu0 %v4050, 1
        %v4122 = vpop.permute.xlu0 %4121
        %4123 = vrot.lane.b32.xlu0 %v4055, 1
        %v4124 = vpop.permute.xlu0 %4123
        %4125 = vrot.lane.b32.xlu0 %v4060, 1
        %v4126 = vpop.permute.xlu0 %4125
        %4127 = vrot.lane.b32.xlu0 %v4065, 1
        %v4128 = vpop.permute.xlu0 %4127
        %4129 = vrot.lane.b32.xlu0 %v4070, 1
        %v4130 = vpop.permute.xlu0 %4129
        %4131 = vrot.lane.b32.xlu0 %v4075, 1
        %v4132 = vpop.permute.xlu0 %4131
        %4133 = vrot.lane.b32.xlu0 %v4080, 1
        %v4134 = vpop.permute.xlu0 %4133
        %4135 = vrot.lane.b32.xlu0 %v4085, 1
        %v4136 = vpop.permute.xlu0 %4135
        %4137 = vrot.lane.b32.xlu0 %v4031, 1
        %v4138 = vpop.permute.xlu0 %4137
        %4139 = vrot.lane.b32.xlu0 %v4036, 1
        %v4140 = vpop.permute.xlu0 %4139
        %4141 = vrot.lane.b32.xlu0 %v4041, 1
        %v4142 = vpop.permute.xlu0 %4141
        %4143 = vrot.lane.b32.xlu0 %v4046, 1
        %v4144 = vpop.permute.xlu0 %4143
        %4145 = vrot.lane.b32.xlu0 %v4051, 1
        %v4146 = vpop.permute.xlu0 %4145
        %4147 = vrot.lane.b32.xlu0 %v4056, 1
        %v4148 = vpop.permute.xlu0 %4147
        %4149 = vrot.lane.b32.xlu0 %v4061, 1
        %v4150 = vpop.permute.xlu0 %4149
        %4151 = vrot.lane.b32.xlu0 %v4066, 1
        %v4152 = vpop.permute.xlu0 %4151
        %4153 = vrot.lane.b32.xlu0 %v4071, 1
        %v4154 = vpop.permute.xlu0 %4153
        %4155 = vrot.lane.b32.xlu0 %v4076, 1
        %v4156 = vpop.permute.xlu0 %4155
        %4157 = vrot.lane.b32.xlu0 %v4081, 1
        %v4158 = vpop.permute.xlu0 %4157
        %4159 = vrot.lane.b32.xlu0 %v4086, 1
        %v4160 = vpop.permute.xlu0 %4159
        %4161 = vrot.lane.b32.xlu0 %v4032, 1
        %v4162 = vpop.permute.xlu0 %4161
        %4163 = vrot.lane.b32.xlu0 %v4037, 1
        %v4164 = vpop.permute.xlu0 %4163
        %4165 = vrot.lane.b32.xlu0 %v4042, 1
        %v4166 = vpop.permute.xlu0 %4165
        %4167 = vrot.lane.b32.xlu0 %v4047, 1
        %v4168 = vpop.permute.xlu0 %4167
        %4169 = vrot.lane.b32.xlu0 %v4052, 1
        %v4170 = vpop.permute.xlu0 %4169
        %4171 = vrot.lane.b32.xlu0 %v4057, 1
        %v4172 = vpop.permute.xlu0 %4171
        %4173 = vrot.lane.b32.xlu0 %v4062, 1
        %v4174 = vpop.permute.xlu0 %4173
        %4175 = vrot.lane.b32.xlu0 %v4067, 1
        %v4176 = vpop.permute.xlu0 %4175
        %4177 = vrot.lane.b32.xlu0 %v4072, 1
        %v4178 = vpop.permute.xlu0 %4177
        %4179 = vrot.lane.b32.xlu0 %v4077, 1
        %v4180 = vpop.permute.xlu0 %4179
        %4181 = vrot.lane.b32.xlu0 %v4082, 1
        %v4182 = vpop.permute.xlu0 %4181
        %4183 = vrot.lane.b32.xlu0 %v4087, 1
        %v4184 = vpop.permute.xlu0 %4183
        %4185 = vrot.lane.b32.xlu0 %v4033, 1
        %v4186 = vpop.permute.xlu0 %4185
        %4187 = vrot.lane.b32.xlu0 %v4038, 1
        %v4188 = vpop.permute.xlu0 %4187
        %4189 = vrot.lane.b32.xlu0 %v4043, 1
        %v4190 = vpop.permute.xlu0 %4189
        %4191 = vrot.lane.b32.xlu0 %v4048, 1
        %v4192 = vpop.permute.xlu0 %4191
        %4193 = vrot.lane.b32.xlu0 %v4053, 1
        %v4194 = vpop.permute.xlu0 %4193
        %4195 = vrot.lane.b32.xlu0 %v4058, 1
        %v4196 = vpop.permute.xlu0 %4195
        %4197 = vrot.lane.b32.xlu0 %v4063, 1
        %v4198 = vpop.permute.xlu0 %4197
        %4199 = vrot.lane.b32.xlu0 %v4068, 1
        %v4200 = vpop.permute.xlu0 %4199
        %4201 = vrot.lane.b32.xlu0 %v4073, 1
        %v4202 = vpop.permute.xlu0 %4201
        %4203 = vrot.lane.b32.xlu0 %v4078, 1
        %v4204 = vpop.permute.xlu0 %4203
        %4205 = vrot.lane.b32.xlu0 %v4083, 1
        %v4206 = vpop.permute.xlu0 %4205
        %4207 = vrot.lane.b32.xlu0 %v4088, 1
        %v4208 = vpop.permute.xlu0 %4207
        %v4209 = vsel %vm713, %v4162, %v4186
        %v4210 = vsel %vm713, %v4164, %v4188
        %v4211 = vsel %vm713, %v4166, %v4190
        %v4212 = vsel %vm713, %v4168, %v4192
        %v4213 = vsel %vm713, %v4170, %v4194
        %v4214 = vsel %vm713, %v4172, %v4196
        %v4215 = vsel %vm713, %v4174, %v4198
        %v4216 = vsel %vm713, %v4176, %v4200
        %v4217 = vsel %vm713, %v4178, %v4202
        %v4218 = vsel %vm713, %v4180, %v4204
        %v4219 = vsel %vm713, %v4182, %v4206
        %v4220 = vsel %vm713, %v4184, %v4208
        %v4221 = vsel %vm713, %v4138, %v4162
        %v4222 = vsel %vm713, %v4140, %v4164
        %v4223 = vsel %vm713, %v4142, %v4166
        %v4224 = vsel %vm713, %v4144, %v4168
        %v4225 = vsel %vm713, %v4146, %v4170
        %v4226 = vsel %vm713, %v4148, %v4172
        %v4227 = vsel %vm713, %v4150, %v4174
        %v4228 = vsel %vm713, %v4152, %v4176
        %v4229 = vsel %vm713, %v4154, %v4178
        %v4230 = vsel %vm713, %v4156, %v4180
        %v4231 = vsel %vm713, %v4158, %v4182
        %v4232 = vsel %vm713, %v4160, %v4184
        %v4233 = vsel %vm713, %v4114, %v4138
        %v4234 = vsel %vm713, %v4116, %v4140
        %v4235 = vsel %vm713, %v4118, %v4142
        %v4236 = vsel %vm713, %v4120, %v4144
        %v4237 = vsel %vm713, %v4122, %v4146
        %v4238 = vsel %vm713, %v4124, %v4148
        %v4239 = vsel %vm713, %v4126, %v4150
        %v4240 = vsel %vm713, %v4128, %v4152
        %v4241 = vsel %vm713, %v4130, %v4154
        %v4242 = vsel %vm713, %v4132, %v4156
        %v4243 = vsel %vm713, %v4134, %v4158
        %v4244 = vsel %vm713, %v4136, %v4160
        %v4245 = vsel %vm713, %v4090, %v4114
        %v4246 = vsel %vm713, %v4092, %v4116
        %v4247 = vsel %vm713, %v4094, %v4118
        %v4248 = vsel %vm713, %v4096, %v4120
        %v4249 = vsel %vm713, %v4098, %v4122
        %v4250 = vsel %vm713, %v4100, %v4124
        %v4251 = vsel %vm713, %v4102, %v4126
        %v4252 = vsel %vm713, %v4104, %v4128
        %v4253 = vsel %vm713, %v4106, %v4130
        %v4254 = vsel %vm713, %v4108, %v4132
        %v4255 = vsel %vm713, %v4110, %v4134
        %v4256 = vsel %vm713, %v4112, %v4136
        %v4257 = vsel %vm713, %v4186, %v4090
        %v4258 = vsel %vm713, %v4188, %v4092
        %v4259 = vsel %vm713, %v4190, %v4094
        %v4260 = vsel %vm713, %v4192, %v4096
        %v4261 = vsel %vm713, %v4194, %v4098
        %v4262 = vsel %vm713, %v4196, %v4100
        %v4263 = vsel %vm713, %v4198, %v4102
        %v4264 = vsel %vm713, %v4200, %v4104
        %v4265 = vsel %vm713, %v4202, %v4106
        %v4266 = vsel %vm713, %v4204, %v4108
        %v4267 = vsel %vm713, %v4206, %v4110
        %v4268 = vsel %vm713, %v4208, %v4112
        %v4269 = vsel %vm573, %v4029, %v4257
        %v4270 = vsel %vm574, %v4030, %v4245
        %v4271 = vsel %vm575, %v4031, %v4233
        %v4272 = vsel %vm576, %v4032, %v4221
        %v4273 = vsel %vm577, %v4033, %v4209
        %v4274 = vsel %vm573, %v4034, %v4258
        %v4275 = vsel %vm574, %v4035, %v4246
        %v4276 = vsel %vm575, %v4036, %v4234
        %v4277 = vsel %vm576, %v4037, %v4222
        %v4278 = vsel %vm577, %v4038, %v4210
        %v4279 = vsel %vm573, %v4039, %v4259
        %v4280 = vsel %vm574, %v4040, %v4247
        %v4281 = vsel %vm575, %v4041, %v4235
        %v4282 = vsel %vm576, %v4042, %v4223
        %v4283 = vsel %vm577, %v4043, %v4211
        %v4284 = vsel %vm573, %v4044, %v4260
        %v4285 = vsel %vm574, %v4045, %v4248
        %v4286 = vsel %vm575, %v4046, %v4236
        %v4287 = vsel %vm576, %v4047, %v4224
        %v4288 = vsel %vm577, %v4048, %v4212
        %v4289 = vsel %vm573, %v4049, %v4261
        %v4290 = vsel %vm574, %v4050, %v4249
        %v4291 = vsel %vm575, %v4051, %v4237
        %v4292 = vsel %vm576, %v4052, %v4225
        %v4293 = vsel %vm577, %v4053, %v4213
        %v4294 = vsel %vm573, %v4054, %v4262
        %v4295 = vsel %vm574, %v4055, %v4250
        %v4296 = vsel %vm575, %v4056, %v4238
        %v4297 = vsel %vm576, %v4057, %v4226
        %v4298 = vsel %vm577, %v4058, %v4214
        %v4299 = vsel %vm573, %v4059, %v4263
        %v4300 = vsel %vm574, %v4060, %v4251
        %v4301 = vsel %vm575, %v4061, %v4239
        %v4302 = vsel %vm576, %v4062, %v4227
        %v4303 = vsel %vm577, %v4063, %v4215
        %v4304 = vsel %vm573, %v4064, %v4264
        %v4305 = vsel %vm574, %v4065, %v4252
        %v4306 = vsel %vm575, %v4066, %v4240
        %v4307 = vsel %vm576, %v4067, %v4228
        %v4308 = vsel %vm577, %v4068, %v4216
        %v4309 = vsel %vm573, %v4069, %v4265
        %v4310 = vsel %vm574, %v4070, %v4253
        %v4311 = vsel %vm575, %v4071, %v4241
        %v4312 = vsel %vm576, %v4072, %v4229
        %v4313 = vsel %vm577, %v4073, %v4217
        %v4314 = vsel %vm573, %v4074, %v4266
        %v4315 = vsel %vm574, %v4075, %v4254
        %v4316 = vsel %vm575, %v4076, %v4242
        %v4317 = vsel %vm576, %v4077, %v4230
        %v4318 = vsel %vm577, %v4078, %v4218
        %v4319 = vsel %vm573, %v4079, %v4267
        %v4320 = vsel %vm574, %v4080, %v4255
        %v4321 = vsel %vm575, %v4081, %v4243
        %v4322 = vsel %vm576, %v4082, %v4231
        %v4323 = vsel %vm577, %v4083, %v4219
        %v4324 = vsel %vm573, %v4084, %v4268
        %v4325 = vsel %vm574, %v4085, %v4256
        %v4326 = vsel %vm575, %v4086, %v4244
        %v4327 = vsel %vm576, %v4087, %v4232
        %v4328 = vsel %vm577, %v4088, %v4220
        %4329 = vrot.lane.b32.xlu0 %v4029, 127
        %v4330 = vpop.permute.xlu0 %4329
        %4331 = vrot.lane.b32.xlu0 %v4034, 127
        %v4332 = vpop.permute.xlu0 %4331
        %4333 = vrot.lane.b32.xlu0 %v4039, 127
        %v4334 = vpop.permute.xlu0 %4333
        %4335 = vrot.lane.b32.xlu0 %v4044, 127
        %v4336 = vpop.permute.xlu0 %4335
        %4337 = vrot.lane.b32.xlu0 %v4049, 127
        %v4338 = vpop.permute.xlu0 %4337
        %4339 = vrot.lane.b32.xlu0 %v4054, 127
        %v4340 = vpop.permute.xlu0 %4339
        %4341 = vrot.lane.b32.xlu0 %v4059, 127
        %v4342 = vpop.permute.xlu0 %4341
        %4343 = vrot.lane.b32.xlu0 %v4064, 127
        %v4344 = vpop.permute.xlu0 %4343
        %4345 = vrot.lane.b32.xlu0 %v4069, 127
        %v4346 = vpop.permute.xlu0 %4345
        %4347 = vrot.lane.b32.xlu0 %v4074, 127
        %v4348 = vpop.permute.xlu0 %4347
        %4349 = vrot.lane.b32.xlu0 %v4079, 127
        %v4350 = vpop.permute.xlu0 %4349
        %4351 = vrot.lane.b32.xlu0 %v4084, 127
        %v4352 = vpop.permute.xlu0 %4351
        %4353 = vrot.lane.b32.xlu0 %v4030, 127
        %v4354 = vpop.permute.xlu0 %4353
        %4355 = vrot.lane.b32.xlu0 %v4035, 127
        %v4356 = vpop.permute.xlu0 %4355
        %4357 = vrot.lane.b32.xlu0 %v4040, 127
        %v4358 = vpop.permute.xlu0 %4357
        %4359 = vrot.lane.b32.xlu0 %v4045, 127
        %v4360 = vpop.permute.xlu0 %4359
        %4361 = vrot.lane.b32.xlu0 %v4050, 127
        %v4362 = vpop.permute.xlu0 %4361
        %4363 = vrot.lane.b32.xlu0 %v4055, 127
        %v4364 = vpop.permute.xlu0 %4363
        %4365 = vrot.lane.b32.xlu0 %v4060, 127
        %v4366 = vpop.permute.xlu0 %4365
        %4367 = vrot.lane.b32.xlu0 %v4065, 127
        %v4368 = vpop.permute.xlu0 %4367
        %4369 = vrot.lane.b32.xlu0 %v4070, 127
        %v4370 = vpop.permute.xlu0 %4369
        %4371 = vrot.lane.b32.xlu0 %v4075, 127
        %v4372 = vpop.permute.xlu0 %4371
        %4373 = vrot.lane.b32.xlu0 %v4080, 127
        %v4374 = vpop.permute.xlu0 %4373
        %4375 = vrot.lane.b32.xlu0 %v4085, 127
        %v4376 = vpop.permute.xlu0 %4375
        %4377 = vrot.lane.b32.xlu0 %v4031, 127
        %v4378 = vpop.permute.xlu0 %4377
        %4379 = vrot.lane.b32.xlu0 %v4036, 127
        %v4380 = vpop.permute.xlu0 %4379
        %4381 = vrot.lane.b32.xlu0 %v4041, 127
        %v4382 = vpop.permute.xlu0 %4381
        %4383 = vrot.lane.b32.xlu0 %v4046, 127
        %v4384 = vpop.permute.xlu0 %4383
        %4385 = vrot.lane.b32.xlu0 %v4051, 127
        %v4386 = vpop.permute.xlu0 %4385
        %4387 = vrot.lane.b32.xlu0 %v4056, 127
        %v4388 = vpop.permute.xlu0 %4387
        %4389 = vrot.lane.b32.xlu0 %v4061, 127
        %v4390 = vpop.permute.xlu0 %4389
        %4391 = vrot.lane.b32.xlu0 %v4066, 127
        %v4392 = vpop.permute.xlu0 %4391
        %4393 = vrot.lane.b32.xlu0 %v4071, 127
        %v4394 = vpop.permute.xlu0 %4393
        %4395 = vrot.lane.b32.xlu0 %v4076, 127
        %v4396 = vpop.permute.xlu0 %4395
        %4397 = vrot.lane.b32.xlu0 %v4081, 127
        %v4398 = vpop.permute.xlu0 %4397
        %4399 = vrot.lane.b32.xlu0 %v4086, 127
        %v4400 = vpop.permute.xlu0 %4399
        %4401 = vrot.lane.b32.xlu0 %v4032, 127
        %v4402 = vpop.permute.xlu0 %4401
        %4403 = vrot.lane.b32.xlu0 %v4037, 127
        %v4404 = vpop.permute.xlu0 %4403
        %4405 = vrot.lane.b32.xlu0 %v4042, 127
        %v4406 = vpop.permute.xlu0 %4405
        %4407 = vrot.lane.b32.xlu0 %v4047, 127
        %v4408 = vpop.permute.xlu0 %4407
        %4409 = vrot.lane.b32.xlu0 %v4052, 127
        %v4410 = vpop.permute.xlu0 %4409
        %4411 = vrot.lane.b32.xlu0 %v4057, 127
        %v4412 = vpop.permute.xlu0 %4411
        %4413 = vrot.lane.b32.xlu0 %v4062, 127
        %v4414 = vpop.permute.xlu0 %4413
        %4415 = vrot.lane.b32.xlu0 %v4067, 127
        %v4416 = vpop.permute.xlu0 %4415
        %4417 = vrot.lane.b32.xlu0 %v4072, 127
        %v4418 = vpop.permute.xlu0 %4417
        %4419 = vrot.lane.b32.xlu0 %v4077, 127
        %v4420 = vpop.permute.xlu0 %4419
        %4421 = vrot.lane.b32.xlu0 %v4082, 127
        %v4422 = vpop.permute.xlu0 %4421
        %4423 = vrot.lane.b32.xlu0 %v4087, 127
        %v4424 = vpop.permute.xlu0 %4423
        %4425 = vrot.lane.b32.xlu0 %v4033, 127
        %v4426 = vpop.permute.xlu0 %4425
        %4427 = vrot.lane.b32.xlu0 %v4038, 127
        %v4428 = vpop.permute.xlu0 %4427
        %4429 = vrot.lane.b32.xlu0 %v4043, 127
        %v4430 = vpop.permute.xlu0 %4429
        %4431 = vrot.lane.b32.xlu0 %v4048, 127
        %v4432 = vpop.permute.xlu0 %4431
        %4433 = vrot.lane.b32.xlu0 %v4053, 127
        %v4434 = vpop.permute.xlu0 %4433
        %4435 = vrot.lane.b32.xlu0 %v4058, 127
        %v4436 = vpop.permute.xlu0 %4435
        %4437 = vrot.lane.b32.xlu0 %v4063, 127
        %v4438 = vpop.permute.xlu0 %4437
        %4439 = vrot.lane.b32.xlu0 %v4068, 127
        %v4440 = vpop.permute.xlu0 %4439
        %4441 = vrot.lane.b32.xlu0 %v4073, 127
        %v4442 = vpop.permute.xlu0 %4441
        %4443 = vrot.lane.b32.xlu0 %v4078, 127
        %v4444 = vpop.permute.xlu0 %4443
        %4445 = vrot.lane.b32.xlu0 %v4083, 127
        %v4446 = vpop.permute.xlu0 %4445
        %4447 = vrot.lane.b32.xlu0 %v4088, 127
        %v4448 = vpop.permute.xlu0 %4447
        %v4449 = vsel %vm954, %v4402, %v4426
        %v4450 = vsel %vm954, %v4404, %v4428
        %v4451 = vsel %vm954, %v4406, %v4430
        %v4452 = vsel %vm954, %v4408, %v4432
        %v4453 = vsel %vm954, %v4410, %v4434
        %v4454 = vsel %vm954, %v4412, %v4436
        %v4455 = vsel %vm954, %v4414, %v4438
        %v4456 = vsel %vm954, %v4416, %v4440
        %v4457 = vsel %vm954, %v4418, %v4442
        %v4458 = vsel %vm954, %v4420, %v4444
        %v4459 = vsel %vm954, %v4422, %v4446
        %v4460 = vsel %vm954, %v4424, %v4448
        %v4461 = vsel %vm954, %v4378, %v4402
        %v4462 = vsel %vm954, %v4380, %v4404
        %v4463 = vsel %vm954, %v4382, %v4406
        %v4464 = vsel %vm954, %v4384, %v4408
        %v4465 = vsel %vm954, %v4386, %v4410
        %v4466 = vsel %vm954, %v4388, %v4412
        %v4467 = vsel %vm954, %v4390, %v4414
        %v4468 = vsel %vm954, %v4392, %v4416
        %v4469 = vsel %vm954, %v4394, %v4418
        %v4470 = vsel %vm954, %v4396, %v4420
        %v4471 = vsel %vm954, %v4398, %v4422
        %v4472 = vsel %vm954, %v4400, %v4424
        %v4473 = vsel %vm954, %v4354, %v4378
        %v4474 = vsel %vm954, %v4356, %v4380
        %v4475 = vsel %vm954, %v4358, %v4382
        %v4476 = vsel %vm954, %v4360, %v4384
        %v4477 = vsel %vm954, %v4362, %v4386
        %v4478 = vsel %vm954, %v4364, %v4388
        %v4479 = vsel %vm954, %v4366, %v4390
        %v4480 = vsel %vm954, %v4368, %v4392
        %v4481 = vsel %vm954, %v4370, %v4394
        %v4482 = vsel %vm954, %v4372, %v4396
        %v4483 = vsel %vm954, %v4374, %v4398
        %v4484 = vsel %vm954, %v4376, %v4400
        %v4485 = vsel %vm954, %v4330, %v4354
        %v4486 = vsel %vm954, %v4332, %v4356
        %v4487 = vsel %vm954, %v4334, %v4358
        %v4488 = vsel %vm954, %v4336, %v4360
        %v4489 = vsel %vm954, %v4338, %v4362
        %v4490 = vsel %vm954, %v4340, %v4364
        %v4491 = vsel %vm954, %v4342, %v4366
        %v4492 = vsel %vm954, %v4344, %v4368
        %v4493 = vsel %vm954, %v4346, %v4370
        %v4494 = vsel %vm954, %v4348, %v4372
        %v4495 = vsel %vm954, %v4350, %v4374
        %v4496 = vsel %vm954, %v4352, %v4376
        %v4497 = vsel %vm954, %v4426, %v4330
        %v4498 = vsel %vm954, %v4428, %v4332
        %v4499 = vsel %vm954, %v4430, %v4334
        %v4500 = vsel %vm954, %v4432, %v4336
        %v4501 = vsel %vm954, %v4434, %v4338
        %v4502 = vsel %vm954, %v4436, %v4340
        %v4503 = vsel %vm954, %v4438, %v4342
        %v4504 = vsel %vm954, %v4440, %v4344
        %v4505 = vsel %vm954, %v4442, %v4346
        %v4506 = vsel %vm954, %v4444, %v4348
        %v4507 = vsel %vm954, %v4446, %v4350
        %v4508 = vsel %vm954, %v4448, %v4352
        %v4510 = vperm.slane %v475, 0
        %v4511 = vperm.slane %v475, 1
        %v4512 = vperm.slane %v475, 2
        %v4513 = vperm.slane %v475, 3
        %v4514 = vperm.slane %v475, 4
        %v4520 = vmul.f32 %v4510, %v4269
        %v4521 = vmul.f32 %v4511, %v4270
        %v4522 = vmul.f32 %v4512, %v4271
        %v4523 = vmul.f32 %v4513, %v4272
        %v4524 = vmul.f32 %v4514, %v4273
        %v4525 = vmul.f32 %v4510, %v4274
        %v4526 = vmul.f32 %v4511, %v4275
        %v4527 = vmul.f32 %v4512, %v4276
        %v4528 = vmul.f32 %v4513, %v4277
        %v4529 = vmul.f32 %v4514, %v4278
        %v4530 = vmul.f32 %v4510, %v4279
        %v4531 = vmul.f32 %v4511, %v4280
        %v4532 = vmul.f32 %v4512, %v4281
        %v4533 = vmul.f32 %v4513, %v4282
        %v4534 = vmul.f32 %v4514, %v4283
        %v4535 = vmul.f32 %v4510, %v4284
        %v4536 = vmul.f32 %v4511, %v4285
        %v4537 = vmul.f32 %v4512, %v4286
        %v4538 = vmul.f32 %v4513, %v4287
        %v4539 = vmul.f32 %v4514, %v4288
        %v4540 = vmul.f32 %v4510, %v4289
        %v4541 = vmul.f32 %v4511, %v4290
        %v4542 = vmul.f32 %v4512, %v4291
        %v4543 = vmul.f32 %v4513, %v4292
        %v4544 = vmul.f32 %v4514, %v4293
        %v4545 = vmul.f32 %v4510, %v4294
        %v4546 = vmul.f32 %v4511, %v4295
        %v4547 = vmul.f32 %v4512, %v4296
        %v4548 = vmul.f32 %v4513, %v4297
        %v4549 = vmul.f32 %v4514, %v4298
        %v4550 = vmul.f32 %v4510, %v4299
        %v4551 = vmul.f32 %v4511, %v4300
        %v4552 = vmul.f32 %v4512, %v4301
        %v4553 = vmul.f32 %v4513, %v4302
        %v4554 = vmul.f32 %v4514, %v4303
        %v4555 = vmul.f32 %v4510, %v4304
        %v4556 = vmul.f32 %v4511, %v4305
        %v4557 = vmul.f32 %v4512, %v4306
        %v4558 = vmul.f32 %v4513, %v4307
        %v4559 = vmul.f32 %v4514, %v4308
        %v4560 = vmul.f32 %v4510, %v4309
        %v4561 = vmul.f32 %v4511, %v4310
        %v4562 = vmul.f32 %v4512, %v4311
        %v4563 = vmul.f32 %v4513, %v4312
        %v4564 = vmul.f32 %v4514, %v4313
        %v4565 = vmul.f32 %v4510, %v4314
        %v4566 = vmul.f32 %v4511, %v4315
        %v4567 = vmul.f32 %v4512, %v4316
        %v4568 = vmul.f32 %v4513, %v4317
        %v4569 = vmul.f32 %v4514, %v4318
        %v4570 = vmul.f32 %v4510, %v4319
        %v4571 = vmul.f32 %v4511, %v4320
        %v4572 = vmul.f32 %v4512, %v4321
        %v4573 = vmul.f32 %v4513, %v4322
        %v4574 = vmul.f32 %v4514, %v4323
        %v4575 = vmul.f32 %v4510, %v4324
        %v4576 = vmul.f32 %v4511, %v4325
        %v4577 = vmul.f32 %v4512, %v4326
        %v4578 = vmul.f32 %v4513, %v4327
        %v4579 = vmul.f32 %v4514, %v4328
        %v4581 = vperm.slane %v476, 0
        %v4582 = vperm.slane %v476, 1
        %v4583 = vperm.slane %v476, 2
        %v4584 = vperm.slane %v476, 3
        %v4585 = vperm.slane %v476, 4
        %v4591 = vmul.f32 %v4581, %v4485
        %v4592 = vmul.f32 %v4582, %v4473
        %v4593 = vmul.f32 %v4583, %v4461
        %v4594 = vmul.f32 %v4584, %v4449
        %v4595 = vmul.f32 %v4585, %v4497
        %v4596 = vmul.f32 %v4581, %v4486
        %v4597 = vmul.f32 %v4582, %v4474
        %v4598 = vmul.f32 %v4583, %v4462
        %v4599 = vmul.f32 %v4584, %v4450
        %v4600 = vmul.f32 %v4585, %v4498
        %v4601 = vmul.f32 %v4581, %v4487
        %v4602 = vmul.f32 %v4582, %v4475
        %v4603 = vmul.f32 %v4583, %v4463
        %v4604 = vmul.f32 %v4584, %v4451
        %v4605 = vmul.f32 %v4585, %v4499
        %v4606 = vmul.f32 %v4581, %v4488
        %v4607 = vmul.f32 %v4582, %v4476
        %v4608 = vmul.f32 %v4583, %v4464
        %v4609 = vmul.f32 %v4584, %v4452
        %v4610 = vmul.f32 %v4585, %v4500
        %v4611 = vmul.f32 %v4581, %v4489
        %v4612 = vmul.f32 %v4582, %v4477
        %v4613 = vmul.f32 %v4583, %v4465
        %v4614 = vmul.f32 %v4584, %v4453
        %v4615 = vmul.f32 %v4585, %v4501
        %v4616 = vmul.f32 %v4581, %v4490
        %v4617 = vmul.f32 %v4582, %v4478
        %v4618 = vmul.f32 %v4583, %v4466
        %v4619 = vmul.f32 %v4584, %v4454
        %v4620 = vmul.f32 %v4585, %v4502
        %v4621 = vmul.f32 %v4581, %v4491
        %v4622 = vmul.f32 %v4582, %v4479
        %v4623 = vmul.f32 %v4583, %v4467
        %v4624 = vmul.f32 %v4584, %v4455
        %v4625 = vmul.f32 %v4585, %v4503
        %v4626 = vmul.f32 %v4581, %v4492
        %v4627 = vmul.f32 %v4582, %v4480
        %v4628 = vmul.f32 %v4583, %v4468
        %v4629 = vmul.f32 %v4584, %v4456
        %v4630 = vmul.f32 %v4585, %v4504
        %v4631 = vmul.f32 %v4581, %v4493
        %v4632 = vmul.f32 %v4582, %v4481
        %v4633 = vmul.f32 %v4583, %v4469
        %v4634 = vmul.f32 %v4584, %v4457
        %v4635 = vmul.f32 %v4585, %v4505
        %v4636 = vmul.f32 %v4581, %v4494
        %v4637 = vmul.f32 %v4582, %v4482
        %v4638 = vmul.f32 %v4583, %v4470
        %v4639 = vmul.f32 %v4584, %v4458
        %v4640 = vmul.f32 %v4585, %v4506
        %v4641 = vmul.f32 %v4581, %v4495
        %v4642 = vmul.f32 %v4582, %v4483
        %v4643 = vmul.f32 %v4583, %v4471
        %v4644 = vmul.f32 %v4584, %v4459
        %v4645 = vmul.f32 %v4585, %v4507
        %v4646 = vmul.f32 %v4581, %v4496
        %v4647 = vmul.f32 %v4582, %v4484
        %v4648 = vmul.f32 %v4583, %v4472
        %v4649 = vmul.f32 %v4584, %v4460
        %v4650 = vmul.f32 %v4585, %v4508
        %v4651 = vadd.f32 %v4520, %v4591
        %v4652 = vadd.f32 %v4521, %v4592
        %v4653 = vadd.f32 %v4522, %v4593
        %v4654 = vadd.f32 %v4523, %v4594
        %v4655 = vadd.f32 %v4524, %v4595
        %v4656 = vadd.f32 %v4525, %v4596
        %v4657 = vadd.f32 %v4526, %v4597
        %v4658 = vadd.f32 %v4527, %v4598
        %v4659 = vadd.f32 %v4528, %v4599
        %v4660 = vadd.f32 %v4529, %v4600
        %v4661 = vadd.f32 %v4530, %v4601
        %v4662 = vadd.f32 %v4531, %v4602
        %v4663 = vadd.f32 %v4532, %v4603
        %v4664 = vadd.f32 %v4533, %v4604
        %v4665 = vadd.f32 %v4534, %v4605
        %v4666 = vadd.f32 %v4535, %v4606
        %v4667 = vadd.f32 %v4536, %v4607
        %v4668 = vadd.f32 %v4537, %v4608
        %v4669 = vadd.f32 %v4538, %v4609
        %v4670 = vadd.f32 %v4539, %v4610
        %v4671 = vadd.f32 %v4540, %v4611
        %v4672 = vadd.f32 %v4541, %v4612
        %v4673 = vadd.f32 %v4542, %v4613
        %v4674 = vadd.f32 %v4543, %v4614
        %v4675 = vadd.f32 %v4544, %v4615
        %v4676 = vadd.f32 %v4545, %v4616
        %v4677 = vadd.f32 %v4546, %v4617
        %v4678 = vadd.f32 %v4547, %v4618
        %v4679 = vadd.f32 %v4548, %v4619
        %v4680 = vadd.f32 %v4549, %v4620
        %v4681 = vadd.f32 %v4550, %v4621
        %v4682 = vadd.f32 %v4551, %v4622
        %v4683 = vadd.f32 %v4552, %v4623
        %v4684 = vadd.f32 %v4553, %v4624
        %v4685 = vadd.f32 %v4554, %v4625
        %v4686 = vadd.f32 %v4555, %v4626
        %v4687 = vadd.f32 %v4556, %v4627
        %v4688 = vadd.f32 %v4557, %v4628
        %v4689 = vadd.f32 %v4558, %v4629
        %v4690 = vadd.f32 %v4559, %v4630
        %v4691 = vadd.f32 %v4560, %v4631
        %v4692 = vadd.f32 %v4561, %v4632
        %v4693 = vadd.f32 %v4562, %v4633
        %v4694 = vadd.f32 %v4563, %v4634
        %v4695 = vadd.f32 %v4564, %v4635
        %v4696 = vadd.f32 %v4565, %v4636
        %v4697 = vadd.f32 %v4566, %v4637
        %v4698 = vadd.f32 %v4567, %v4638
        %v4699 = vadd.f32 %v4568, %v4639
        %v4700 = vadd.f32 %v4569, %v4640
        %v4701 = vadd.f32 %v4570, %v4641
        %v4702 = vadd.f32 %v4571, %v4642
        %v4703 = vadd.f32 %v4572, %v4643
        %v4704 = vadd.f32 %v4573, %v4644
        %v4705 = vadd.f32 %v4574, %v4645
        %v4706 = vadd.f32 %v4575, %v4646
        %v4707 = vadd.f32 %v4576, %v4647
        %v4708 = vadd.f32 %v4577, %v4648
        %v4709 = vadd.f32 %v4578, %v4649
        %v4710 = vadd.f32 %v4579, %v4650
        %4711 = vrot.lane.b32.xlu0 %v4651, 1
        %v4712 = vpop.permute.xlu0 %4711
        %4713 = vrot.lane.b32.xlu0 %v4656, 1
        %v4714 = vpop.permute.xlu0 %4713
        %4715 = vrot.lane.b32.xlu0 %v4661, 1
        %v4716 = vpop.permute.xlu0 %4715
        %4717 = vrot.lane.b32.xlu0 %v4666, 1
        %v4718 = vpop.permute.xlu0 %4717
        %4719 = vrot.lane.b32.xlu0 %v4671, 1
        %v4720 = vpop.permute.xlu0 %4719
        %4721 = vrot.lane.b32.xlu0 %v4676, 1
        %v4722 = vpop.permute.xlu0 %4721
        %4723 = vrot.lane.b32.xlu0 %v4681, 1
        %v4724 = vpop.permute.xlu0 %4723
        %4725 = vrot.lane.b32.xlu0 %v4686, 1
        %v4726 = vpop.permute.xlu0 %4725
        %4727 = vrot.lane.b32.xlu0 %v4691, 1
        %v4728 = vpop.permute.xlu0 %4727
        %4729 = vrot.lane.b32.xlu0 %v4696, 1
        %v4730 = vpop.permute.xlu0 %4729
        %4731 = vrot.lane.b32.xlu0 %v4701, 1
        %v4732 = vpop.permute.xlu0 %4731
        %4733 = vrot.lane.b32.xlu0 %v4706, 1
        %v4734 = vpop.permute.xlu0 %4733
        %4735 = vrot.lane.b32.xlu0 %v4652, 1
        %v4736 = vpop.permute.xlu0 %4735
        %4737 = vrot.lane.b32.xlu0 %v4657, 1
        %v4738 = vpop.permute.xlu0 %4737
        %4739 = vrot.lane.b32.xlu0 %v4662, 1
        %v4740 = vpop.permute.xlu0 %4739
        %4741 = vrot.lane.b32.xlu0 %v4667, 1
        %v4742 = vpop.permute.xlu0 %4741
        %4743 = vrot.lane.b32.xlu0 %v4672, 1
        %v4744 = vpop.permute.xlu0 %4743
        %4745 = vrot.lane.b32.xlu0 %v4677, 1
        %v4746 = vpop.permute.xlu0 %4745
        %4747 = vrot.lane.b32.xlu0 %v4682, 1
        %v4748 = vpop.permute.xlu0 %4747
        %4749 = vrot.lane.b32.xlu0 %v4687, 1
        %v4750 = vpop.permute.xlu0 %4749
        %4751 = vrot.lane.b32.xlu0 %v4692, 1
        %v4752 = vpop.permute.xlu0 %4751
        %4753 = vrot.lane.b32.xlu0 %v4697, 1
        %v4754 = vpop.permute.xlu0 %4753
        %4755 = vrot.lane.b32.xlu0 %v4702, 1
        %v4756 = vpop.permute.xlu0 %4755
        %4757 = vrot.lane.b32.xlu0 %v4707, 1
        %v4758 = vpop.permute.xlu0 %4757
        %4759 = vrot.lane.b32.xlu0 %v4653, 1
        %v4760 = vpop.permute.xlu0 %4759
        %4761 = vrot.lane.b32.xlu0 %v4658, 1
        %v4762 = vpop.permute.xlu0 %4761
        %4763 = vrot.lane.b32.xlu0 %v4663, 1
        %v4764 = vpop.permute.xlu0 %4763
        %4765 = vrot.lane.b32.xlu0 %v4668, 1
        %v4766 = vpop.permute.xlu0 %4765
        %4767 = vrot.lane.b32.xlu0 %v4673, 1
        %v4768 = vpop.permute.xlu0 %4767
        %4769 = vrot.lane.b32.xlu0 %v4678, 1
        %v4770 = vpop.permute.xlu0 %4769
        %4771 = vrot.lane.b32.xlu0 %v4683, 1
        %v4772 = vpop.permute.xlu0 %4771
        %4773 = vrot.lane.b32.xlu0 %v4688, 1
        %v4774 = vpop.permute.xlu0 %4773
        %4775 = vrot.lane.b32.xlu0 %v4693, 1
        %v4776 = vpop.permute.xlu0 %4775
        %4777 = vrot.lane.b32.xlu0 %v4698, 1
        %v4778 = vpop.permute.xlu0 %4777
        %4779 = vrot.lane.b32.xlu0 %v4703, 1
        %v4780 = vpop.permute.xlu0 %4779
        %4781 = vrot.lane.b32.xlu0 %v4708, 1
        %v4782 = vpop.permute.xlu0 %4781
        %4783 = vrot.lane.b32.xlu0 %v4654, 1
        %v4784 = vpop.permute.xlu0 %4783
        %4785 = vrot.lane.b32.xlu0 %v4659, 1
        %v4786 = vpop.permute.xlu0 %4785
        %4787 = vrot.lane.b32.xlu0 %v4664, 1
        %v4788 = vpop.permute.xlu0 %4787
        %4789 = vrot.lane.b32.xlu0 %v4669, 1
        %v4790 = vpop.permute.xlu0 %4789
        %4791 = vrot.lane.b32.xlu0 %v4674, 1
        %v4792 = vpop.permute.xlu0 %4791
        %4793 = vrot.lane.b32.xlu0 %v4679, 1
        %v4794 = vpop.permute.xlu0 %4793
        %4795 = vrot.lane.b32.xlu0 %v4684, 1
        %v4796 = vpop.permute.xlu0 %4795
        %4797 = vrot.lane.b32.xlu0 %v4689, 1
        %v4798 = vpop.permute.xlu0 %4797
        %4799 = vrot.lane.b32.xlu0 %v4694, 1
        %v4800 = vpop.permute.xlu0 %4799
        %4801 = vrot.lane.b32.xlu0 %v4699, 1
        %v4802 = vpop.permute.xlu0 %4801
        %4803 = vrot.lane.b32.xlu0 %v4704, 1
        %v4804 = vpop.permute.xlu0 %4803
        %4805 = vrot.lane.b32.xlu0 %v4709, 1
        %v4806 = vpop.permute.xlu0 %4805
        %4807 = vrot.lane.b32.xlu0 %v4655, 1
        %v4808 = vpop.permute.xlu0 %4807
        %4809 = vrot.lane.b32.xlu0 %v4660, 1
        %v4810 = vpop.permute.xlu0 %4809
        %4811 = vrot.lane.b32.xlu0 %v4665, 1
        %v4812 = vpop.permute.xlu0 %4811
        %4813 = vrot.lane.b32.xlu0 %v4670, 1
        %v4814 = vpop.permute.xlu0 %4813
        %4815 = vrot.lane.b32.xlu0 %v4675, 1
        %v4816 = vpop.permute.xlu0 %4815
        %4817 = vrot.lane.b32.xlu0 %v4680, 1
        %v4818 = vpop.permute.xlu0 %4817
        %4819 = vrot.lane.b32.xlu0 %v4685, 1
        %v4820 = vpop.permute.xlu0 %4819
        %4821 = vrot.lane.b32.xlu0 %v4690, 1
        %v4822 = vpop.permute.xlu0 %4821
        %4823 = vrot.lane.b32.xlu0 %v4695, 1
        %v4824 = vpop.permute.xlu0 %4823
        %4825 = vrot.lane.b32.xlu0 %v4700, 1
        %v4826 = vpop.permute.xlu0 %4825
        %4827 = vrot.lane.b32.xlu0 %v4705, 1
        %v4828 = vpop.permute.xlu0 %4827
        %4829 = vrot.lane.b32.xlu0 %v4710, 1
        %v4830 = vpop.permute.xlu0 %4829
        %v4831 = vsel %vm713, %v4784, %v4808
        %v4832 = vsel %vm713, %v4786, %v4810
        %v4833 = vsel %vm713, %v4788, %v4812
        %v4834 = vsel %vm713, %v4790, %v4814
        %v4835 = vsel %vm713, %v4792, %v4816
        %v4836 = vsel %vm713, %v4794, %v4818
        %v4837 = vsel %vm713, %v4796, %v4820
        %v4838 = vsel %vm713, %v4798, %v4822
        %v4839 = vsel %vm713, %v4800, %v4824
        %v4840 = vsel %vm713, %v4802, %v4826
        %v4841 = vsel %vm713, %v4804, %v4828
        %v4842 = vsel %vm713, %v4806, %v4830
        %v4843 = vsel %vm713, %v4760, %v4784
        %v4844 = vsel %vm713, %v4762, %v4786
        %v4845 = vsel %vm713, %v4764, %v4788
        %v4846 = vsel %vm713, %v4766, %v4790
        %v4847 = vsel %vm713, %v4768, %v4792
        %v4848 = vsel %vm713, %v4770, %v4794
        %v4849 = vsel %vm713, %v4772, %v4796
        %v4850 = vsel %vm713, %v4774, %v4798
        %v4851 = vsel %vm713, %v4776, %v4800
        %v4852 = vsel %vm713, %v4778, %v4802
        %v4853 = vsel %vm713, %v4780, %v4804
        %v4854 = vsel %vm713, %v4782, %v4806
        %v4855 = vsel %vm713, %v4736, %v4760
        %v4856 = vsel %vm713, %v4738, %v4762
        %v4857 = vsel %vm713, %v4740, %v4764
        %v4858 = vsel %vm713, %v4742, %v4766
        %v4859 = vsel %vm713, %v4744, %v4768
        %v4860 = vsel %vm713, %v4746, %v4770
        %v4861 = vsel %vm713, %v4748, %v4772
        %v4862 = vsel %vm713, %v4750, %v4774
        %v4863 = vsel %vm713, %v4752, %v4776
        %v4864 = vsel %vm713, %v4754, %v4778
        %v4865 = vsel %vm713, %v4756, %v4780
        %v4866 = vsel %vm713, %v4758, %v4782
        %v4867 = vsel %vm713, %v4712, %v4736
        %v4868 = vsel %vm713, %v4714, %v4738
        %v4869 = vsel %vm713, %v4716, %v4740
        %v4870 = vsel %vm713, %v4718, %v4742
        %v4871 = vsel %vm713, %v4720, %v4744
        %v4872 = vsel %vm713, %v4722, %v4746
        %v4873 = vsel %vm713, %v4724, %v4748
        %v4874 = vsel %vm713, %v4726, %v4750
        %v4875 = vsel %vm713, %v4728, %v4752
        %v4876 = vsel %vm713, %v4730, %v4754
        %v4877 = vsel %vm713, %v4732, %v4756
        %v4878 = vsel %vm713, %v4734, %v4758
        %v4879 = vsel %vm713, %v4808, %v4712
        %v4880 = vsel %vm713, %v4810, %v4714
        %v4881 = vsel %vm713, %v4812, %v4716
        %v4882 = vsel %vm713, %v4814, %v4718
        %v4883 = vsel %vm713, %v4816, %v4720
        %v4884 = vsel %vm713, %v4818, %v4722
        %v4885 = vsel %vm713, %v4820, %v4724
        %v4886 = vsel %vm713, %v4822, %v4726
        %v4887 = vsel %vm713, %v4824, %v4728
        %v4888 = vsel %vm713, %v4826, %v4730
        %v4889 = vsel %vm713, %v4828, %v4732
        %v4890 = vsel %vm713, %v4830, %v4734
        %v4891 = vsel %vm573, 0.0, %v4879
        %v4892 = vsel %vm574, 0.0, %v4867
        %v4893 = vsel %vm575, 0.0, %v4855
        %v4894 = vsel %vm576, 0.0, %v4843
        %v4895 = vsel %vm577, 0.0, %v4831
        %v4896 = vsel %vm573, 0.0, %v4880
        %v4897 = vsel %vm574, 0.0, %v4868
        %v4898 = vsel %vm575, 0.0, %v4856
        %v4899 = vsel %vm576, 0.0, %v4844
        %v4900 = vsel %vm577, 0.0, %v4832
        %v4901 = vsel %vm573, 0.0, %v4881
        %v4902 = vsel %vm574, 0.0, %v4869
        %v4903 = vsel %vm575, 0.0, %v4857
        %v4904 = vsel %vm576, 0.0, %v4845
        %v4905 = vsel %vm577, 0.0, %v4833
        %v4906 = vsel %vm573, 0.0, %v4882
        %v4907 = vsel %vm574, 0.0, %v4870
        %v4908 = vsel %vm575, 0.0, %v4858
        %v4909 = vsel %vm576, 0.0, %v4846
        %v4910 = vsel %vm577, 0.0, %v4834
        %v4911 = vsel %vm573, 0.0, %v4883
        %v4912 = vsel %vm574, 0.0, %v4871
        %v4913 = vsel %vm575, 0.0, %v4859
        %v4914 = vsel %vm576, 0.0, %v4847
        %v4915 = vsel %vm577, 0.0, %v4835
        %v4916 = vsel %vm573, 0.0, %v4884
        %v4917 = vsel %vm574, 0.0, %v4872
        %v4918 = vsel %vm575, 0.0, %v4860
        %v4919 = vsel %vm576, 0.0, %v4848
        %v4920 = vsel %vm577, 0.0, %v4836
        %v4921 = vsel %vm573, 0.0, %v4885
        %v4922 = vsel %vm574, 0.0, %v4873
        %v4923 = vsel %vm575, 0.0, %v4861
        %v4924 = vsel %vm576, 0.0, %v4849
        %v4925 = vsel %vm577, 0.0, %v4837
        %v4926 = vsel %vm573, 0.0, %v4886
        %v4927 = vsel %vm574, 0.0, %v4874
        %v4928 = vsel %vm575, 0.0, %v4862
        %v4929 = vsel %vm576, 0.0, %v4850
        %v4930 = vsel %vm577, 0.0, %v4838
        %v4931 = vsel %vm573, 0.0, %v4887
        %v4932 = vsel %vm574, 0.0, %v4875
        %v4933 = vsel %vm575, 0.0, %v4863
        %v4934 = vsel %vm576, 0.0, %v4851
        %v4935 = vsel %vm577, 0.0, %v4839
        %v4936 = vsel %vm573, 0.0, %v4888
        %v4937 = vsel %vm574, 0.0, %v4876
        %v4938 = vsel %vm575, 0.0, %v4864
        %v4939 = vsel %vm576, 0.0, %v4852
        %v4940 = vsel %vm577, 0.0, %v4840
        %v4941 = vsel %vm573, 0.0, %v4889
        %v4942 = vsel %vm574, 0.0, %v4877
        %v4943 = vsel %vm575, 0.0, %v4865
        %v4944 = vsel %vm576, 0.0, %v4853
        %v4945 = vsel %vm577, 0.0, %v4841
        %v4946 = vsel %vm573, 0.0, %v4890
        %v4947 = vsel %vm574, 0.0, %v4878
        %v4948 = vsel %vm575, 0.0, %v4866
        %v4949 = vsel %vm576, 0.0, %v4854
        %v4950 = vsel %vm577, 0.0, %v4842
        %4951 = vrot.lane.b32.xlu0 %v4651, 127
        %v4952 = vpop.permute.xlu0 %4951
        %4953 = vrot.lane.b32.xlu0 %v4656, 127
        %v4954 = vpop.permute.xlu0 %4953
        %4955 = vrot.lane.b32.xlu0 %v4661, 127
        %v4956 = vpop.permute.xlu0 %4955
        %4957 = vrot.lane.b32.xlu0 %v4666, 127
        %v4958 = vpop.permute.xlu0 %4957
        %4959 = vrot.lane.b32.xlu0 %v4671, 127
        %v4960 = vpop.permute.xlu0 %4959
        %4961 = vrot.lane.b32.xlu0 %v4676, 127
        %v4962 = vpop.permute.xlu0 %4961
        %4963 = vrot.lane.b32.xlu0 %v4681, 127
        %v4964 = vpop.permute.xlu0 %4963
        %4965 = vrot.lane.b32.xlu0 %v4686, 127
        %v4966 = vpop.permute.xlu0 %4965
        %4967 = vrot.lane.b32.xlu0 %v4691, 127
        %v4968 = vpop.permute.xlu0 %4967
        %4969 = vrot.lane.b32.xlu0 %v4696, 127
        %v4970 = vpop.permute.xlu0 %4969
        %4971 = vrot.lane.b32.xlu0 %v4701, 127
        %v4972 = vpop.permute.xlu0 %4971
        %4973 = vrot.lane.b32.xlu0 %v4706, 127
        %v4974 = vpop.permute.xlu0 %4973
        %4975 = vrot.lane.b32.xlu0 %v4652, 127
        %v4976 = vpop.permute.xlu0 %4975
        %4977 = vrot.lane.b32.xlu0 %v4657, 127
        %v4978 = vpop.permute.xlu0 %4977
        %4979 = vrot.lane.b32.xlu0 %v4662, 127
        %v4980 = vpop.permute.xlu0 %4979
        %4981 = vrot.lane.b32.xlu0 %v4667, 127
        %v4982 = vpop.permute.xlu0 %4981
        %4983 = vrot.lane.b32.xlu0 %v4672, 127
        %v4984 = vpop.permute.xlu0 %4983
        %4985 = vrot.lane.b32.xlu0 %v4677, 127
        %v4986 = vpop.permute.xlu0 %4985
        %4987 = vrot.lane.b32.xlu0 %v4682, 127
        %v4988 = vpop.permute.xlu0 %4987
        %4989 = vrot.lane.b32.xlu0 %v4687, 127
        %v4990 = vpop.permute.xlu0 %4989
        %4991 = vrot.lane.b32.xlu0 %v4692, 127
        %v4992 = vpop.permute.xlu0 %4991
        %4993 = vrot.lane.b32.xlu0 %v4697, 127
        %v4994 = vpop.permute.xlu0 %4993
        %4995 = vrot.lane.b32.xlu0 %v4702, 127
        %v4996 = vpop.permute.xlu0 %4995
        %4997 = vrot.lane.b32.xlu0 %v4707, 127
        %v4998 = vpop.permute.xlu0 %4997
        %4999 = vrot.lane.b32.xlu0 %v4653, 127
        %v5000 = vpop.permute.xlu0 %4999
        %5001 = vrot.lane.b32.xlu0 %v4658, 127
        %v5002 = vpop.permute.xlu0 %5001
        %5003 = vrot.lane.b32.xlu0 %v4663, 127
        %v5004 = vpop.permute.xlu0 %5003
        %5005 = vrot.lane.b32.xlu0 %v4668, 127
        %v5006 = vpop.permute.xlu0 %5005
        %5007 = vrot.lane.b32.xlu0 %v4673, 127
        %v5008 = vpop.permute.xlu0 %5007
        %5009 = vrot.lane.b32.xlu0 %v4678, 127
        %v5010 = vpop.permute.xlu0 %5009
        %5011 = vrot.lane.b32.xlu0 %v4683, 127
        %v5012 = vpop.permute.xlu0 %5011
        %5013 = vrot.lane.b32.xlu0 %v4688, 127
        %v5014 = vpop.permute.xlu0 %5013
        %5015 = vrot.lane.b32.xlu0 %v4693, 127
        %v5016 = vpop.permute.xlu0 %5015
        %5017 = vrot.lane.b32.xlu0 %v4698, 127
        %v5018 = vpop.permute.xlu0 %5017
        %5019 = vrot.lane.b32.xlu0 %v4703, 127
        %v5020 = vpop.permute.xlu0 %5019
        %5021 = vrot.lane.b32.xlu0 %v4708, 127
        %v5022 = vpop.permute.xlu0 %5021
        %5023 = vrot.lane.b32.xlu0 %v4654, 127
        %v5024 = vpop.permute.xlu0 %5023
        %5025 = vrot.lane.b32.xlu0 %v4659, 127
        %v5026 = vpop.permute.xlu0 %5025
        %5027 = vrot.lane.b32.xlu0 %v4664, 127
        %v5028 = vpop.permute.xlu0 %5027
        %5029 = vrot.lane.b32.xlu0 %v4669, 127
        %v5030 = vpop.permute.xlu0 %5029
        %5031 = vrot.lane.b32.xlu0 %v4674, 127
        %v5032 = vpop.permute.xlu0 %5031
        %5033 = vrot.lane.b32.xlu0 %v4679, 127
        %v5034 = vpop.permute.xlu0 %5033
        %5035 = vrot.lane.b32.xlu0 %v4684, 127
        %v5036 = vpop.permute.xlu0 %5035
        %5037 = vrot.lane.b32.xlu0 %v4689, 127
        %v5038 = vpop.permute.xlu0 %5037
        %5039 = vrot.lane.b32.xlu0 %v4694, 127
        %v5040 = vpop.permute.xlu0 %5039
        %5041 = vrot.lane.b32.xlu0 %v4699, 127
        %v5042 = vpop.permute.xlu0 %5041
        %5043 = vrot.lane.b32.xlu0 %v4704, 127
        %v5044 = vpop.permute.xlu0 %5043
        %5045 = vrot.lane.b32.xlu0 %v4709, 127
        %v5046 = vpop.permute.xlu0 %5045
        %5047 = vrot.lane.b32.xlu0 %v4655, 127
        %v5048 = vpop.permute.xlu0 %5047
        %5049 = vrot.lane.b32.xlu0 %v4660, 127
        %v5050 = vpop.permute.xlu0 %5049
        %5051 = vrot.lane.b32.xlu0 %v4665, 127
        %v5052 = vpop.permute.xlu0 %5051
        %5053 = vrot.lane.b32.xlu0 %v4670, 127
        %v5054 = vpop.permute.xlu0 %5053
        %5055 = vrot.lane.b32.xlu0 %v4675, 127
        %v5056 = vpop.permute.xlu0 %5055
        %5057 = vrot.lane.b32.xlu0 %v4680, 127
        %v5058 = vpop.permute.xlu0 %5057
        %5059 = vrot.lane.b32.xlu0 %v4685, 127
        %v5060 = vpop.permute.xlu0 %5059
        %5061 = vrot.lane.b32.xlu0 %v4690, 127
        %v5062 = vpop.permute.xlu0 %5061
        %5063 = vrot.lane.b32.xlu0 %v4695, 127
        %v5064 = vpop.permute.xlu0 %5063
        %5065 = vrot.lane.b32.xlu0 %v4700, 127
        %v5066 = vpop.permute.xlu0 %5065
        %5067 = vrot.lane.b32.xlu0 %v4705, 127
        %v5068 = vpop.permute.xlu0 %5067
        %5069 = vrot.lane.b32.xlu0 %v4710, 127
        %v5070 = vpop.permute.xlu0 %5069
        %v5071 = vsel %vm954, %v5024, %v5048
        %v5072 = vsel %vm954, %v5026, %v5050
        %v5073 = vsel %vm954, %v5028, %v5052
        %v5074 = vsel %vm954, %v5030, %v5054
        %v5075 = vsel %vm954, %v5032, %v5056
        %v5076 = vsel %vm954, %v5034, %v5058
        %v5077 = vsel %vm954, %v5036, %v5060
        %v5078 = vsel %vm954, %v5038, %v5062
        %v5079 = vsel %vm954, %v5040, %v5064
        %v5080 = vsel %vm954, %v5042, %v5066
        %v5081 = vsel %vm954, %v5044, %v5068
        %v5082 = vsel %vm954, %v5046, %v5070
        %v5083 = vsel %vm954, %v5000, %v5024
        %v5084 = vsel %vm954, %v5002, %v5026
        %v5085 = vsel %vm954, %v5004, %v5028
        %v5086 = vsel %vm954, %v5006, %v5030
        %v5087 = vsel %vm954, %v5008, %v5032
        %v5088 = vsel %vm954, %v5010, %v5034
        %v5089 = vsel %vm954, %v5012, %v5036
        %v5090 = vsel %vm954, %v5014, %v5038
        %v5091 = vsel %vm954, %v5016, %v5040
        %v5092 = vsel %vm954, %v5018, %v5042
        %v5093 = vsel %vm954, %v5020, %v5044
        %v5094 = vsel %vm954, %v5022, %v5046
        %v5095 = vsel %vm954, %v4976, %v5000
        %v5096 = vsel %vm954, %v4978, %v5002
        %v5097 = vsel %vm954, %v4980, %v5004
        %v5098 = vsel %vm954, %v4982, %v5006
        %v5099 = vsel %vm954, %v4984, %v5008
        %v5100 = vsel %vm954, %v4986, %v5010
        %v5101 = vsel %vm954, %v4988, %v5012
        %v5102 = vsel %vm954, %v4990, %v5014
        %v5103 = vsel %vm954, %v4992, %v5016
        %v5104 = vsel %vm954, %v4994, %v5018
        %v5105 = vsel %vm954, %v4996, %v5020
        %v5106 = vsel %vm954, %v4998, %v5022
        %v5107 = vsel %vm954, %v4952, %v4976
        %v5108 = vsel %vm954, %v4954, %v4978
        %v5109 = vsel %vm954, %v4956, %v4980
        %v5110 = vsel %vm954, %v4958, %v4982
        %v5111 = vsel %vm954, %v4960, %v4984
        %v5112 = vsel %vm954, %v4962, %v4986
        %v5113 = vsel %vm954, %v4964, %v4988
        %v5114 = vsel %vm954, %v4966, %v4990
        %v5115 = vsel %vm954, %v4968, %v4992
        %v5116 = vsel %vm954, %v4970, %v4994
        %v5117 = vsel %vm954, %v4972, %v4996
        %v5118 = vsel %vm954, %v4974, %v4998
        %v5119 = vsel %vm954, %v5048, %v4952
        %v5120 = vsel %vm954, %v5050, %v4954
        %v5121 = vsel %vm954, %v5052, %v4956
        %v5122 = vsel %vm954, %v5054, %v4958
        %v5123 = vsel %vm954, %v5056, %v4960
        %v5124 = vsel %vm954, %v5058, %v4962
        %v5125 = vsel %vm954, %v5060, %v4964
        %v5126 = vsel %vm954, %v5062, %v4966
        %v5127 = vsel %vm954, %v5064, %v4968
        %v5128 = vsel %vm954, %v5066, %v4970
        %v5129 = vsel %vm954, %v5068, %v4972
        %v5130 = vsel %vm954, %v5070, %v4974
        %v5131 = vsel %vm578, 0.0, %v5107
        %v5132 = vsel %vm579, 0.0, %v5095
        %v5133 = vsel %vm580, 0.0, %v5083
        %v5134 = vsel %vm581, 0.0, %v5071
        %v5135 = vsel %vm582, 0.0, %v5119
        %v5136 = vsel %vm578, 0.0, %v5108
        %v5137 = vsel %vm579, 0.0, %v5096
        %v5138 = vsel %vm580, 0.0, %v5084
        %v5139 = vsel %vm581, 0.0, %v5072
        %v5140 = vsel %vm582, 0.0, %v5120
        %v5141 = vsel %vm578, 0.0, %v5109
        %v5142 = vsel %vm579, 0.0, %v5097
        %v5143 = vsel %vm580, 0.0, %v5085
        %v5144 = vsel %vm581, 0.0, %v5073
        %v5145 = vsel %vm582, 0.0, %v5121
        %v5146 = vsel %vm578, 0.0, %v5110
        %v5147 = vsel %vm579, 0.0, %v5098
        %v5148 = vsel %vm580, 0.0, %v5086
        %v5149 = vsel %vm581, 0.0, %v5074
        %v5150 = vsel %vm582, 0.0, %v5122
        %v5151 = vsel %vm578, 0.0, %v5111
        %v5152 = vsel %vm579, 0.0, %v5099
        %v5153 = vsel %vm580, 0.0, %v5087
        %v5154 = vsel %vm581, 0.0, %v5075
        %v5155 = vsel %vm582, 0.0, %v5123
        %v5156 = vsel %vm578, 0.0, %v5112
        %v5157 = vsel %vm579, 0.0, %v5100
        %v5158 = vsel %vm580, 0.0, %v5088
        %v5159 = vsel %vm581, 0.0, %v5076
        %v5160 = vsel %vm582, 0.0, %v5124
        %v5161 = vsel %vm578, 0.0, %v5113
        %v5162 = vsel %vm579, 0.0, %v5101
        %v5163 = vsel %vm580, 0.0, %v5089
        %v5164 = vsel %vm581, 0.0, %v5077
        %v5165 = vsel %vm582, 0.0, %v5125
        %v5166 = vsel %vm578, 0.0, %v5114
        %v5167 = vsel %vm579, 0.0, %v5102
        %v5168 = vsel %vm580, 0.0, %v5090
        %v5169 = vsel %vm581, 0.0, %v5078
        %v5170 = vsel %vm582, 0.0, %v5126
        %v5171 = vsel %vm578, 0.0, %v5115
        %v5172 = vsel %vm579, 0.0, %v5103
        %v5173 = vsel %vm580, 0.0, %v5091
        %v5174 = vsel %vm581, 0.0, %v5079
        %v5175 = vsel %vm582, 0.0, %v5127
        %v5176 = vsel %vm578, 0.0, %v5116
        %v5177 = vsel %vm579, 0.0, %v5104
        %v5178 = vsel %vm580, 0.0, %v5092
        %v5179 = vsel %vm581, 0.0, %v5080
        %v5180 = vsel %vm582, 0.0, %v5128
        %v5181 = vsel %vm578, 0.0, %v5117
        %v5182 = vsel %vm579, 0.0, %v5105
        %v5183 = vsel %vm580, 0.0, %v5093
        %v5184 = vsel %vm581, 0.0, %v5081
        %v5185 = vsel %vm582, 0.0, %v5129
        %v5186 = vsel %vm578, 0.0, %v5118
        %v5187 = vsel %vm579, 0.0, %v5106
        %v5188 = vsel %vm580, 0.0, %v5094
        %v5189 = vsel %vm581, 0.0, %v5082
        %v5190 = vsel %vm582, 0.0, %v5130
        %v5191 = vmul.f32 %v3096, %v4891
        %v5192 = vmul.f32 %v3096, %v4892
        %v5193 = vmul.f32 %v3096, %v4893
        %v5194 = vmul.f32 %v3096, %v4894
        %v5195 = vmul.f32 %v3096, %v4895
        %v5196 = vmul.f32 %v3101, %v4896
        %v5197 = vmul.f32 %v3101, %v4897
        %v5198 = vmul.f32 %v3101, %v4898
        %v5199 = vmul.f32 %v3101, %v4899
        %v5200 = vmul.f32 %v3101, %v4900
        %v5201 = vmul.f32 %v3106, %v4901
        %v5202 = vmul.f32 %v3106, %v4902
        %v5203 = vmul.f32 %v3106, %v4903
        %v5204 = vmul.f32 %v3106, %v4904
        %v5205 = vmul.f32 %v3106, %v4905
        %v5206 = vmul.f32 %v3111, %v4906
        %v5207 = vmul.f32 %v3111, %v4907
        %v5208 = vmul.f32 %v3111, %v4908
        %v5209 = vmul.f32 %v3111, %v4909
        %v5210 = vmul.f32 %v3111, %v4910
        %v5211 = vmul.f32 %v3116, %v4911
        %v5212 = vmul.f32 %v3116, %v4912
        %v5213 = vmul.f32 %v3116, %v4913
        %v5214 = vmul.f32 %v3116, %v4914
        %v5215 = vmul.f32 %v3116, %v4915
        %v5216 = vmul.f32 %v3121, %v4916
        %v5217 = vmul.f32 %v3121, %v4917
        %v5218 = vmul.f32 %v3121, %v4918
        %v5219 = vmul.f32 %v3121, %v4919
        %v5220 = vmul.f32 %v3121, %v4920
        %v5221 = vmul.f32 %v3126, %v4921
        %v5222 = vmul.f32 %v3126, %v4922
        %v5223 = vmul.f32 %v3126, %v4923
        %v5224 = vmul.f32 %v3126, %v4924
        %v5225 = vmul.f32 %v3126, %v4925
        %v5226 = vmul.f32 %v3131, %v4926
        %v5227 = vmul.f32 %v3131, %v4927
        %v5228 = vmul.f32 %v3131, %v4928
        %v5229 = vmul.f32 %v3131, %v4929
        %v5230 = vmul.f32 %v3131, %v4930
        %v5231 = vmul.f32 %v3136, %v4931
        %v5232 = vmul.f32 %v3136, %v4932
        %v5233 = vmul.f32 %v3136, %v4933
        %v5234 = vmul.f32 %v3136, %v4934
        %v5235 = vmul.f32 %v3136, %v4935
        %v5236 = vmul.f32 %v3141, %v4936
        %v5237 = vmul.f32 %v3141, %v4937
        %v5238 = vmul.f32 %v3141, %v4938
        %v5239 = vmul.f32 %v3141, %v4939
        %v5240 = vmul.f32 %v3141, %v4940
        %v5241 = vmul.f32 %v3146, %v4941
        %v5242 = vmul.f32 %v3146, %v4942
        %v5243 = vmul.f32 %v3146, %v4943
        %v5244 = vmul.f32 %v3146, %v4944
        %v5245 = vmul.f32 %v3146, %v4945
        %v5246 = vmul.f32 %v3151, %v4946
        %v5247 = vmul.f32 %v3151, %v4947
        %v5248 = vmul.f32 %v3151, %v4948
        %v5249 = vmul.f32 %v3151, %v4949
        %v5250 = vmul.f32 %v3151, %v4950
        %v5251 = vmul.f32 %v3215, %v4651
        %v5252 = vmul.f32 %v3215, %v4652
        %v5253 = vmul.f32 %v3215, %v4653
        %v5254 = vmul.f32 %v3215, %v4654
        %v5255 = vmul.f32 %v3215, %v4655
        %v5256 = vmul.f32 %v3219, %v4656
        %v5257 = vmul.f32 %v3219, %v4657
        %v5258 = vmul.f32 %v3219, %v4658
        %v5259 = vmul.f32 %v3219, %v4659
        %v5260 = vmul.f32 %v3219, %v4660
        %v5261 = vmul.f32 %v3223, %v4661
        %v5262 = vmul.f32 %v3223, %v4662
        %v5263 = vmul.f32 %v3223, %v4663
        %v5264 = vmul.f32 %v3223, %v4664
        %v5265 = vmul.f32 %v3223, %v4665
        %v5266 = vmul.f32 %v3227, %v4666
        %v5267 = vmul.f32 %v3227, %v4667
        %v5268 = vmul.f32 %v3227, %v4668
        %v5269 = vmul.f32 %v3227, %v4669
        %v5270 = vmul.f32 %v3227, %v4670
        %v5271 = vmul.f32 %v3231, %v4671
        %v5272 = vmul.f32 %v3231, %v4672
        %v5273 = vmul.f32 %v3231, %v4673
        %v5274 = vmul.f32 %v3231, %v4674
        %v5275 = vmul.f32 %v3231, %v4675
        %v5276 = vmul.f32 %v3235, %v4676
        %v5277 = vmul.f32 %v3235, %v4677
        %v5278 = vmul.f32 %v3235, %v4678
        %v5279 = vmul.f32 %v3235, %v4679
        %v5280 = vmul.f32 %v3235, %v4680
        %v5281 = vmul.f32 %v3239, %v4681
        %v5282 = vmul.f32 %v3239, %v4682
        %v5283 = vmul.f32 %v3239, %v4683
        %v5284 = vmul.f32 %v3239, %v4684
        %v5285 = vmul.f32 %v3239, %v4685
        %v5286 = vmul.f32 %v3243, %v4686
        %v5287 = vmul.f32 %v3243, %v4687
        %v5288 = vmul.f32 %v3243, %v4688
        %v5289 = vmul.f32 %v3243, %v4689
        %v5290 = vmul.f32 %v3243, %v4690
        %v5291 = vmul.f32 %v3247, %v4691
        %v5292 = vmul.f32 %v3247, %v4692
        %v5293 = vmul.f32 %v3247, %v4693
        %v5294 = vmul.f32 %v3247, %v4694
        %v5295 = vmul.f32 %v3247, %v4695
        %v5296 = vmul.f32 %v3251, %v4696
        %v5297 = vmul.f32 %v3251, %v4697
        %v5298 = vmul.f32 %v3251, %v4698
        %v5299 = vmul.f32 %v3251, %v4699
        %v5300 = vmul.f32 %v3251, %v4700
        %v5301 = vmul.f32 %v3255, %v4701
        %v5302 = vmul.f32 %v3255, %v4702
        %v5303 = vmul.f32 %v3255, %v4703
        %v5304 = vmul.f32 %v3255, %v4704
        %v5305 = vmul.f32 %v3255, %v4705
        %v5306 = vmul.f32 %v3259, %v4706
        %v5307 = vmul.f32 %v3259, %v4707
        %v5308 = vmul.f32 %v3259, %v4708
        %v5309 = vmul.f32 %v3259, %v4709
        %v5310 = vmul.f32 %v3259, %v4710
        %v5311 = vadd.f32 %v5191, %v5251
        %v5312 = vadd.f32 %v5192, %v5252
        %v5313 = vadd.f32 %v5193, %v5253
        %v5314 = vadd.f32 %v5194, %v5254
        %v5315 = vadd.f32 %v5195, %v5255
        %v5316 = vadd.f32 %v5196, %v5256
        %v5317 = vadd.f32 %v5197, %v5257
        %v5318 = vadd.f32 %v5198, %v5258
        %v5319 = vadd.f32 %v5199, %v5259
        %v5320 = vadd.f32 %v5200, %v5260
        %v5321 = vadd.f32 %v5201, %v5261
        %v5322 = vadd.f32 %v5202, %v5262
        %v5323 = vadd.f32 %v5203, %v5263
        %v5324 = vadd.f32 %v5204, %v5264
        %v5325 = vadd.f32 %v5205, %v5265
        %v5326 = vadd.f32 %v5206, %v5266
        %v5327 = vadd.f32 %v5207, %v5267
        %v5328 = vadd.f32 %v5208, %v5268
        %v5329 = vadd.f32 %v5209, %v5269
        %v5330 = vadd.f32 %v5210, %v5270
        %v5331 = vadd.f32 %v5211, %v5271
        %v5332 = vadd.f32 %v5212, %v5272
        %v5333 = vadd.f32 %v5213, %v5273
        %v5334 = vadd.f32 %v5214, %v5274
        %v5335 = vadd.f32 %v5215, %v5275
        %v5336 = vadd.f32 %v5216, %v5276
        %v5337 = vadd.f32 %v5217, %v5277
        %v5338 = vadd.f32 %v5218, %v5278
        %v5339 = vadd.f32 %v5219, %v5279
        %v5340 = vadd.f32 %v5220, %v5280
        %v5341 = vadd.f32 %v5221, %v5281
        %v5342 = vadd.f32 %v5222, %v5282
        %v5343 = vadd.f32 %v5223, %v5283
        %v5344 = vadd.f32 %v5224, %v5284
        %v5345 = vadd.f32 %v5225, %v5285
        %v5346 = vadd.f32 %v5226, %v5286
        %v5347 = vadd.f32 %v5227, %v5287
        %v5348 = vadd.f32 %v5228, %v5288
        %v5349 = vadd.f32 %v5229, %v5289
        %v5350 = vadd.f32 %v5230, %v5290
        %v5351 = vadd.f32 %v5231, %v5291
        %v5352 = vadd.f32 %v5232, %v5292
        %v5353 = vadd.f32 %v5233, %v5293
        %v5354 = vadd.f32 %v5234, %v5294
        %v5355 = vadd.f32 %v5235, %v5295
        %v5356 = vadd.f32 %v5236, %v5296
        %v5357 = vadd.f32 %v5237, %v5297
        %v5358 = vadd.f32 %v5238, %v5298
        %v5359 = vadd.f32 %v5239, %v5299
        %v5360 = vadd.f32 %v5240, %v5300
        %v5361 = vadd.f32 %v5241, %v5301
        %v5362 = vadd.f32 %v5242, %v5302
        %v5363 = vadd.f32 %v5243, %v5303
        %v5364 = vadd.f32 %v5244, %v5304
        %v5365 = vadd.f32 %v5245, %v5305
        %v5366 = vadd.f32 %v5246, %v5306
        %v5367 = vadd.f32 %v5247, %v5307
        %v5368 = vadd.f32 %v5248, %v5308
        %v5369 = vadd.f32 %v5249, %v5309
        %v5370 = vadd.f32 %v5250, %v5310
        %v5371 = vmul.f32 %v3383, %v5131
        %v5372 = vmul.f32 %v3383, %v5132
        %v5373 = vmul.f32 %v3383, %v5133
        %v5374 = vmul.f32 %v3383, %v5134
        %v5375 = vmul.f32 %v3383, %v5135
        %v5376 = vmul.f32 %v3387, %v5136
        %v5377 = vmul.f32 %v3387, %v5137
        %v5378 = vmul.f32 %v3387, %v5138
        %v5379 = vmul.f32 %v3387, %v5139
        %v5380 = vmul.f32 %v3387, %v5140
        %v5381 = vmul.f32 %v3391, %v5141
        %v5382 = vmul.f32 %v3391, %v5142
        %v5383 = vmul.f32 %v3391, %v5143
        %v5384 = vmul.f32 %v3391, %v5144
        %v5385 = vmul.f32 %v3391, %v5145
        %v5386 = vmul.f32 %v3395, %v5146
        %v5387 = vmul.f32 %v3395, %v5147
        %v5388 = vmul.f32 %v3395, %v5148
        %v5389 = vmul.f32 %v3395, %v5149
        %v5390 = vmul.f32 %v3395, %v5150
        %v5391 = vmul.f32 %v3399, %v5151
        %v5392 = vmul.f32 %v3399, %v5152
        %v5393 = vmul.f32 %v3399, %v5153
        %v5394 = vmul.f32 %v3399, %v5154
        %v5395 = vmul.f32 %v3399, %v5155
        %v5396 = vmul.f32 %v3403, %v5156
        %v5397 = vmul.f32 %v3403, %v5157
        %v5398 = vmul.f32 %v3403, %v5158
        %v5399 = vmul.f32 %v3403, %v5159
        %v5400 = vmul.f32 %v3403, %v5160
        %v5401 = vmul.f32 %v3407, %v5161
        %v5402 = vmul.f32 %v3407, %v5162
        %v5403 = vmul.f32 %v3407, %v5163
        %v5404 = vmul.f32 %v3407, %v5164
        %v5405 = vmul.f32 %v3407, %v5165
        %v5406 = vmul.f32 %v3411, %v5166
        %v5407 = vmul.f32 %v3411, %v5167
        %v5408 = vmul.f32 %v3411, %v5168
        %v5409 = vmul.f32 %v3411, %v5169
        %v5410 = vmul.f32 %v3411, %v5170
        %v5411 = vmul.f32 %v3415, %v5171
        %v5412 = vmul.f32 %v3415, %v5172
        %v5413 = vmul.f32 %v3415, %v5173
        %v5414 = vmul.f32 %v3415, %v5174
        %v5415 = vmul.f32 %v3415, %v5175
        %v5416 = vmul.f32 %v3419, %v5176
        %v5417 = vmul.f32 %v3419, %v5177
        %v5418 = vmul.f32 %v3419, %v5178
        %v5419 = vmul.f32 %v3419, %v5179
        %v5420 = vmul.f32 %v3419, %v5180
        %v5421 = vmul.f32 %v3423, %v5181
        %v5422 = vmul.f32 %v3423, %v5182
        %v5423 = vmul.f32 %v3423, %v5183
        %v5424 = vmul.f32 %v3423, %v5184
        %v5425 = vmul.f32 %v3423, %v5185
        %v5426 = vmul.f32 %v3427, %v5186
        %v5427 = vmul.f32 %v3427, %v5187
        %v5428 = vmul.f32 %v3427, %v5188
        %v5429 = vmul.f32 %v3427, %v5189
        %v5430 = vmul.f32 %v3427, %v5190
        %v5431 = vadd.f32 %v5311, %v5371
        %v5432 = vadd.f32 %v5312, %v5372
        %v5433 = vadd.f32 %v5313, %v5373
        %v5434 = vadd.f32 %v5314, %v5374
        %v5435 = vadd.f32 %v5315, %v5375
        %v5436 = vadd.f32 %v5316, %v5376
        %v5437 = vadd.f32 %v5317, %v5377
        %v5438 = vadd.f32 %v5318, %v5378
        %v5439 = vadd.f32 %v5319, %v5379
        %v5440 = vadd.f32 %v5320, %v5380
        %v5441 = vadd.f32 %v5321, %v5381
        %v5442 = vadd.f32 %v5322, %v5382
        %v5443 = vadd.f32 %v5323, %v5383
        %v5444 = vadd.f32 %v5324, %v5384
        %v5445 = vadd.f32 %v5325, %v5385
        %v5446 = vadd.f32 %v5326, %v5386
        %v5447 = vadd.f32 %v5327, %v5387
        %v5448 = vadd.f32 %v5328, %v5388
        %v5449 = vadd.f32 %v5329, %v5389
        %v5450 = vadd.f32 %v5330, %v5390
        %v5451 = vadd.f32 %v5331, %v5391
        %v5452 = vadd.f32 %v5332, %v5392
        %v5453 = vadd.f32 %v5333, %v5393
        %v5454 = vadd.f32 %v5334, %v5394
        %v5455 = vadd.f32 %v5335, %v5395
        %v5456 = vadd.f32 %v5336, %v5396
        %v5457 = vadd.f32 %v5337, %v5397
        %v5458 = vadd.f32 %v5338, %v5398
        %v5459 = vadd.f32 %v5339, %v5399
        %v5460 = vadd.f32 %v5340, %v5400
        %v5461 = vadd.f32 %v5341, %v5401
        %v5462 = vadd.f32 %v5342, %v5402
        %v5463 = vadd.f32 %v5343, %v5403
        %v5464 = vadd.f32 %v5344, %v5404
        %v5465 = vadd.f32 %v5345, %v5405
        %v5466 = vadd.f32 %v5346, %v5406
        %v5467 = vadd.f32 %v5347, %v5407
        %v5468 = vadd.f32 %v5348, %v5408
        %v5469 = vadd.f32 %v5349, %v5409
        %v5470 = vadd.f32 %v5350, %v5410
        %v5471 = vadd.f32 %v5351, %v5411
        %v5472 = vadd.f32 %v5352, %v5412
        %v5473 = vadd.f32 %v5353, %v5413
        %v5474 = vadd.f32 %v5354, %v5414
        %v5475 = vadd.f32 %v5355, %v5415
        %v5476 = vadd.f32 %v5356, %v5416
        %v5477 = vadd.f32 %v5357, %v5417
        %v5478 = vadd.f32 %v5358, %v5418
        %v5479 = vadd.f32 %v5359, %v5419
        %v5480 = vadd.f32 %v5360, %v5420
        %v5481 = vadd.f32 %v5361, %v5421
        %v5482 = vadd.f32 %v5362, %v5422
        %v5483 = vadd.f32 %v5363, %v5423
        %v5484 = vadd.f32 %v5364, %v5424
        %v5485 = vadd.f32 %v5365, %v5425
        %v5486 = vadd.f32 %v5366, %v5426
        %v5487 = vadd.f32 %v5367, %v5427
        %v5488 = vadd.f32 %v5368, %v5428
        %v5489 = vadd.f32 %v5369, %v5429
        %v5490 = vadd.f32 %v5370, %v5430
        %v5491 = vmul.f32 %v5431, %v3552
        %v5492 = vmul.f32 %v5432, %v3552
        %v5493 = vmul.f32 %v5433, %v3552
        %v5494 = vmul.f32 %v5434, %v3552
        %v5495 = vmul.f32 %v5435, %v3552
        %v5496 = vmul.f32 %v5436, %v3557
        %v5497 = vmul.f32 %v5437, %v3557
        %v5498 = vmul.f32 %v5438, %v3557
        %v5499 = vmul.f32 %v5439, %v3557
        %v5500 = vmul.f32 %v5440, %v3557
        %v5501 = vmul.f32 %v5441, %v3562
        %v5502 = vmul.f32 %v5442, %v3562
        %v5503 = vmul.f32 %v5443, %v3562
        %v5504 = vmul.f32 %v5444, %v3562
        %v5505 = vmul.f32 %v5445, %v3562
        %v5506 = vmul.f32 %v5446, %v3567
        %v5507 = vmul.f32 %v5447, %v3567
        %v5508 = vmul.f32 %v5448, %v3567
        %v5509 = vmul.f32 %v5449, %v3567
        %v5510 = vmul.f32 %v5450, %v3567
        %v5511 = vmul.f32 %v5451, %v3572
        %v5512 = vmul.f32 %v5452, %v3572
        %v5513 = vmul.f32 %v5453, %v3572
        %v5514 = vmul.f32 %v5454, %v3572
        %v5515 = vmul.f32 %v5455, %v3572
        %v5516 = vmul.f32 %v5456, %v3577
        %v5517 = vmul.f32 %v5457, %v3577
        %v5518 = vmul.f32 %v5458, %v3577
        %v5519 = vmul.f32 %v5459, %v3577
        %v5520 = vmul.f32 %v5460, %v3577
        %v5521 = vmul.f32 %v5461, %v3582
        %v5522 = vmul.f32 %v5462, %v3582
        %v5523 = vmul.f32 %v5463, %v3582
        %v5524 = vmul.f32 %v5464, %v3582
        %v5525 = vmul.f32 %v5465, %v3582
        %v5526 = vmul.f32 %v5466, %v3587
        %v5527 = vmul.f32 %v5467, %v3587
        %v5528 = vmul.f32 %v5468, %v3587
        %v5529 = vmul.f32 %v5469, %v3587
        %v5530 = vmul.f32 %v5470, %v3587
        %v5531 = vmul.f32 %v5471, %v3592
        %v5532 = vmul.f32 %v5472, %v3592
        %v5533 = vmul.f32 %v5473, %v3592
        %v5534 = vmul.f32 %v5474, %v3592
        %v5535 = vmul.f32 %v5475, %v3592
        %v5536 = vmul.f32 %v5476, %v3597
        %v5537 = vmul.f32 %v5477, %v3597
        %v5538 = vmul.f32 %v5478, %v3597
        %v5539 = vmul.f32 %v5479, %v3597
        %v5540 = vmul.f32 %v5480, %v3597
        %v5541 = vmul.f32 %v5481, %v3602
        %v5542 = vmul.f32 %v5482, %v3602
        %v5543 = vmul.f32 %v5483, %v3602
        %v5544 = vmul.f32 %v5484, %v3602
        %v5545 = vmul.f32 %v5485, %v3602
        %v5546 = vmul.f32 %v5486, %v3607
        %v5547 = vmul.f32 %v5487, %v3607
        %v5548 = vmul.f32 %v5488, %v3607
        %v5549 = vmul.f32 %v5489, %v3607
        %v5550 = vmul.f32 %v5490, %v3607
        %v5551 = vadd.f32 %v5491, %v3672
        %v5552 = vadd.f32 %v5492, %v3672
        %v5553 = vadd.f32 %v5493, %v3672
        %v5554 = vadd.f32 %v5494, %v3672
        %v5555 = vadd.f32 %v5495, %v3672
        %v5556 = vadd.f32 %v5496, %v3677
        %v5557 = vadd.f32 %v5497, %v3677
        %v5558 = vadd.f32 %v5498, %v3677
        %v5559 = vadd.f32 %v5499, %v3677
        %v5560 = vadd.f32 %v5500, %v3677
        %v5561 = vadd.f32 %v5501, %v3682
        %v5562 = vadd.f32 %v5502, %v3682
        %v5563 = vadd.f32 %v5503, %v3682
        %v5564 = vadd.f32 %v5504, %v3682
        %v5565 = vadd.f32 %v5505, %v3682
        %v5566 = vadd.f32 %v5506, %v3687
        %v5567 = vadd.f32 %v5507, %v3687
        %v5568 = vadd.f32 %v5508, %v3687
        %v5569 = vadd.f32 %v5509, %v3687
        %v5570 = vadd.f32 %v5510, %v3687
        %v5571 = vadd.f32 %v5511, %v3692
        %v5572 = vadd.f32 %v5512, %v3692
        %v5573 = vadd.f32 %v5513, %v3692
        %v5574 = vadd.f32 %v5514, %v3692
        %v5575 = vadd.f32 %v5515, %v3692
        %v5576 = vadd.f32 %v5516, %v3697
        %v5577 = vadd.f32 %v5517, %v3697
        %v5578 = vadd.f32 %v5518, %v3697
        %v5579 = vadd.f32 %v5519, %v3697
        %v5580 = vadd.f32 %v5520, %v3697
        %v5581 = vadd.f32 %v5521, %v3702
        %v5582 = vadd.f32 %v5522, %v3702
        %v5583 = vadd.f32 %v5523, %v3702
        %v5584 = vadd.f32 %v5524, %v3702
        %v5585 = vadd.f32 %v5525, %v3702
        %v5586 = vadd.f32 %v5526, %v3707
        %v5587 = vadd.f32 %v5527, %v3707
        %v5588 = vadd.f32 %v5528, %v3707
        %v5589 = vadd.f32 %v5529, %v3707
        %v5590 = vadd.f32 %v5530, %v3707
        %v5591 = vadd.f32 %v5531, %v3712
        %v5592 = vadd.f32 %v5532, %v3712
        %v5593 = vadd.f32 %v5533, %v3712
        %v5594 = vadd.f32 %v5534, %v3712
        %v5595 = vadd.f32 %v5535, %v3712
        %v5596 = vadd.f32 %v5536, %v3717
        %v5597 = vadd.f32 %v5537, %v3717
        %v5598 = vadd.f32 %v5538, %v3717
        %v5599 = vadd.f32 %v5539, %v3717
        %v5600 = vadd.f32 %v5540, %v3717
        %v5601 = vadd.f32 %v5541, %v3722
        %v5602 = vadd.f32 %v5542, %v3722
        %v5603 = vadd.f32 %v5543, %v3722
        %v5604 = vadd.f32 %v5544, %v3722
        %v5605 = vadd.f32 %v5545, %v3722
        %v5606 = vadd.f32 %v5546, %v3727
        %v5607 = vadd.f32 %v5547, %v3727
        %v5608 = vadd.f32 %v5548, %v3727
        %v5609 = vadd.f32 %v5549, %v3727
        %v5610 = vadd.f32 %v5550, %v3727
        %v5611 = vmul.f32 %v5551, 0.5
        %v5612 = vmul.f32 %v5552, 0.5
        %v5613 = vmul.f32 %v5553, 0.5
        %v5614 = vmul.f32 %v5554, 0.5
        %v5615 = vmul.f32 %v5555, 0.5
        %v5616 = vmul.f32 %v5556, 0.5
        %v5617 = vmul.f32 %v5557, 0.5
        %v5618 = vmul.f32 %v5558, 0.5
        %v5619 = vmul.f32 %v5559, 0.5
        %v5620 = vmul.f32 %v5560, 0.5
        %v5621 = vmul.f32 %v5561, 0.5
        %v5622 = vmul.f32 %v5562, 0.5
        %v5623 = vmul.f32 %v5563, 0.5
        %v5624 = vmul.f32 %v5564, 0.5
        %v5625 = vmul.f32 %v5565, 0.5
        %v5626 = vmul.f32 %v5566, 0.5
        %v5627 = vmul.f32 %v5567, 0.5
        %v5628 = vmul.f32 %v5568, 0.5
        %v5629 = vmul.f32 %v5569, 0.5
        %v5630 = vmul.f32 %v5570, 0.5
        %v5631 = vmul.f32 %v5571, 0.5
        %v5632 = vmul.f32 %v5572, 0.5
        %v5633 = vmul.f32 %v5573, 0.5
        %v5634 = vmul.f32 %v5574, 0.5
        %v5635 = vmul.f32 %v5575, 0.5
        %v5636 = vmul.f32 %v5576, 0.5
        %v5637 = vmul.f32 %v5577, 0.5
        %v5638 = vmul.f32 %v5578, 0.5
        %v5639 = vmul.f32 %v5579, 0.5
        %v5640 = vmul.f32 %v5580, 0.5
        %v5641 = vmul.f32 %v5581, 0.5
        %v5642 = vmul.f32 %v5582, 0.5
        %v5643 = vmul.f32 %v5583, 0.5
        %v5644 = vmul.f32 %v5584, 0.5
        %v5645 = vmul.f32 %v5585, 0.5
        %v5646 = vmul.f32 %v5586, 0.5
        %v5647 = vmul.f32 %v5587, 0.5
        %v5648 = vmul.f32 %v5588, 0.5
        %v5649 = vmul.f32 %v5589, 0.5
        %v5650 = vmul.f32 %v5590, 0.5
        %v5651 = vmul.f32 %v5591, 0.5
        %v5652 = vmul.f32 %v5592, 0.5
        %v5653 = vmul.f32 %v5593, 0.5
        %v5654 = vmul.f32 %v5594, 0.5
        %v5655 = vmul.f32 %v5595, 0.5
        %v5656 = vmul.f32 %v5596, 0.5
        %v5657 = vmul.f32 %v5597, 0.5
        %v5658 = vmul.f32 %v5598, 0.5
        %v5659 = vmul.f32 %v5599, 0.5
        %v5660 = vmul.f32 %v5600, 0.5
        %v5661 = vmul.f32 %v5601, 0.5
        %v5662 = vmul.f32 %v5602, 0.5
        %v5663 = vmul.f32 %v5603, 0.5
        %v5664 = vmul.f32 %v5604, 0.5
        %v5665 = vmul.f32 %v5605, 0.5
        %v5666 = vmul.f32 %v5606, 0.5
        %v5667 = vmul.f32 %v5607, 0.5
        %v5668 = vmul.f32 %v5608, 0.5
        %v5669 = vmul.f32 %v5609, 0.5
        %v5670 = vmul.f32 %v5610, 0.5
        %v5671 = vtanh.pop %v5611
        %v5672 = vtanh.pop %v5612
        %v5673 = vtanh.pop %v5613
        %v5674 = vtanh.pop %v5614
        %v5675 = vtanh.pop %v5615
        %v5676 = vtanh.pop %v5616
        %v5677 = vtanh.pop %v5617
        %v5678 = vtanh.pop %v5618
        %v5679 = vtanh.pop %v5619
        %v5680 = vtanh.pop %v5620
        %v5681 = vtanh.pop %v5621
        %v5682 = vtanh.pop %v5622
        %v5683 = vtanh.pop %v5623
        %v5684 = vtanh.pop %v5624
        %v5685 = vtanh.pop %v5625
        %v5686 = vtanh.pop %v5626
        %v5687 = vtanh.pop %v5627
        %v5688 = vtanh.pop %v5628
        %v5689 = vtanh.pop %v5629
        %v5690 = vtanh.pop %v5630
        %v5691 = vtanh.pop %v5631
        %v5692 = vtanh.pop %v5632
        %v5693 = vtanh.pop %v5633
        %v5694 = vtanh.pop %v5634
        %v5695 = vtanh.pop %v5635
        %v5696 = vtanh.pop %v5636
        %v5697 = vtanh.pop %v5637
        %v5698 = vtanh.pop %v5638
        %v5699 = vtanh.pop %v5639
        %v5700 = vtanh.pop %v5640
        %v5701 = vtanh.pop %v5641
        %v5702 = vtanh.pop %v5642
        %v5703 = vtanh.pop %v5643
        %v5704 = vtanh.pop %v5644
        %v5705 = vtanh.pop %v5645
        %v5706 = vtanh.pop %v5646
        %v5707 = vtanh.pop %v5647
        %v5708 = vtanh.pop %v5648
        %v5709 = vtanh.pop %v5649
        %v5710 = vtanh.pop %v5650
        %v5711 = vtanh.pop %v5651
        %v5712 = vtanh.pop %v5652
        %v5713 = vtanh.pop %v5653
        %v5714 = vtanh.pop %v5654
        %v5715 = vtanh.pop %v5655
        %v5716 = vtanh.pop %v5656
        %v5717 = vtanh.pop %v5657
        %v5718 = vtanh.pop %v5658
        %v5719 = vtanh.pop %v5659
        %v5720 = vtanh.pop %v5660
        %v5721 = vtanh.pop %v5661
        %v5722 = vtanh.pop %v5662
        %v5723 = vtanh.pop %v5663
        %v5724 = vtanh.pop %v5664
        %v5725 = vtanh.pop %v5665
        %v5726 = vtanh.pop %v5666
        %v5727 = vtanh.pop %v5667
        %v5728 = vtanh.pop %v5668
        %v5729 = vtanh.pop %v5669
        %v5730 = vtanh.pop %v5670
        %v5731 = vmul.f32 %v5671, 0.5
        %v5732 = vmul.f32 %v5672, 0.5
        %v5733 = vmul.f32 %v5673, 0.5
        %v5734 = vmul.f32 %v5674, 0.5
        %v5735 = vmul.f32 %v5675, 0.5
        %v5736 = vmul.f32 %v5676, 0.5
        %v5737 = vmul.f32 %v5677, 0.5
        %v5738 = vmul.f32 %v5678, 0.5
        %v5739 = vmul.f32 %v5679, 0.5
        %v5740 = vmul.f32 %v5680, 0.5
        %v5741 = vmul.f32 %v5681, 0.5
        %v5742 = vmul.f32 %v5682, 0.5
        %v5743 = vmul.f32 %v5683, 0.5
        %v5744 = vmul.f32 %v5684, 0.5
        %v5745 = vmul.f32 %v5685, 0.5
        %v5746 = vmul.f32 %v5686, 0.5
        %v5747 = vmul.f32 %v5687, 0.5
        %v5748 = vmul.f32 %v5688, 0.5
        %v5749 = vmul.f32 %v5689, 0.5
        %v5750 = vmul.f32 %v5690, 0.5
        %v5751 = vmul.f32 %v5691, 0.5
        %v5752 = vmul.f32 %v5692, 0.5
        %v5753 = vmul.f32 %v5693, 0.5
        %v5754 = vmul.f32 %v5694, 0.5
        %v5755 = vmul.f32 %v5695, 0.5
        %v5756 = vmul.f32 %v5696, 0.5
        %v5757 = vmul.f32 %v5697, 0.5
        %v5758 = vmul.f32 %v5698, 0.5
        %v5759 = vmul.f32 %v5699, 0.5
        %v5760 = vmul.f32 %v5700, 0.5
        %v5761 = vmul.f32 %v5701, 0.5
        %v5762 = vmul.f32 %v5702, 0.5
        %v5763 = vmul.f32 %v5703, 0.5
        %v5764 = vmul.f32 %v5704, 0.5
        %v5765 = vmul.f32 %v5705, 0.5
        %v5766 = vmul.f32 %v5706, 0.5
        %v5767 = vmul.f32 %v5707, 0.5
        %v5768 = vmul.f32 %v5708, 0.5
        %v5769 = vmul.f32 %v5709, 0.5
        %v5770 = vmul.f32 %v5710, 0.5
        %v5771 = vmul.f32 %v5711, 0.5
        %v5772 = vmul.f32 %v5712, 0.5
        %v5773 = vmul.f32 %v5713, 0.5
        %v5774 = vmul.f32 %v5714, 0.5
        %v5775 = vmul.f32 %v5715, 0.5
        %v5776 = vmul.f32 %v5716, 0.5
        %v5777 = vmul.f32 %v5717, 0.5
        %v5778 = vmul.f32 %v5718, 0.5
        %v5779 = vmul.f32 %v5719, 0.5
        %v5780 = vmul.f32 %v5720, 0.5
        %v5781 = vmul.f32 %v5721, 0.5
        %v5782 = vmul.f32 %v5722, 0.5
        %v5783 = vmul.f32 %v5723, 0.5
        %v5784 = vmul.f32 %v5724, 0.5
        %v5785 = vmul.f32 %v5725, 0.5
        %v5786 = vmul.f32 %v5726, 0.5
        %v5787 = vmul.f32 %v5727, 0.5
        %v5788 = vmul.f32 %v5728, 0.5
        %v5789 = vmul.f32 %v5729, 0.5
        %v5790 = vmul.f32 %v5730, 0.5
        %v5791 = vadd.f32 %v5731, 0.5
        %v5792 = vadd.f32 %v5732, 0.5
        %v5793 = vadd.f32 %v5733, 0.5
        %v5794 = vadd.f32 %v5734, 0.5
        %v5795 = vadd.f32 %v5735, 0.5
        %v5796 = vadd.f32 %v5736, 0.5
        %v5797 = vadd.f32 %v5737, 0.5
        %v5798 = vadd.f32 %v5738, 0.5
        %v5799 = vadd.f32 %v5739, 0.5
        %v5800 = vadd.f32 %v5740, 0.5
        %v5801 = vadd.f32 %v5741, 0.5
        %v5802 = vadd.f32 %v5742, 0.5
        %v5803 = vadd.f32 %v5743, 0.5
        %v5804 = vadd.f32 %v5744, 0.5
        %v5805 = vadd.f32 %v5745, 0.5
        %v5806 = vadd.f32 %v5746, 0.5
        %v5807 = vadd.f32 %v5747, 0.5
        %v5808 = vadd.f32 %v5748, 0.5
        %v5809 = vadd.f32 %v5749, 0.5
        %v5810 = vadd.f32 %v5750, 0.5
        %v5811 = vadd.f32 %v5751, 0.5
        %v5812 = vadd.f32 %v5752, 0.5
        %v5813 = vadd.f32 %v5753, 0.5
        %v5814 = vadd.f32 %v5754, 0.5
        %v5815 = vadd.f32 %v5755, 0.5
        %v5816 = vadd.f32 %v5756, 0.5
        %v5817 = vadd.f32 %v5757, 0.5
        %v5818 = vadd.f32 %v5758, 0.5
        %v5819 = vadd.f32 %v5759, 0.5
        %v5820 = vadd.f32 %v5760, 0.5
        %v5821 = vadd.f32 %v5761, 0.5
        %v5822 = vadd.f32 %v5762, 0.5
        %v5823 = vadd.f32 %v5763, 0.5
        %v5824 = vadd.f32 %v5764, 0.5
        %v5825 = vadd.f32 %v5765, 0.5
        %v5826 = vadd.f32 %v5766, 0.5
        %v5827 = vadd.f32 %v5767, 0.5
        %v5828 = vadd.f32 %v5768, 0.5
        %v5829 = vadd.f32 %v5769, 0.5
        %v5830 = vadd.f32 %v5770, 0.5
        %v5831 = vadd.f32 %v5771, 0.5
        %v5832 = vadd.f32 %v5772, 0.5
        %v5833 = vadd.f32 %v5773, 0.5
        %v5834 = vadd.f32 %v5774, 0.5
        %v5835 = vadd.f32 %v5775, 0.5
        %v5836 = vadd.f32 %v5776, 0.5
        %v5837 = vadd.f32 %v5777, 0.5
        %v5838 = vadd.f32 %v5778, 0.5
        %v5839 = vadd.f32 %v5779, 0.5
        %v5840 = vadd.f32 %v5780, 0.5
        %v5841 = vadd.f32 %v5781, 0.5
        %v5842 = vadd.f32 %v5782, 0.5
        %v5843 = vadd.f32 %v5783, 0.5
        %v5844 = vadd.f32 %v5784, 0.5
        %v5845 = vadd.f32 %v5785, 0.5
        %v5846 = vadd.f32 %v5786, 0.5
        %v5847 = vadd.f32 %v5787, 0.5
        %v5848 = vadd.f32 %v5788, 0.5
        %v5849 = vadd.f32 %v5789, 0.5
        %v5850 = vadd.f32 %v5790, 0.5
        %v5851 = vmul.f32 %v5551, %v5791
        %v5852 = vmul.f32 %v5552, %v5792
        %v5853 = vmul.f32 %v5553, %v5793
        %v5854 = vmul.f32 %v5554, %v5794
        %v5855 = vmul.f32 %v5555, %v5795
        %v5856 = vmul.f32 %v5556, %v5796
        %v5857 = vmul.f32 %v5557, %v5797
        %v5858 = vmul.f32 %v5558, %v5798
        %v5859 = vmul.f32 %v5559, %v5799
        %v5860 = vmul.f32 %v5560, %v5800
        %v5861 = vmul.f32 %v5561, %v5801
        %v5862 = vmul.f32 %v5562, %v5802
        %v5863 = vmul.f32 %v5563, %v5803
        %v5864 = vmul.f32 %v5564, %v5804
        %v5865 = vmul.f32 %v5565, %v5805
        %v5866 = vmul.f32 %v5566, %v5806
        %v5867 = vmul.f32 %v5567, %v5807
        %v5868 = vmul.f32 %v5568, %v5808
        %v5869 = vmul.f32 %v5569, %v5809
        %v5870 = vmul.f32 %v5570, %v5810
        %v5871 = vmul.f32 %v5571, %v5811
        %v5872 = vmul.f32 %v5572, %v5812
        %v5873 = vmul.f32 %v5573, %v5813
        %v5874 = vmul.f32 %v5574, %v5814
        %v5875 = vmul.f32 %v5575, %v5815
        %v5876 = vmul.f32 %v5576, %v5816
        %v5877 = vmul.f32 %v5577, %v5817
        %v5878 = vmul.f32 %v5578, %v5818
        %v5879 = vmul.f32 %v5579, %v5819
        %v5880 = vmul.f32 %v5580, %v5820
        %v5881 = vmul.f32 %v5581, %v5821
        %v5882 = vmul.f32 %v5582, %v5822
        %v5883 = vmul.f32 %v5583, %v5823
        %v5884 = vmul.f32 %v5584, %v5824
        %v5885 = vmul.f32 %v5585, %v5825
        %v5886 = vmul.f32 %v5586, %v5826
        %v5887 = vmul.f32 %v5587, %v5827
        %v5888 = vmul.f32 %v5588, %v5828
        %v5889 = vmul.f32 %v5589, %v5829
        %v5890 = vmul.f32 %v5590, %v5830
        %v5891 = vmul.f32 %v5591, %v5831
        %v5892 = vmul.f32 %v5592, %v5832
        %v5893 = vmul.f32 %v5593, %v5833
        %v5894 = vmul.f32 %v5594, %v5834
        %v5895 = vmul.f32 %v5595, %v5835
        %v5896 = vmul.f32 %v5596, %v5836
        %v5897 = vmul.f32 %v5597, %v5837
        %v5898 = vmul.f32 %v5598, %v5838
        %v5899 = vmul.f32 %v5599, %v5839
        %v5900 = vmul.f32 %v5600, %v5840
        %v5901 = vmul.f32 %v5601, %v5841
        %v5902 = vmul.f32 %v5602, %v5842
        %v5903 = vmul.f32 %v5603, %v5843
        %v5904 = vmul.f32 %v5604, %v5844
        %v5905 = vmul.f32 %v5605, %v5845
        %v5906 = vmul.f32 %v5606, %v5846
        %v5907 = vmul.f32 %v5607, %v5847
        %v5908 = vmul.f32 %v5608, %v5848
        %v5909 = vmul.f32 %v5609, %v5849
        %v5910 = vmul.f32 %v5610, %v5850
        %v5911 = vld [vmem:[%s9] sm:$0xff]
        %v5912 = vld [vmem:[%s9 + $0x8] sm:$0xff]
        %v5913 = vld [vmem:[%s9 + $0x10] sm:$0xff]
        %v5914 = vld [vmem:[%s9 + $0x18] sm:$0xff]
        %v5915 = vmul.f32 %v5851, %v5871
        %v5916 = vmul.f32 %v5852, %v5872
        %v5917 = vmul.f32 %v5853, %v5873
        %v5918 = vmul.f32 %v5854, %v5874
        %v5919 = vmul.f32 %v5855, %v5875
        %v5920 = vmul.f32 %v5856, %v5876
        %v5921 = vmul.f32 %v5857, %v5877
        %v5922 = vmul.f32 %v5858, %v5878
        %v5923 = vmul.f32 %v5859, %v5879
        %v5924 = vmul.f32 %v5860, %v5880
        %v5925 = vmul.f32 %v5861, %v5881
        %v5926 = vmul.f32 %v5862, %v5882
        %v5927 = vmul.f32 %v5863, %v5883
        %v5928 = vmul.f32 %v5864, %v5884
        %v5929 = vmul.f32 %v5865, %v5885
        %v5930 = vmul.f32 %v5866, %v5886
        %v5931 = vmul.f32 %v5867, %v5887
        %v5932 = vmul.f32 %v5868, %v5888
        %v5933 = vmul.f32 %v5869, %v5889
        %v5934 = vmul.f32 %v5870, %v5890
        %v5935 = vmul.f32 %v5915, %v5891
        %v5936 = vmul.f32 %v5916, %v5892
        %v5937 = vmul.f32 %v5917, %v5893
        %v5938 = vmul.f32 %v5918, %v5894
        %v5939 = vmul.f32 %v5919, %v5895
        %v5940 = vmul.f32 %v5920, %v5896
        %v5941 = vmul.f32 %v5921, %v5897
        %v5942 = vmul.f32 %v5922, %v5898
        %v5943 = vmul.f32 %v5923, %v5899
        %v5944 = vmul.f32 %v5924, %v5900
        %v5945 = vmul.f32 %v5925, %v5901
        %v5946 = vmul.f32 %v5926, %v5902
        %v5947 = vmul.f32 %v5927, %v5903
        %v5948 = vmul.f32 %v5928, %v5904
        %v5949 = vmul.f32 %v5929, %v5905
        %v5950 = vmul.f32 %v5930, %v5906
        %v5951 = vmul.f32 %v5931, %v5907
        %v5952 = vmul.f32 %v5932, %v5908
        %v5953 = vmul.f32 %v5933, %v5909
        %v5954 = vmul.f32 %v5934, %v5910
        %5956 = vset.pattern.permute.xlu0 0
        %5957 = vperm.xlu0 %5956, %v5911
        %v5958 = vpop.permute.xlu0 %5957
        %5961 = vset.pattern.permute.xlu0 0
        %5962 = vperm.xlu0 %5961, %v5912
        %v5963 = vpop.permute.xlu0 %5962
        %5966 = vset.pattern.permute.xlu0 0
        %5967 = vperm.xlu0 %5966, %v5913
        %v5968 = vpop.permute.xlu0 %5967
        %5971 = vset.pattern.permute.xlu0 0
        %5972 = vperm.xlu0 %5971, %v5914
        %v5973 = vpop.permute.xlu0 %5972
        %v5975 = vmul.f32 %v5958, %v5935
        %v5976 = vmul.f32 %v5958, %v5936
        %v5977 = vmul.f32 %v5958, %v5937
        %v5978 = vmul.f32 %v5958, %v5938
        %v5979 = vmul.f32 %v5958, %v5939
        %v5980 = vmul.f32 %v5963, %v5940
        %v5981 = vmul.f32 %v5963, %v5941
        %v5982 = vmul.f32 %v5963, %v5942
        %v5983 = vmul.f32 %v5963, %v5943
        %v5984 = vmul.f32 %v5963, %v5944
        %v5985 = vmul.f32 %v5968, %v5945
        %v5986 = vmul.f32 %v5968, %v5946
        %v5987 = vmul.f32 %v5968, %v5947
        %v5988 = vmul.f32 %v5968, %v5948
        %v5989 = vmul.f32 %v5968, %v5949
        %v5990 = vmul.f32 %v5973, %v5950
        %v5991 = vmul.f32 %v5973, %v5951
        %v5992 = vmul.f32 %v5973, %v5952
        %v5993 = vmul.f32 %v5973, %v5953
        %v5994 = vmul.f32 %v5973, %v5954
        %6015 = vrot.lane.b32.xlu0 %v5975, 64
        %v6016 = vpop.permute.xlu0 %6015
        %6017 = vrot.lane.b32.xlu0 %v5976, 64
        %v6018 = vpop.permute.xlu0 %6017
        %6019 = vrot.lane.b32.xlu0 %v5977, 64
        %v6020 = vpop.permute.xlu0 %6019
        %6021 = vrot.lane.b32.xlu0 %v5978, 64
        %v6022 = vpop.permute.xlu0 %6021
        %6023 = vrot.lane.b32.xlu0 %v5979, 64
        %v6024 = vpop.permute.xlu0 %6023
        %6025 = vrot.lane.b32.xlu0 %v5980, 64
        %v6026 = vpop.permute.xlu0 %6025
        %6027 = vrot.lane.b32.xlu0 %v5981, 64
        %v6028 = vpop.permute.xlu0 %6027
        %6029 = vrot.lane.b32.xlu0 %v5982, 64
        %v6030 = vpop.permute.xlu0 %6029
        %6031 = vrot.lane.b32.xlu0 %v5983, 64
        %v6032 = vpop.permute.xlu0 %6031
        %6033 = vrot.lane.b32.xlu0 %v5984, 64
        %v6034 = vpop.permute.xlu0 %6033
        %6035 = vrot.lane.b32.xlu0 %v5985, 64
        %v6036 = vpop.permute.xlu0 %6035
        %6037 = vrot.lane.b32.xlu0 %v5986, 64
        %v6038 = vpop.permute.xlu0 %6037
        %6039 = vrot.lane.b32.xlu0 %v5987, 64
        %v6040 = vpop.permute.xlu0 %6039
        %6041 = vrot.lane.b32.xlu0 %v5988, 64
        %v6042 = vpop.permute.xlu0 %6041
        %6043 = vrot.lane.b32.xlu0 %v5989, 64
        %v6044 = vpop.permute.xlu0 %6043
        %6045 = vrot.lane.b32.xlu0 %v5990, 64
        %v6046 = vpop.permute.xlu0 %6045
        %6047 = vrot.lane.b32.xlu0 %v5991, 64
        %v6048 = vpop.permute.xlu0 %6047
        %6049 = vrot.lane.b32.xlu0 %v5992, 64
        %v6050 = vpop.permute.xlu0 %6049
        %6051 = vrot.lane.b32.xlu0 %v5993, 64
        %v6052 = vpop.permute.xlu0 %6051
        %6053 = vrot.lane.b32.xlu0 %v5994, 64
        %v6054 = vpop.permute.xlu0 %6053
        %vm6055 = vcmask 523264
        %v6056 = vsel %vm6055, %v6016, %v6018
        %v6057 = vsel %vm6055, %v6018, %v6020
        %v6058 = vsel %vm6055, %v6020, %v6022
        %v6059 = vsel %vm6055, %v6022, %v6024
        %v6060 = vsel %vm6055, %v6026, %v6028
        %v6061 = vsel %vm6055, %v6028, %v6030
        %v6062 = vsel %vm6055, %v6030, %v6032
        %v6063 = vsel %vm6055, %v6032, %v6034
        %v6064 = vsel %vm6055, %v6036, %v6038
        %v6065 = vsel %vm6055, %v6038, %v6040
        %v6066 = vsel %vm6055, %v6040, %v6042
        %v6067 = vsel %vm6055, %v6042, %v6044
        %v6068 = vsel %vm6055, %v6046, %v6048
        %v6069 = vsel %vm6055, %v6048, %v6050
        %v6070 = vsel %vm6055, %v6050, %v6052
        %v6071 = vsel %vm6055, %v6052, %v6054
        %6088 = vst [vmem:[%s405] sm:$0xff] %v6056
        %6089 = vst [vmem:[%s405 + $0x8] sm:$0xff] %v6057
        %6090 = vst [vmem:[%s405 + $0x10] sm:$0xff] %v6058
        %6091 = vst [vmem:[%s405 + $0x18] sm:$0xff] %v6059
        %6092 = vst [vmem:[%s405 + $0x20] sm:$0xff] %v6060
        %6093 = vst [vmem:[%s405 + $0x28] sm:$0xff] %v6061
        %6094 = vst [vmem:[%s405 + $0x30] sm:$0xff] %v6062
        %6095 = vst [vmem:[%s405 + $0x38] sm:$0xff] %v6063
        %6096 = vst [vmem:[%s405 + $0x40] sm:$0xff] %v6064
        %6097 = vst [vmem:[%s405 + $0x48] sm:$0xff] %v6065
        %6098 = vst [vmem:[%s405 + $0x50] sm:$0xff] %v6066
        %6099 = vst [vmem:[%s405 + $0x58] sm:$0xff] %v6067
        %6100 = vst [vmem:[%s405 + $0x60] sm:$0xff] %v6068
        %6101 = vst [vmem:[%s405 + $0x68] sm:$0xff] %v6069
        %6102 = vst [vmem:[%s405 + $0x70] sm:$0xff] %v6070
        %6103 = vst [vmem:[%s405 + $0x78] sm:$0xff] %v6071
        %s6104 = sand.u32 %s260, 1
        %s6105 = scalar_lea.sflag [#allocation4], %s6104
        %s6106 = sand.u32 %s260, 1
        %s6107 = smul.addr %s6106, 128
        %s6108 = scalar_lea.vmem [#allocation5], %s6107
        // Predicated region
        $region65: #{tpu_custom_call.1} parent=59 // pred_check
          %p6109 = pneg %p270
        $region66: #{tpu_custom_call.1} parent=59 // pred_check_branch
          %6111 = sbr.rel (%p6109) target = $region68
        $region67: #{tpu_custom_call.1} parent=59 // pred_region
          %s6112 = smul.u32 4, %s27
          %6114 = vsyncadd %s6105, 0
          %s6115 = smul.addr %s6112, 8
          %s6116 = scalar_lea.hbm %s10, %s6115
          %s6117 = sshll.u32 %s6108, 4
          %s6118 = int_to_ptr.vmem [resolvable:$true] %s6117
          %s6119 = sshll.u32 %s6116, 4
          %s6120 = int_to_ptr.hbm [resolvable:$true] %s6119
          %6125 = dma.vmem_to_hbm [thread:$0]  %s6118, 2048, %s6120, %s6105, 512, 1024, 32
        $region68: #{tpu_custom_call.1} parent=59 // pred_fallthru
          _
      $region60: #{tpu_custom_call.1} parent=5 // pred_fallthru
        _
      %p6126 = scmp.le.s32.totalorder 2, %s22
      // Predicated region
      $region69: #{tpu_custom_call.1} parent=5 // pred_check
        %p6127 = pneg %p6126
      $region70: #{tpu_custom_call.1} parent=5 // pred_check_branch
        %6129 = sbr.rel (%p6127) target = $region72
      $region71: #{tpu_custom_call.1} parent=5 // pred_region
        %s6130 = ssub.s32 %s22, 2
        // Predicated region
        $region73: #{tpu_custom_call.1} parent=71 // pred_check
          %p6131 = pneg %p276
        $region74: #{tpu_custom_call.1} parent=71 // pred_check_branch
          %6133 = sbr.rel (%p6131) target = $region76
        $region75: #{tpu_custom_call.1} parent=71 // pred_region
          %s6134 = sand.u32 %s261, 1
          %s6135 = scalar_lea.sflag [#allocation4], %s6134
          %s6136 = sand.u32 %s261, 1
          %s6137 = smul.addr %s6136, 128
          %s6138 = scalar_lea.vmem [#allocation5], %s6137
          %6140 = dma.done %s6135, 2048
        $region76: #{tpu_custom_call.1} parent=71 // pred_fallthru
          _
      $region72: #{tpu_custom_call.1} parent=5 // pred_fallthru
        _
    $region6: #{tpu_custom_call.1} parent=1 // loop_footer
      %s26 = sadd.s32 1, %s22
    $region7: #{tpu_custom_call.1} parent=1 // loop_footer_branch
      %21 = sbr.rel target = $region3
    $region8: #{tpu_custom_call.1} parent=1 // loop_exit
      _
    %6141 = vsyncpa [#allocation3], 1
    %s6142 = scalar_lea.sflag [#allocation3], 1
    %6143 = vsyncpa %s6142, 1
    %6144 = vsyncpa [#allocation4], 1
    %s6145 = scalar_lea.sflag [#allocation4], 1
    %6146 = vsyncpa %s6145, 1

</llo_original>
